<compile_context>
chip_gen: v7x
topology: tpu7x:2x2x1
jax: 0.10.0
libtpu: 0.0.40
codegen_flags: <defaults>
</compile_context>

<pallas_src>
import functools

import jax
import jax.numpy as jnp
from jax.experimental import pallas as pl
from jax.experimental.pallas import tpu as pltpu

LANE = 128


# ------------------------------ helpers -------------------------------------

def _round_up(x, m):
    return (x + m - 1) // m * m


def _pad_to(x, target_shape):
    pads = [(0, t - s) for s, t in zip(x.shape, target_shape)]
    return jnp.pad(x, pads)


def im2col_nchw(x, k=3, pad=1):
    """x: (N, C, H, W) -> patches (N, H*W, C*k*k), matching PyTorch conv weight
    (C_in, kH, kW) flattening.  One-time layout prep in plain JAX.

    TODO(synk): at real SimCLR resolutions (e.g. 224x224) move im2col inside the
    kernel (channels-last padded tile kept VMEM-resident, 9 shifted slices /
    accumulated matmuls) so the 9x-expanded patch tensor never touches HBM; at
    16x16 with C_in=4 the expansion is ~64 KB -> ~576 KB and irrelevant.
    """
    N, C, H, W = x.shape
    xp = jnp.pad(x, ((0, 0), (0, 0), (pad, pad), (pad, pad)))
    cols = []
    for dy in range(k):
        for dx in range(k):
            cols.append(xp[:, :, dy:dy + H, dx:dx + W])             # (N, C, H, W)
    patches = jnp.stack(cols, axis=2)                               # (N, C, k*k, H, W)
    patches = patches.transpose(0, 3, 4, 1, 2).reshape(N, H * W, C * k * k)
    return patches


# ------------------------------ fused kernel ---------------------------------

def _simclr_kernel(p_ref, wc_ref, bc_ref, w1_ref, b1_ref, w2_ref, b2_ref, o_ref,
                   *, block_b, hw, ck2, inv_hw):
    # p_ref : (B, HW, CK2) bf16 im2col patches for B images
    # o_ref : (B, P_pad)   f32 final projection, lane-dense unmasked store
    c_pad = wc_ref.shape[1]

    # Conv as one stacked MXU matmul: M = B*HW rows, K = CK2 (unpadded), f32 acc.
    p2 = p_ref[...].reshape(block_b * hw, ck2)
    y = jnp.dot(p2, wc_ref[...], preferred_element_type=jnp.float32)
    y = jnp.maximum(y + bc_ref[...], 0.0)                           # (B*HW, C_pad) f32

    # Global average pool: sublane reduction (XLU/VPU), overlaps with MXU work.
    feat = jnp.sum(y.reshape(block_b, hw, c_pad), axis=1) * inv_hw  # (B, C_pad) f32

    # Fused MLP projection head, M = B rows.
    h = jnp.dot(feat.astype(jnp.bfloat16), w1_ref[...],
                preferred_element_type=jnp.float32)
    h = jnp.maximum(h + b1_ref[...], 0.0)                           # (B, Hd_pad) f32
    out = jnp.dot(h.astype(jnp.bfloat16), w2_ref[...],
                  preferred_element_type=jnp.float32)
    o_ref[...] = out + b2_ref[...]                                  # (B, P_pad) f32


# ------------------------------ fused forward --------------------------------

def simclr_forward(x_nchw, params, k=3, pad=1, block_b=8):
    """Conv2d(k, s=1, p=pad) -> ReLU -> GAP -> Linear -> ReLU -> Linear,
    fused in one Pallas kernel, B images per grid step."""
    N, C_in, H, W = x_nchw.shape
    HW = H * W
    CK2 = C_in * k * k

    conv_w, conv_b = params["conv_w"], params["conv_b"]
    w1, b1, w2, b2 = params["w1"], params["b1"], params["w2"], params["b2"]
    C_out = conv_w.shape[0]
    Hd = w1.shape[1]
    P = w2.shape[1]

    # Per-step image block: multiple of 8 so the (B, 128) output block is
    # sublane-aligned; pad the batch up to a multiple of B (padded rows sliced off).
    block_b = max(8, _round_up(block_b, 8))
    N_pad = _round_up(N, block_b)

    # Lane-pad only the small VMEM-resident dims (exact zero padding: padded
    # weight rows/cols and biases are zero, ReLU(0)=0, pool of zeros is zero).
    # The large HBM patch tensor keeps its natural contraction width CK2.
    C_pad = _round_up(C_out, LANE)
    Hd_pad = _round_up(Hd, LANE)
    P_pad = _round_up(P, LANE)

    patches = im2col_nchw(x_nchw, k=k, pad=pad)                     # (N, HW, CK2)
    patches = _pad_to(patches, (N_pad, HW, CK2)).astype(jnp.bfloat16)

    wc = _pad_to(conv_w.reshape(C_out, CK2).T, (CK2, C_pad)).astype(jnp.bfloat16)
    bc = _pad_to(conv_b.reshape(1, C_out), (1, C_pad)).astype(jnp.float32)
    w1p = _pad_to(w1, (C_pad, Hd_pad)).astype(jnp.bfloat16)
    b1p = _pad_to(b1.reshape(1, Hd), (1, Hd_pad)).astype(jnp.float32)
    w2p = _pad_to(w2, (Hd_pad, P_pad)).astype(jnp.bfloat16)
    b2p = _pad_to(b2.reshape(1, P), (1, P_pad)).astype(jnp.float32)

    kernel = functools.partial(_simclr_kernel, block_b=block_b, hw=HW, ck2=CK2,
                               inv_hw=1.0 / float(HW))

    flops = 2 * N_pad * (HW * CK2 * C_out + C_out * Hd + Hd * P)
    bytes_accessed = (patches.size * 2 + wc.size * 2 + w1p.size * 2 + w2p.size * 2
                      + (bc.size + b1p.size + b2p.size) * 4 + N_pad * P_pad * 4)

    out_pad = pl.pallas_call(
        kernel,
        out_shape=jax.ShapeDtypeStruct((N_pad, P_pad), jnp.float32),
        grid=(N_pad // block_b,),
        in_specs=[
            # Per-step patch block: B images, contraction dim left at CK2 (=full dim).
            pl.BlockSpec((block_b, HW, CK2), lambda i: (i, 0, 0)),
            # Weights/biases: constant index maps -> VMEM-resident across grid steps.
            pl.BlockSpec((CK2, C_pad), lambda i: (0, 0)),
            pl.BlockSpec((1, C_pad), lambda i: (0, 0)),
            pl.BlockSpec((C_pad, Hd_pad), lambda i: (0, 0)),
            pl.BlockSpec((1, Hd_pad), lambda i: (0, 0)),
            pl.BlockSpec((Hd_pad, P_pad), lambda i: (0, 0)),
            pl.BlockSpec((1, P_pad), lambda i: (0, 0)),
        ],
        out_specs=pl.BlockSpec((block_b, P_pad), lambda i: (i, 0)),
        compiler_params=pltpu.CompilerParams(
            dimension_semantics=("parallel",),
            vmem_limit_bytes=32 * 1024 * 1024),
        cost_estimate=pl.CostEstimate(flops=flops, transcendentals=0,
                                      bytes_accessed=bytes_accessed),
    )(patches, wc, bc, w1p, b1p, w2p, b2p)

    return out_pad[:N, :P]                                          # strip padding


# ------------------------------ main -----------------------------------------

if __name__ == "__main__":
    # Small deterministic shapes; N=16 with B=8 per step -> grid=(2,) so both
    # v7x TensorCores are used and the batching path is actually exercised.
    N, C_in, H, W = 16, 4, 16, 16
    C_out, hidden, proj_dim = 32, 64, 32
    k = 3

    key = jax.random.PRNGKey(0)
    kx, kcw, kcb, kw1, kb1, kw2, kb2 = jax.random.split(key, 7)

    x = jax.random.normal(kx, (N, C_in, H, W), dtype=jnp.float32)

    params = {
        # PyTorch Conv2d weight layout: (C_out, C_in, kH, kW)
        "conv_w": 0.1 * jax.random.normal(kcw, (C_out, C_in, k, k), dtype=jnp.float32),
        "conv_b": 0.1 * jax.random.normal(kcb, (C_out,), dtype=jnp.float32),
        "w1": 0.1 * jax.random.normal(kw1, (C_out, hidden), dtype=jnp.float32),
        "b1": 0.1 * jax.random.normal(kb1, (hidden,), dtype=jnp.float32),
        "w2": 0.1 * jax.random.normal(kw2, (hidden, proj_dim), dtype=jnp.float32),
        "b2": 0.1 * jax.random.normal(kb2, (proj_dim,), dtype=jnp.float32),
    }

    out = simclr_forward(x, params, k=k, block_b=8)
    out = jax.block_until_ready(out)
    assert out.shape == (N, proj_dim), out.shape

    # Pure-JAX f32 reference of the same network (tolerance loosened for bf16 inputs).
    feat_ref = jnp.mean(
        jnp.maximum(
            jax.lax.conv_general_dilated(
                x, params["conv_w"], window_strides=(1, 1), padding="SAME",
                dimension_numbers=("NCHW", "OIHW", "NCHW"))
            + params["conv_b"][None, :, None, None],
            0.0),
        axis=(2, 3))
    ref = jnp.maximum(feat_ref @ params["w1"] + params["b1"], 0.0) @ params["w2"] + params["b2"]
    max_err = float(jnp.max(jnp.abs(out - ref)))
    assert jnp.allclose(out, ref, atol=3e-2, rtol=3e-2), max_err

    print("KERNEL_OK")
</pallas_src>

<mosaic_0001>
module attributes {stable_mosaic.version = 11 : i64} {
  func.func @_simclr_kernel(%arg0: i32, %arg1: memref<8x256x36xbf16, #tpu.memory_space<vmem>>, %arg2: memref<36x128xbf16, #tpu.memory_space<vmem>>, %arg3: memref<1x128xf32, #tpu.memory_space<vmem>>, %arg4: memref<128x128xbf16, #tpu.memory_space<vmem>>, %arg5: memref<1x128xf32, #tpu.memory_space<vmem>>, %arg6: memref<128x128xbf16, #tpu.memory_space<vmem>>, %arg7: memref<1x128xf32, #tpu.memory_space<vmem>>, %arg8: memref<8x128xf32, #tpu.memory_space<vmem>>) attributes {dimension_semantics = [#tpu.dimension_semantics<parallel>], iteration_bounds = array<i64: 2>, scalar_prefetch = 0 : i64, scratch_operands = 0 : i64, tpu.core_type = #tpu.core_type<tc>, window_params = [{transform_indices = @transform_0, window_bounds = array<i64: 8, 256, 36>}, {pipeline_mode = #tpu.pipeline_mode<synchronous>, transform_indices = @transform_1, window_bounds = array<i64: 36, 128>}, {pipeline_mode = #tpu.pipeline_mode<synchronous>, transform_indices = @transform_2, window_bounds = array<i64: 1, 128>}, {pipeline_mode = #tpu.pipeline_mode<synchronous>, transform_indices = @transform_3, window_bounds = array<i64: 128, 128>}, {pipeline_mode = #tpu.pipeline_mode<synchronous>, transform_indices = @transform_4, window_bounds = array<i64: 1, 128>}, {pipeline_mode = #tpu.pipeline_mode<synchronous>, transform_indices = @transform_5, window_bounds = array<i64: 128, 128>}, {pipeline_mode = #tpu.pipeline_mode<synchronous>, transform_indices = @transform_6, window_bounds = array<i64: 1, 128>}, {transform_indices = @transform_7, window_bounds = array<i64: 8, 128>}]} {
    %c0 = arith.constant 0 : index
    %c0_0 = arith.constant 0 : index
    %c0_1 = arith.constant 0 : index
    %0 = vector.load %arg1[%c0, %c0_0, %c0_1] : memref<8x256x36xbf16, #tpu.memory_space<vmem>>, vector<8x256x36xbf16>
    %1 = vector.shape_cast %0 : vector<8x256x36xbf16> to vector<2048x36xbf16>
    %c0_2 = arith.constant 0 : index
    %c0_3 = arith.constant 0 : index
    %2 = vector.load %arg2[%c0_2, %c0_3] : memref<36x128xbf16, #tpu.memory_space<vmem>>, vector<36x128xbf16>
    %cst = arith.constant dense<0.000000e+00> : vector<2048x128xf32>
    %3 = tpu.matmul %1, %2, %cst {dimension_numbers = #tpu.dot_dimension_numbers<[1], [0], [0], [1], [0, 0, 1, 1], [], []>} : vector<2048x36xbf16>, vector<36x128xbf16>, vector<2048x128xf32> -> vector<2048x128xf32>
    %c0_4 = arith.constant 0 : index
    %c0_5 = arith.constant 0 : index
    %4 = vector.load %arg3[%c0_4, %c0_5] : memref<1x128xf32, #tpu.memory_space<vmem>>, vector<1x128xf32>
    %5 = vector.broadcast %4 : vector<1x128xf32> to vector<2048x128xf32>
    %6 = arith.addf %3, %5 : vector<2048x128xf32>
    %cst_6 = arith.constant 0.000000e+00 : f32
    %7 = vector.broadcast %cst_6 : f32 to vector<2048x128xf32>
    %8 = arith.maximumf %6, %7 : vector<2048x128xf32>
    %9 = vector.shape_cast %8 : vector<2048x128xf32> to vector<8x256x128xf32>
    %cst_7 = arith.constant dense<0.000000e+00> : vector<8x128xf32>
    %10 = vector.multi_reduction <add>, %9, %cst_7 [1] : vector<8x256x128xf32> to vector<8x128xf32>
    %cst_8 = arith.constant 3.906250e-03 : f32
    %11 = vector.broadcast %cst_8 : f32 to vector<8x128xf32>
    %12 = arith.mulf %10, %11 : vector<8x128xf32>
    %13 = arith.truncf %12 : vector<8x128xf32> to vector<8x128xbf16>
    %c0_9 = arith.constant 0 : index
    %c0_10 = arith.constant 0 : index
    %14 = vector.load %arg4[%c0_9, %c0_10] : memref<128x128xbf16, #tpu.memory_space<vmem>>, vector<128x128xbf16>
    %cst_11 = arith.constant dense<0.000000e+00> : vector<8x128xf32>
    %15 = tpu.matmul %13, %14, %cst_11 {dimension_numbers = #tpu.dot_dimension_numbers<[1], [0], [0], [1], [0, 0, 1, 1], [], []>} : vector<8x128xbf16>, vector<128x128xbf16>, vector<8x128xf32> -> vector<8x128xf32>
    %c0_12 = arith.constant 0 : index
    %c0_13 = arith.constant 0 : index
    %16 = vector.load %arg5[%c0_12, %c0_13] : memref<1x128xf32, #tpu.memory_space<vmem>>, vector<1x128xf32>
    %17 = vector.broadcast %16 : vector<1x128xf32> to vector<8x128xf32>
    %18 = arith.addf %15, %17 : vector<8x128xf32>
    %cst_14 = arith.constant 0.000000e+00 : f32
    %19 = vector.broadcast %cst_14 : f32 to vector<8x128xf32>
    %20 = arith.maximumf %18, %19 : vector<8x128xf32>
    %21 = arith.truncf %20 : vector<8x128xf32> to vector<8x128xbf16>
    %c0_15 = arith.constant 0 : index
    %c0_16 = arith.constant 0 : index
    %22 = vector.load %arg6[%c0_15, %c0_16] : memref<128x128xbf16, #tpu.memory_space<vmem>>, vector<128x128xbf16>
    %cst_17 = arith.constant dense<0.000000e+00> : vector<8x128xf32>
    %23 = tpu.matmul %21, %22, %cst_17 {dimension_numbers = #tpu.dot_dimension_numbers<[1], [0], [0], [1], [0, 0, 1, 1], [], []>} : vector<8x128xbf16>, vector<128x128xbf16>, vector<8x128xf32> -> vector<8x128xf32>
    %c0_18 = arith.constant 0 : index
    %c0_19 = arith.constant 0 : index
    %24 = vector.load %arg7[%c0_18, %c0_19] : memref<1x128xf32, #tpu.memory_space<vmem>>, vector<1x128xf32>
    %25 = vector.broadcast %24 : vector<1x128xf32> to vector<8x128xf32>
    %26 = arith.addf %23, %25 : vector<8x128xf32>
    %c0_20 = arith.constant 0 : index
    %c0_21 = arith.constant 0 : index
    %27 = vector.load %arg8[%c0_20, %c0_21] : memref<8x128xf32, #tpu.memory_space<vmem>>, vector<8x128xf32>
    tpu.vector_store %arg8[%c0_20, %c0_21], %26 {strides = array<i32>} : memref<8x128xf32, #tpu.memory_space<vmem>>, vector<8x128xf32>,
    return
  }
  func.func @transform_0(%arg0: i32) -> (i32, i32, i32) {
    %c0_i32 = arith.constant 0 : i32
    %c0_i32_0 = arith.constant 0 : i32
    %c0_i32_1 = arith.constant 0 : i32
    return %arg0, %c0_i32, %c0_i32_0 : i32, i32, i32
  }
  func.func @transform_1(%arg0: i32) -> (i32, i32) {
    %c0_i32 = arith.constant 0 : i32
    %c0_i32_0 = arith.constant 0 : i32
    %c0_i32_1 = arith.constant 0 : i32
    return %c0_i32, %c0_i32_0 : i32, i32
  }
  func.func @transform_2(%arg0: i32) -> (i32, i32) {
    %c0_i32 = arith.constant 0 : i32
    %c0_i32_0 = arith.constant 0 : i32
    %c0_i32_1 = arith.constant 0 : i32
    return %c0_i32, %c0_i32_0 : i32, i32
  }
  func.func @transform_3(%arg0: i32) -> (i32, i32) {
    %c0_i32 = arith.constant 0 : i32
    %c0_i32_0 = arith.constant 0 : i32
    %c0_i32_1 = arith.constant 0 : i32
    return %c0_i32, %c0_i32_0 : i32, i32
  }
  func.func @transform_4(%arg0: i32) -> (i32, i32) {
    %c0_i32 = arith.constant 0 : i32
    %c0_i32_0 = arith.constant 0 : i32
    %c0_i32_1 = arith.constant 0 : i32
    return %c0_i32, %c0_i32_0 : i32, i32
  }
  func.func @transform_5(%arg0: i32) -> (i32, i32) {
    %c0_i32 = arith.constant 0 : i32
    %c0_i32_0 = arith.constant 0 : i32
    %c0_i32_1 = arith.constant 0 : i32
    return %c0_i32, %c0_i32_0 : i32, i32
  }
  func.func @transform_6(%arg0: i32) -> (i32, i32) {
    %c0_i32 = arith.constant 0 : i32
    %c0_i32_0 = arith.constant 0 : i32
    %c0_i32_1 = arith.constant 0 : i32
    return %c0_i32, %c0_i32_0 : i32, i32
  }
  func.func @transform_7(%arg0: i32) -> (i32, i32) {
    %c0_i32 = arith.constant 0 : i32
    %c0_i32_0 = arith.constant 0 : i32
    return %arg0, %c0_i32 : i32, i32
  }
}

</mosaic_0001>

<llo_original>
// kernel: tpu_custom_call.1
$region0: #{tpu_custom_call.1}
  #allocation0 [shape = 'u32[]', space=smem, size = 0x4, offset = 0x4, fixed_abs, tag = 'smem constant byte address 0x4 - core index']
  #allocation1 [shape = 'u32[144,128]{1,0:T(1,128)}', space=vmem, size = 0x12000, scoped, tag = 'internal scratch']
  %s0 = inlined_call_operand.vmem [shape: bf16[16,256,36], index: 0, kind: input, shape index: {}]
  %s1 = inlined_call_operand.vmem [shape: bf16[36,128], index: 1, kind: input, shape index: {}]
  %s2 = inlined_call_operand.vmem [shape: f32[1,128], index: 2, kind: input, shape index: {}]
  %s3 = inlined_call_operand.vmem [shape: bf16[128,128], index: 3, kind: input, shape index: {}]
  %s4 = inlined_call_operand.vmem [shape: f32[1,128], index: 4, kind: input, shape index: {}]
  %s5 = inlined_call_operand.vmem [shape: bf16[128,128], index: 5, kind: input, shape index: {}]
  %s6 = inlined_call_operand.vmem [shape: f32[1,128], index: 6, kind: input, shape index: {}]
  %s7 = inlined_call_operand.hbm [shape: f32[16,128], index: 7, kind: output, shape index: {}]
  %s8 = sld [smem:[#allocation0]]
  $region61: #{tpu_custom_call.1} parent=0
    _
  %s10 = ssub.s32 1, %s8
  %s11 = scalar_select 0, %s10, %s8
  $region1: #{tpu_custom_call.1} parent=0
    #allocation2 [shape = 'u8[8192]{0}', space=vmem, size = 0x2000, scoped, tag = 'output window, operand 0']
    #allocation3 [shape = 's32[2]{0}', space=sflag, size = 0x8, scoped, tag = 'scoped memory for tpu_custom_call.1']
    %12 = vsyncpa [#allocation3], 0
    %s13 = scalar_lea.sflag [#allocation3], 1
    %14 = vsyncpa %s13, 0
    loop: start=0, step=1, limit=4
    $region2: #{tpu_custom_call.1} parent=1 // loop_pre_header
      _
    $region3: #{tpu_custom_call.1} parent=1 // loop_header
      %s16 = sphi 0, %s20
      %p17 = scmp.ge.s32.totalorder %s16, 4
      %s26 = sphi 0, %s28
      %s29 = sphi 0, %s26
      %s30 = sphi 0, %s29
      %s46 = sphi 0, %s30
      %s50 = sphi 0, %s50
      %s52 = sphi 0, %s50
      %s53 = sphi 0, %s52
      %s67 = sphi 0, %s53
      %s71 = sphi 0, %s71
      %s73 = sphi 0, %s71
      %s74 = sphi 0, %s73
      %s88 = sphi 0, %s74
      %s92 = sphi 0, %s92
      %s94 = sphi 0, %s92
      %s95 = sphi 0, %s94
      %s109 = sphi 0, %s95
      %s113 = sphi 0, %s113
      %s115 = sphi 0, %s113
      %s116 = sphi 0, %s115
      %s130 = sphi 0, %s116
      %s134 = sphi 0, %s134
      %s136 = sphi 0, %s134
      %s137 = sphi 0, %s136
      %s151 = sphi 0, %s137
      %s155 = sphi 0, %s155
      %s157 = sphi 0, %s155
      %s158 = sphi 0, %s157
      %s172 = sphi 0, %s158
      %s178 = sphi 0, %s180
      %s181 = sphi 0, %s178
      %s182 = sphi 0, %s181
      %s198 = sphi 0, %s182
    $region4: #{tpu_custom_call.1} parent=1 // loop_header_branch
      %19 = sbr.rel (%p17) target = $region8
    $region5: #{tpu_custom_call.1} parent=1 // loop_body
      %s21 = ssub.s32 %s16, 1
      %s22 = ssub.s32 %s16, 2
      %s23 = sadd.s32 %s16, 1
      %s24 = ssub.s32 %s16, %s23
      %p25 = scmp.eq.s32.totalorder %s24, 0
      %s27 = sadd.s32 %s26, 1
      %s28 = scalar_select %p25, %s26, %s27
      %p31 = pneg %p25
      %p32 = scmp.eq.s32.totalorder %s16, 1
      %p33 = por %p31, %p32
      %p34 = scmp.ne.s32.totalorder %s26, %s29
      %p35 = scmp.eq.s32.totalorder %s16, 0
      %p36 = por %p34, %p35
      %p37 = scmp.ne.s32.totalorder %s26, %s29
      %p38 = scmp.eq.s32.totalorder %s21, 1
      %p39 = por %p37, %p38
      %p40 = scmp.ne.s32.totalorder %s29, %s30
      %p41 = scmp.eq.s32.totalorder %s21, 0
      %p42 = por %p40, %p41
      %p43 = scmp.ne.s32.totalorder %s29, %s30
      %p44 = scmp.eq.s32.totalorder %s22, 1
      %p45 = por %p43, %p44
      %p47 = scmp.ne.s32.totalorder %s30, %s46
      %p48 = scmp.eq.s32.totalorder %s22, 0
      %p49 = por %p47, %p48
      %s51 = sadd.s32 %s50, 1
      %p54 = scmp.eq.s32.totalorder %s16, 1
      %p55 = scmp.ne.s32.totalorder %s50, %s52
      %p56 = scmp.eq.s32.totalorder %s16, 0
      %p57 = por %p55, %p56
      %p58 = scmp.ne.s32.totalorder %s50, %s52
      %p59 = scmp.eq.s32.totalorder %s21, 1
      %p60 = por %p58, %p59
      %p61 = scmp.ne.s32.totalorder %s52, %s53
      %p62 = scmp.eq.s32.totalorder %s21, 0
      %p63 = por %p61, %p62
      %p64 = scmp.ne.s32.totalorder %s52, %s53
      %p65 = scmp.eq.s32.totalorder %s22, 1
      %p66 = por %p64, %p65
      %p68 = scmp.ne.s32.totalorder %s53, %s67
      %p69 = scmp.eq.s32.totalorder %s22, 0
      %p70 = por %p68, %p69
      %s72 = sadd.s32 %s71, 1
      %p75 = scmp.eq.s32.totalorder %s16, 1
      %p76 = scmp.ne.s32.totalorder %s71, %s73
      %p77 = scmp.eq.s32.totalorder %s16, 0
      %p78 = por %p76, %p77
      %p79 = scmp.ne.s32.totalorder %s71, %s73
      %p80 = scmp.eq.s32.totalorder %s21, 1
      %p81 = por %p79, %p80
      %p82 = scmp.ne.s32.totalorder %s73, %s74
      %p83 = scmp.eq.s32.totalorder %s21, 0
      %p84 = por %p82, %p83
      %p85 = scmp.ne.s32.totalorder %s73, %s74
      %p86 = scmp.eq.s32.totalorder %s22, 1
      %p87 = por %p85, %p86
      %p89 = scmp.ne.s32.totalorder %s74, %s88
      %p90 = scmp.eq.s32.totalorder %s22, 0
      %p91 = por %p89, %p90
      %s93 = sadd.s32 %s92, 1
      %p96 = scmp.eq.s32.totalorder %s16, 1
      %p97 = scmp.ne.s32.totalorder %s92, %s94
      %p98 = scmp.eq.s32.totalorder %s16, 0
      %p99 = por %p97, %p98
      %p100 = scmp.ne.s32.totalorder %s92, %s94
      %p101 = scmp.eq.s32.totalorder %s21, 1
      %p102 = por %p100, %p101
      %p103 = scmp.ne.s32.totalorder %s94, %s95
      %p104 = scmp.eq.s32.totalorder %s21, 0
      %p105 = por %p103, %p104
      %p106 = scmp.ne.s32.totalorder %s94, %s95
      %p107 = scmp.eq.s32.totalorder %s22, 1
      %p108 = por %p106, %p107
      %p110 = scmp.ne.s32.totalorder %s95, %s109
      %p111 = scmp.eq.s32.totalorder %s22, 0
      %p112 = por %p110, %p111
      %s114 = sadd.s32 %s113, 1
      %p117 = scmp.eq.s32.totalorder %s16, 1
      %p118 = scmp.ne.s32.totalorder %s113, %s115
      %p119 = scmp.eq.s32.totalorder %s16, 0
      %p120 = por %p118, %p119
      %p121 = scmp.ne.s32.totalorder %s113, %s115
      %p122 = scmp.eq.s32.totalorder %s21, 1
      %p123 = por %p121, %p122
      %p124 = scmp.ne.s32.totalorder %s115, %s116
      %p125 = scmp.eq.s32.totalorder %s21, 0
      %p126 = por %p124, %p125
      %p127 = scmp.ne.s32.totalorder %s115, %s116
      %p128 = scmp.eq.s32.totalorder %s22, 1
      %p129 = por %p127, %p128
      %p131 = scmp.ne.s32.totalorder %s116, %s130
      %p132 = scmp.eq.s32.totalorder %s22, 0
      %p133 = por %p131, %p132
      %s135 = sadd.s32 %s134, 1
      %p138 = scmp.eq.s32.totalorder %s16, 1
      %p139 = scmp.ne.s32.totalorder %s134, %s136
      %p140 = scmp.eq.s32.totalorder %s16, 0
      %p141 = por %p139, %p140
      %p142 = scmp.ne.s32.totalorder %s134, %s136
      %p143 = scmp.eq.s32.totalorder %s21, 1
      %p144 = por %p142, %p143
      %p145 = scmp.ne.s32.totalorder %s136, %s137
      %p146 = scmp.eq.s32.totalorder %s21, 0
      %p147 = por %p145, %p146
      %p148 = scmp.ne.s32.totalorder %s136, %s137
      %p149 = scmp.eq.s32.totalorder %s22, 1
      %p150 = por %p148, %p149
      %p152 = scmp.ne.s32.totalorder %s137, %s151
      %p153 = scmp.eq.s32.totalorder %s22, 0
      %p154 = por %p152, %p153
      %s156 = sadd.s32 %s155, 1
      %p159 = scmp.eq.s32.totalorder %s16, 1
      %p160 = scmp.ne.s32.totalorder %s155, %s157
      %p161 = scmp.eq.s32.totalorder %s16, 0
      %p162 = por %p160, %p161
      %p163 = scmp.ne.s32.totalorder %s155, %s157
      %p164 = scmp.eq.s32.totalorder %s21, 1
      %p165 = por %p163, %p164
      %p166 = scmp.ne.s32.totalorder %s157, %s158
      %p167 = scmp.eq.s32.totalorder %s21, 0
      %p168 = por %p166, %p167
      %p169 = scmp.ne.s32.totalorder %s157, %s158
      %p170 = scmp.eq.s32.totalorder %s22, 1
      %p171 = por %p169, %p170
      %p173 = scmp.ne.s32.totalorder %s158, %s172
      %p174 = scmp.eq.s32.totalorder %s22, 0
      %p175 = por %p173, %p174
      %s176 = ssub.s32 %s16, %s23
      %p177 = scmp.eq.s32.totalorder %s176, 0
      %s179 = sadd.s32 %s178, 1
      %s180 = scalar_select %p177, %s178, %s179
      %p183 = pneg %p177
      %p184 = scmp.eq.s32.totalorder %s16, 1
      %p185 = por %p183, %p184
      %p186 = scmp.ne.s32.totalorder %s178, %s181
      %p187 = scmp.eq.s32.totalorder %s16, 0
      %p188 = por %p186, %p187
      %p189 = scmp.ne.s32.totalorder %s178, %s181
      %p190 = scmp.eq.s32.totalorder %s21, 1
      %p191 = por %p189, %p190
      %p192 = scmp.ne.s32.totalorder %s181, %s182
      %p193 = scmp.eq.s32.totalorder %s21, 0
      %p194 = por %p192, %p193
      %p195 = scmp.ne.s32.totalorder %s181, %s182
      %p196 = scmp.eq.s32.totalorder %s22, 1
      %p197 = por %p195, %p196
      %p199 = scmp.ne.s32.totalorder %s182, %s198
      %p200 = scmp.eq.s32.totalorder %s22, 0
      %p201 = por %p199, %p200
      %p202 = scmp.le.s32.totalorder 1, %s16
      %p203 = scmp.lt.s32.totalorder %s16, 3
      %p204 = pnand %p202, %p203
      %p205 = pneg %p204
      // Predicated region
      $region9: #{tpu_custom_call.1} parent=5 // pred_check
        _
      $region10: #{tpu_custom_call.1} parent=5 // pred_check_branch
        %207 = sbr.rel (%p204) target = $region12
      $region11: #{tpu_custom_call.1} parent=5 // pred_region
        %s208 = ssub.s32 %s16, 1
        // Predicated region
        $region13: #{tpu_custom_call.1} parent=11 // pred_check
          %p209 = pneg %p63
        $region14: #{tpu_custom_call.1} parent=11 // pred_check_branch
          %211 = sbr.rel (%p209) target = $region16
        $region15: #{tpu_custom_call.1} parent=11 // pred_region
          _
        $region16: #{tpu_custom_call.1} parent=11 // pred_fallthru
          _
        // Predicated region
        $region17: #{tpu_custom_call.1} parent=11 // pred_check
          %p212 = pneg %p84
        $region18: #{tpu_custom_call.1} parent=11 // pred_check_branch
          %214 = sbr.rel (%p212) target = $region20
        $region19: #{tpu_custom_call.1} parent=11 // pred_region
          _
        $region20: #{tpu_custom_call.1} parent=11 // pred_fallthru
          _
        // Predicated region
        $region21: #{tpu_custom_call.1} parent=11 // pred_check
          %p215 = pneg %p105
        $region22: #{tpu_custom_call.1} parent=11 // pred_check_branch
          %217 = sbr.rel (%p215) target = $region24
        $region23: #{tpu_custom_call.1} parent=11 // pred_region
          _
        $region24: #{tpu_custom_call.1} parent=11 // pred_fallthru
          _
        // Predicated region
        $region25: #{tpu_custom_call.1} parent=11 // pred_check
          %p218 = pneg %p126
        $region26: #{tpu_custom_call.1} parent=11 // pred_check_branch
          %220 = sbr.rel (%p218) target = $region28
        $region27: #{tpu_custom_call.1} parent=11 // pred_region
          _
        $region28: #{tpu_custom_call.1} parent=11 // pred_fallthru
          _
        // Predicated region
        $region29: #{tpu_custom_call.1} parent=11 // pred_check
          %p221 = pneg %p147
        $region30: #{tpu_custom_call.1} parent=11 // pred_check_branch
          %223 = sbr.rel (%p221) target = $region32
        $region31: #{tpu_custom_call.1} parent=11 // pred_region
          _
        $region32: #{tpu_custom_call.1} parent=11 // pred_fallthru
          _
        // Predicated region
        $region33: #{tpu_custom_call.1} parent=11 // pred_check
          %p224 = pneg %p168
        $region34: #{tpu_custom_call.1} parent=11 // pred_check_branch
          %226 = sbr.rel (%p224) target = $region36
        $region35: #{tpu_custom_call.1} parent=11 // pred_region
          _
        $region36: #{tpu_custom_call.1} parent=11 // pred_fallthru
          _
      $region12: #{tpu_custom_call.1} parent=5 // pred_fallthru
        _
      %p227 = scmp.lt.s32.totalorder %s16, 2
      // Predicated region
      $region37: #{tpu_custom_call.1} parent=5 // pred_check
        %p228 = pneg %p227
      $region38: #{tpu_custom_call.1} parent=5 // pred_check_branch
        %230 = sbr.rel (%p228) target = $region40
      $region39: #{tpu_custom_call.1} parent=5 // pred_region
        // Predicated region
        $region41: #{tpu_custom_call.1} parent=39 // pred_check
          %p231 = pneg %p36
        $region42: #{tpu_custom_call.1} parent=39 // pred_check_branch
          %233 = sbr.rel (%p231) target = $region44
        $region43: #{tpu_custom_call.1} parent=39 // pred_region
          %s234 = smul.u32 8, %s16
          %p235 = scmp.lt.s32.totalorder %s234, 15
          %s236 = scalar_select %p235, %s234, 15
          %s237 = smul.addr %s236, 32
          %s238 = smul.addr %s237, 4
          %s239 = scalar_lea.vmem %s0, %s238
          %s240 = smul.u32 8, %s16
        $region44: #{tpu_custom_call.1} parent=39 // pred_fallthru
          _
      $region40: #{tpu_custom_call.1} parent=5 // pred_fallthru
        _
      %p241 = scmp.le.s32.totalorder 1, %s16
      %p242 = scmp.lt.s32.totalorder %s16, 3
      %p243 = pnand %p241, %p242
      %p244 = pneg %p243
      // Predicated region
      $region45: #{tpu_custom_call.1} parent=5 // pred_check
        _
      $region46: #{tpu_custom_call.1} parent=5 // pred_check_branch
        %246 = sbr.rel (%p243) target = $region48
      $region47: #{tpu_custom_call.1} parent=5 // pred_region
        %s247 = ssub.s32 %s16, 1
        %s248 = smul.u32 8, %s21
        %p249 = scmp.lt.s32.totalorder %s248, 15
        %s250 = scalar_select %p249, %s248, 15
        %s251 = smul.addr %s250, 32
        %s252 = smul.addr %s251, 4
        %s253 = scalar_lea.vmem %s0, %s252
        %p254 = pneg %p42
        %p255 = pneg %p39
        %p256 = pneg %p63
        %p257 = pneg %p60
        %p258 = pneg %p84
        %p259 = pneg %p81
        %p260 = pneg %p105
        %p261 = pneg %p102
        %p262 = pneg %p126
        %p263 = pneg %p123
        %p264 = pneg %p147
        %p265 = pneg %p144
        %p266 = pneg %p168
        %p267 = pneg %p165
        %p268 = pneg %p194
        %p269 = pneg %p191
        %s270 = sand.u32 %s181, 1
        %s271 = scalar_lea.sflag [#allocation3], %s270
        %s272 = sand.u32 %s181, 1
        %s273 = smul.addr %s272, 8
        %s274 = scalar_lea.vmem [#allocation2], %s273
        %s275 = smul.u32 8, %s21
        %p276 = scmp.lt.s32.totalorder %s275, 15
        %s277 = scalar_select %p276, %s275, 15
        %s278 = smul.addr %s277, 32
        %s279 = smul.addr %s278, 4
        %s280 = scalar_lea.vmem %s0, %s279
        %s281 = smul.u32 8, %s21
        %v283 = vld [vmem:[%s280] sm:$0xf]
        %v284 = vld [vmem:[%s280 + $0x4] sm:$0xf]
        %v285 = vld [vmem:[%s280 + $0x8] sm:$0xf]
        %v286 = vld [vmem:[%s280 + $0xc] sm:$0xf]
        %v287 = vld [vmem:[%s280 + $0x10] sm:$0xf]
        %v288 = vld [vmem:[%s280 + $0x14] sm:$0xf]
        %v289 = vld [vmem:[%s280 + $0x18] sm:$0xf]
        %v290 = vld [vmem:[%s280 + $0x1c] sm:$0xf]
        %v291 = vld [vmem:[%s280 + $0x20] sm:$0xf]
        %v292 = vld [vmem:[%s280 + $0x24] sm:$0xf]
        %v293 = vld [vmem:[%s280 + $0x28] sm:$0xf]
        %v294 = vld [vmem:[%s280 + $0x2c] sm:$0xf]
        %v295 = vld [vmem:[%s280 + $0x30] sm:$0xf]
        %v296 = vld [vmem:[%s280 + $0x34] sm:$0xf]
        %v297 = vld [vmem:[%s280 + $0x38] sm:$0xf]
        %v298 = vld [vmem:[%s280 + $0x3c] sm:$0xf]
        %v299 = vld [vmem:[%s280 + $0x40] sm:$0xf]
        %v300 = vld [vmem:[%s280 + $0x44] sm:$0xf]
        %v301 = vld [vmem:[%s280 + $0x48] sm:$0xf]
        %v302 = vld [vmem:[%s280 + $0x4c] sm:$0xf]
        %v303 = vld [vmem:[%s280 + $0x50] sm:$0xf]
        %v304 = vld [vmem:[%s280 + $0x54] sm:$0xf]
        %v305 = vld [vmem:[%s280 + $0x58] sm:$0xf]
        %v306 = vld [vmem:[%s280 + $0x5c] sm:$0xf]
        %v307 = vld [vmem:[%s280 + $0x60] sm:$0xf]
        %v308 = vld [vmem:[%s280 + $0x64] sm:$0xf]
        %v309 = vld [vmem:[%s280 + $0x68] sm:$0xf]
        %v310 = vld [vmem:[%s280 + $0x6c] sm:$0xf]
        %v311 = vld [vmem:[%s280 + $0x70] sm:$0xf]
        %v312 = vld [vmem:[%s280 + $0x74] sm:$0xf]
        %v313 = vld [vmem:[%s280 + $0x78] sm:$0xf]
        %v314 = vld [vmem:[%s280 + $0x7c] sm:$0xf]
        %v315 = vld [vmem:[%s280 + $0x80] sm:$0xf]
        %v316 = vld [vmem:[%s280 + $0x84] sm:$0xf]
        %v317 = vld [vmem:[%s280 + $0x88] sm:$0xf]
        %v318 = vld [vmem:[%s280 + $0x8c] sm:$0xf]
        %v319 = vld [vmem:[%s280 + $0x90] sm:$0xf]
        %v320 = vld [vmem:[%s280 + $0x94] sm:$0xf]
        %v321 = vld [vmem:[%s280 + $0x98] sm:$0xf]
        %v322 = vld [vmem:[%s280 + $0x9c] sm:$0xf]
        %v323 = vld [vmem:[%s280 + $0xa0] sm:$0xf]
        %v324 = vld [vmem:[%s280 + $0xa4] sm:$0xf]
        %v325 = vld [vmem:[%s280 + $0xa8] sm:$0xf]
        %v326 = vld [vmem:[%s280 + $0xac] sm:$0xf]
        %v327 = vld [vmem:[%s280 + $0xb0] sm:$0xf]
        %v328 = vld [vmem:[%s280 + $0xb4] sm:$0xf]
        %v329 = vld [vmem:[%s280 + $0xb8] sm:$0xf]
        %v330 = vld [vmem:[%s280 + $0xbc] sm:$0xf]
        %v331 = vld [vmem:[%s280 + $0xc0] sm:$0xf]
        %v332 = vld [vmem:[%s280 + $0xc4] sm:$0xf]
        %v333 = vld [vmem:[%s280 + $0xc8] sm:$0xf]
        %v334 = vld [vmem:[%s280 + $0xcc] sm:$0xf]
        %v335 = vld [vmem:[%s280 + $0xd0] sm:$0xf]
        %v336 = vld [vmem:[%s280 + $0xd4] sm:$0xf]
        %v337 = vld [vmem:[%s280 + $0xd8] sm:$0xf]
        %v338 = vld [vmem:[%s280 + $0xdc] sm:$0xf]
        %v339 = vld [vmem:[%s280 + $0xe0] sm:$0xf]
        %v340 = vld [vmem:[%s280 + $0xe4] sm:$0xf]
        %v341 = vld [vmem:[%s280 + $0xe8] sm:$0xf]
        %v342 = vld [vmem:[%s280 + $0xec] sm:$0xf]
        %v343 = vld [vmem:[%s280 + $0xf0] sm:$0xf]
        %v344 = vld [vmem:[%s280 + $0xf4] sm:$0xf]
        %v345 = vld [vmem:[%s280 + $0xf8] sm:$0xf]
        %v346 = vld [vmem:[%s280 + $0xfc] sm:$0xf]
        %v347 = vld [vmem:[%s280 + $0x100] sm:$0xf]
        %v348 = vld [vmem:[%s280 + $0x104] sm:$0xf]
        %v349 = vld [vmem:[%s280 + $0x108] sm:$0xf]
        %v350 = vld [vmem:[%s280 + $0x10c] sm:$0xf]
        %v351 = vld [vmem:[%s280 + $0x110] sm:$0xf]
        %v352 = vld [vmem:[%s280 + $0x114] sm:$0xf]
        %v353 = vld [vmem:[%s280 + $0x118] sm:$0xf]
        %v354 = vld [vmem:[%s280 + $0x11c] sm:$0xf]
        %v355 = vld [vmem:[%s280 + $0x120] sm:$0xf]
        %v356 = vld [vmem:[%s280 + $0x124] sm:$0xf]
        %v357 = vld [vmem:[%s280 + $0x128] sm:$0xf]
        %v358 = vld [vmem:[%s280 + $0x12c] sm:$0xf]
        %v359 = vld [vmem:[%s280 + $0x130] sm:$0xf]
        %v360 = vld [vmem:[%s280 + $0x134] sm:$0xf]
        %v361 = vld [vmem:[%s280 + $0x138] sm:$0xf]
        %v362 = vld [vmem:[%s280 + $0x13c] sm:$0xf]
        %v363 = vld [vmem:[%s280 + $0x140] sm:$0xf]
        %v364 = vld [vmem:[%s280 + $0x144] sm:$0xf]
        %v365 = vld [vmem:[%s280 + $0x148] sm:$0xf]
        %v366 = vld [vmem:[%s280 + $0x14c] sm:$0xf]
        %v367 = vld [vmem:[%s280 + $0x150] sm:$0xf]
        %v368 = vld [vmem:[%s280 + $0x154] sm:$0xf]
        %v369 = vld [vmem:[%s280 + $0x158] sm:$0xf]
        %v370 = vld [vmem:[%s280 + $0x15c] sm:$0xf]
        %v371 = vld [vmem:[%s280 + $0x160] sm:$0xf]
        %v372 = vld [vmem:[%s280 + $0x164] sm:$0xf]
        %v373 = vld [vmem:[%s280 + $0x168] sm:$0xf]
        %v374 = vld [vmem:[%s280 + $0x16c] sm:$0xf]
        %v375 = vld [vmem:[%s280 + $0x170] sm:$0xf]
        %v376 = vld [vmem:[%s280 + $0x174] sm:$0xf]
        %v377 = vld [vmem:[%s280 + $0x178] sm:$0xf]
        %v378 = vld [vmem:[%s280 + $0x17c] sm:$0xf]
        %v379 = vld [vmem:[%s280 + $0x180] sm:$0xf]
        %v380 = vld [vmem:[%s280 + $0x184] sm:$0xf]
        %v381 = vld [vmem:[%s280 + $0x188] sm:$0xf]
        %v382 = vld [vmem:[%s280 + $0x18c] sm:$0xf]
        %v383 = vld [vmem:[%s280 + $0x190] sm:$0xf]
        %v384 = vld [vmem:[%s280 + $0x194] sm:$0xf]
        %v385 = vld [vmem:[%s280 + $0x198] sm:$0xf]
        %v386 = vld [vmem:[%s280 + $0x19c] sm:$0xf]
        %v387 = vld [vmem:[%s280 + $0x1a0] sm:$0xf]
        %v388 = vld [vmem:[%s280 + $0x1a4] sm:$0xf]
        %v389 = vld [vmem:[%s280 + $0x1a8] sm:$0xf]
        %v390 = vld [vmem:[%s280 + $0x1ac] sm:$0xf]
        %v391 = vld [vmem:[%s280 + $0x1b0] sm:$0xf]
        %v392 = vld [vmem:[%s280 + $0x1b4] sm:$0xf]
        %v393 = vld [vmem:[%s280 + $0x1b8] sm:$0xf]
        %v394 = vld [vmem:[%s280 + $0x1bc] sm:$0xf]
        %v395 = vld [vmem:[%s280 + $0x1c0] sm:$0xf]
        %v396 = vld [vmem:[%s280 + $0x1c4] sm:$0xf]
        %v397 = vld [vmem:[%s280 + $0x1c8] sm:$0xf]
        %v398 = vld [vmem:[%s280 + $0x1cc] sm:$0xf]
        %v399 = vld [vmem:[%s280 + $0x1d0] sm:$0xf]
        %v400 = vld [vmem:[%s280 + $0x1d4] sm:$0xf]
        %v401 = vld [vmem:[%s280 + $0x1d8] sm:$0xf]
        %v402 = vld [vmem:[%s280 + $0x1dc] sm:$0xf]
        %v403 = vld [vmem:[%s280 + $0x1e0] sm:$0xf]
        %v404 = vld [vmem:[%s280 + $0x1e4] sm:$0xf]
        %v405 = vld [vmem:[%s280 + $0x1e8] sm:$0xf]
        %v406 = vld [vmem:[%s280 + $0x1ec] sm:$0xf]
        %v407 = vld [vmem:[%s280 + $0x1f0] sm:$0xf]
        %v408 = vld [vmem:[%s280 + $0x1f4] sm:$0xf]
        %v409 = vld [vmem:[%s280 + $0x1f8] sm:$0xf]
        %v410 = vld [vmem:[%s280 + $0x1fc] sm:$0xf]
        %v411 = vld [vmem:[%s280 + $0x200] sm:$0xf]
        %v412 = vld [vmem:[%s280 + $0x204] sm:$0xf]
        %v413 = vld [vmem:[%s280 + $0x208] sm:$0xf]
        %v414 = vld [vmem:[%s280 + $0x20c] sm:$0xf]
        %v415 = vld [vmem:[%s280 + $0x210] sm:$0xf]
        %v416 = vld [vmem:[%s280 + $0x214] sm:$0xf]
        %v417 = vld [vmem:[%s280 + $0x218] sm:$0xf]
        %v418 = vld [vmem:[%s280 + $0x21c] sm:$0xf]
        %v419 = vld [vmem:[%s280 + $0x220] sm:$0xf]
        %v420 = vld [vmem:[%s280 + $0x224] sm:$0xf]
        %v421 = vld [vmem:[%s280 + $0x228] sm:$0xf]
        %v422 = vld [vmem:[%s280 + $0x22c] sm:$0xf]
        %v423 = vld [vmem:[%s280 + $0x230] sm:$0xf]
        %v424 = vld [vmem:[%s280 + $0x234] sm:$0xf]
        %v425 = vld [vmem:[%s280 + $0x238] sm:$0xf]
        %v426 = vld [vmem:[%s280 + $0x23c] sm:$0xf]
        %v427 = vld [vmem:[%s280 + $0x240] sm:$0xf]
        %v428 = vld [vmem:[%s280 + $0x244] sm:$0xf]
        %v429 = vld [vmem:[%s280 + $0x248] sm:$0xf]
        %v430 = vld [vmem:[%s280 + $0x24c] sm:$0xf]
        %v431 = vld [vmem:[%s280 + $0x250] sm:$0xf]
        %v432 = vld [vmem:[%s280 + $0x254] sm:$0xf]
        %v433 = vld [vmem:[%s280 + $0x258] sm:$0xf]
        %v434 = vld [vmem:[%s280 + $0x25c] sm:$0xf]
        %v435 = vld [vmem:[%s280 + $0x260] sm:$0xf]
        %v436 = vld [vmem:[%s280 + $0x264] sm:$0xf]
        %v437 = vld [vmem:[%s280 + $0x268] sm:$0xf]
        %v438 = vld [vmem:[%s280 + $0x26c] sm:$0xf]
        %v439 = vld [vmem:[%s280 + $0x270] sm:$0xf]
        %v440 = vld [vmem:[%s280 + $0x274] sm:$0xf]
        %v441 = vld [vmem:[%s280 + $0x278] sm:$0xf]
        %v442 = vld [vmem:[%s280 + $0x27c] sm:$0xf]
        %v443 = vld [vmem:[%s280 + $0x280] sm:$0xf]
        %v444 = vld [vmem:[%s280 + $0x284] sm:$0xf]
        %v445 = vld [vmem:[%s280 + $0x288] sm:$0xf]
        %v446 = vld [vmem:[%s280 + $0x28c] sm:$0xf]
        %v447 = vld [vmem:[%s280 + $0x290] sm:$0xf]
        %v448 = vld [vmem:[%s280 + $0x294] sm:$0xf]
        %v449 = vld [vmem:[%s280 + $0x298] sm:$0xf]
        %v450 = vld [vmem:[%s280 + $0x29c] sm:$0xf]
        %v451 = vld [vmem:[%s280 + $0x2a0] sm:$0xf]
        %v452 = vld [vmem:[%s280 + $0x2a4] sm:$0xf]
        %v453 = vld [vmem:[%s280 + $0x2a8] sm:$0xf]
        %v454 = vld [vmem:[%s280 + $0x2ac] sm:$0xf]
        %v455 = vld [vmem:[%s280 + $0x2b0] sm:$0xf]
        %v456 = vld [vmem:[%s280 + $0x2b4] sm:$0xf]
        %v457 = vld [vmem:[%s280 + $0x2b8] sm:$0xf]
        %v458 = vld [vmem:[%s280 + $0x2bc] sm:$0xf]
        %v459 = vld [vmem:[%s280 + $0x2c0] sm:$0xf]
        %v460 = vld [vmem:[%s280 + $0x2c4] sm:$0xf]
        %v461 = vld [vmem:[%s280 + $0x2c8] sm:$0xf]
        %v462 = vld [vmem:[%s280 + $0x2cc] sm:$0xf]
        %v463 = vld [vmem:[%s280 + $0x2d0] sm:$0xf]
        %v464 = vld [vmem:[%s280 + $0x2d4] sm:$0xf]
        %v465 = vld [vmem:[%s280 + $0x2d8] sm:$0xf]
        %v466 = vld [vmem:[%s280 + $0x2dc] sm:$0xf]
        %v467 = vld [vmem:[%s280 + $0x2e0] sm:$0xf]
        %v468 = vld [vmem:[%s280 + $0x2e4] sm:$0xf]
        %v469 = vld [vmem:[%s280 + $0x2e8] sm:$0xf]
        %v470 = vld [vmem:[%s280 + $0x2ec] sm:$0xf]
        %v471 = vld [vmem:[%s280 + $0x2f0] sm:$0xf]
        %v472 = vld [vmem:[%s280 + $0x2f4] sm:$0xf]
        %v473 = vld [vmem:[%s280 + $0x2f8] sm:$0xf]
        %v474 = vld [vmem:[%s280 + $0x2fc] sm:$0xf]
        %v475 = vld [vmem:[%s280 + $0x300] sm:$0xf]
        %v476 = vld [vmem:[%s280 + $0x304] sm:$0xf]
        %v477 = vld [vmem:[%s280 + $0x308] sm:$0xf]
        %v478 = vld [vmem:[%s280 + $0x30c] sm:$0xf]
        %v479 = vld [vmem:[%s280 + $0x310] sm:$0xf]
        %v480 = vld [vmem:[%s280 + $0x314] sm:$0xf]
        %v481 = vld [vmem:[%s280 + $0x318] sm:$0xf]
        %v482 = vld [vmem:[%s280 + $0x31c] sm:$0xf]
        %v483 = vld [vmem:[%s280 + $0x320] sm:$0xf]
        %v484 = vld [vmem:[%s280 + $0x324] sm:$0xf]
        %v485 = vld [vmem:[%s280 + $0x328] sm:$0xf]
        %v486 = vld [vmem:[%s280 + $0x32c] sm:$0xf]
        %v487 = vld [vmem:[%s280 + $0x330] sm:$0xf]
        %v488 = vld [vmem:[%s280 + $0x334] sm:$0xf]
        %v489 = vld [vmem:[%s280 + $0x338] sm:$0xf]
        %v490 = vld [vmem:[%s280 + $0x33c] sm:$0xf]
        %v491 = vld [vmem:[%s280 + $0x340] sm:$0xf]
        %v492 = vld [vmem:[%s280 + $0x344] sm:$0xf]
        %v493 = vld [vmem:[%s280 + $0x348] sm:$0xf]
        %v494 = vld [vmem:[%s280 + $0x34c] sm:$0xf]
        %v495 = vld [vmem:[%s280 + $0x350] sm:$0xf]
        %v496 = vld [vmem:[%s280 + $0x354] sm:$0xf]
        %v497 = vld [vmem:[%s280 + $0x358] sm:$0xf]
        %v498 = vld [vmem:[%s280 + $0x35c] sm:$0xf]
        %v499 = vld [vmem:[%s280 + $0x360] sm:$0xf]
        %v500 = vld [vmem:[%s280 + $0x364] sm:$0xf]
        %v501 = vld [vmem:[%s280 + $0x368] sm:$0xf]
        %v502 = vld [vmem:[%s280 + $0x36c] sm:$0xf]
        %v503 = vld [vmem:[%s280 + $0x370] sm:$0xf]
        %v504 = vld [vmem:[%s280 + $0x374] sm:$0xf]
        %v505 = vld [vmem:[%s280 + $0x378] sm:$0xf]
        %v506 = vld [vmem:[%s280 + $0x37c] sm:$0xf]
        %v507 = vld [vmem:[%s280 + $0x380] sm:$0xf]
        %v508 = vld [vmem:[%s280 + $0x384] sm:$0xf]
        %v509 = vld [vmem:[%s280 + $0x388] sm:$0xf]
        %v510 = vld [vmem:[%s280 + $0x38c] sm:$0xf]
        %v511 = vld [vmem:[%s280 + $0x390] sm:$0xf]
        %v512 = vld [vmem:[%s280 + $0x394] sm:$0xf]
        %v513 = vld [vmem:[%s280 + $0x398] sm:$0xf]
        %v514 = vld [vmem:[%s280 + $0x39c] sm:$0xf]
        %v515 = vld [vmem:[%s280 + $0x3a0] sm:$0xf]
        %v516 = vld [vmem:[%s280 + $0x3a4] sm:$0xf]
        %v517 = vld [vmem:[%s280 + $0x3a8] sm:$0xf]
        %v518 = vld [vmem:[%s280 + $0x3ac] sm:$0xf]
        %v519 = vld [vmem:[%s280 + $0x3b0] sm:$0xf]
        %v520 = vld [vmem:[%s280 + $0x3b4] sm:$0xf]
        %v521 = vld [vmem:[%s280 + $0x3b8] sm:$0xf]
        %v522 = vld [vmem:[%s280 + $0x3bc] sm:$0xf]
        %v523 = vld [vmem:[%s280 + $0x3c0] sm:$0xf]
        %v524 = vld [vmem:[%s280 + $0x3c4] sm:$0xf]
        %v525 = vld [vmem:[%s280 + $0x3c8] sm:$0xf]
        %v526 = vld [vmem:[%s280 + $0x3cc] sm:$0xf]
        %v527 = vld [vmem:[%s280 + $0x3d0] sm:$0xf]
        %v528 = vld [vmem:[%s280 + $0x3d4] sm:$0xf]
        %v529 = vld [vmem:[%s280 + $0x3d8] sm:$0xf]
        %v530 = vld [vmem:[%s280 + $0x3dc] sm:$0xf]
        %v531 = vld [vmem:[%s280 + $0x3e0] sm:$0xf]
        %v532 = vld [vmem:[%s280 + $0x3e4] sm:$0xf]
        %v533 = vld [vmem:[%s280 + $0x3e8] sm:$0xf]
        %v534 = vld [vmem:[%s280 + $0x3ec] sm:$0xf]
        %v535 = vld [vmem:[%s280 + $0x3f0] sm:$0xf]
        %v536 = vld [vmem:[%s280 + $0x3f4] sm:$0xf]
        %v537 = vld [vmem:[%s280 + $0x3f8] sm:$0xf]
        %v538 = vld [vmem:[%s280 + $0x3fc] sm:$0xf]
        %v539 = vld [vmem:[%s1] sm:$0xf]
        %v540 = vld [vmem:[%s1 + $0x4] sm:$0xf]
        %v541 = vld [vmem:[%s1 + $0x8] sm:$0xf]
        %v542 = vld [vmem:[%s1 + $0xc] sm:$0xf]
        %v543 = vld [vmem:[%s1 + $0x10] sm:$0x3]
        %v544 = vld [vmem:[%s2] sm:$0x1]
        %v546 = vlaneseq
        %v547 = vshrl.u32 %v546, 7
        %v548 = vsub.s32 0, %v547
        %v549 = vrot.slane %v544, %v548
        %v807 = vunpack.c.l.b16 %v283
        %v808 = vunpack.c.l.b16 %v284
        %v809 = vunpack.c.l.b16 %v285
        %v810 = vunpack.c.l.b16 %v286
        %v811 = vunpack.c.l.b16 %v287
        %v812 = vunpack.c.l.b16 %v288
        %v813 = vunpack.c.l.b16 %v289
        %v814 = vunpack.c.l.b16 %v290
        %v815 = vunpack.c.l.b16 %v291
        %v816 = vunpack.c.l.b16 %v292
        %v817 = vunpack.c.l.b16 %v293
        %v818 = vunpack.c.l.b16 %v294
        %v819 = vunpack.c.l.b16 %v295
        %v820 = vunpack.c.l.b16 %v296
        %v821 = vunpack.c.l.b16 %v297
        %v822 = vunpack.c.l.b16 %v298
        %v823 = vunpack.c.l.b16 %v299
        %v824 = vunpack.c.l.b16 %v300
        %v825 = vunpack.c.l.b16 %v301
        %v826 = vunpack.c.l.b16 %v302
        %v827 = vunpack.c.l.b16 %v303
        %v828 = vunpack.c.l.b16 %v304
        %v829 = vunpack.c.l.b16 %v305
        %v830 = vunpack.c.l.b16 %v306
        %v831 = vunpack.c.l.b16 %v307
        %v832 = vunpack.c.l.b16 %v308
        %v833 = vunpack.c.l.b16 %v309
        %v834 = vunpack.c.l.b16 %v310
        %v835 = vunpack.c.l.b16 %v311
        %v836 = vunpack.c.l.b16 %v312
        %v837 = vunpack.c.l.b16 %v313
        %v838 = vunpack.c.l.b16 %v314
        %v839 = vunpack.c.l.b16 %v315
        %v840 = vunpack.c.l.b16 %v316
        %v841 = vunpack.c.l.b16 %v317
        %v842 = vunpack.c.l.b16 %v318
        %v843 = vunpack.c.l.b16 %v319
        %v844 = vunpack.c.l.b16 %v320
        %v845 = vunpack.c.l.b16 %v321
        %v846 = vunpack.c.l.b16 %v322
        %v847 = vunpack.c.l.b16 %v323
        %v848 = vunpack.c.l.b16 %v324
        %v849 = vunpack.c.l.b16 %v325
        %v850 = vunpack.c.l.b16 %v326
        %v851 = vunpack.c.l.b16 %v327
        %v852 = vunpack.c.l.b16 %v328
        %v853 = vunpack.c.l.b16 %v329
        %v854 = vunpack.c.l.b16 %v330
        %v855 = vunpack.c.l.b16 %v331
        %v856 = vunpack.c.l.b16 %v332
        %v857 = vunpack.c.l.b16 %v333
        %v858 = vunpack.c.l.b16 %v334
        %v859 = vunpack.c.l.b16 %v335
        %v860 = vunpack.c.l.b16 %v336
        %v861 = vunpack.c.l.b16 %v337
        %v862 = vunpack.c.l.b16 %v338
        %v863 = vunpack.c.l.b16 %v339
        %v864 = vunpack.c.l.b16 %v340
        %v865 = vunpack.c.l.b16 %v341
        %v866 = vunpack.c.l.b16 %v342
        %v867 = vunpack.c.l.b16 %v343
        %v868 = vunpack.c.l.b16 %v344
        %v869 = vunpack.c.l.b16 %v345
        %v870 = vunpack.c.l.b16 %v346
        %v871 = vunpack.c.l.b16 %v347
        %v872 = vunpack.c.l.b16 %v348
        %v873 = vunpack.c.l.b16 %v349
        %v874 = vunpack.c.l.b16 %v350
        %v875 = vunpack.c.l.b16 %v351
        %v876 = vunpack.c.l.b16 %v352
        %v877 = vunpack.c.l.b16 %v353
        %v878 = vunpack.c.l.b16 %v354
        %v879 = vunpack.c.l.b16 %v355
        %v880 = vunpack.c.l.b16 %v356
        %v881 = vunpack.c.l.b16 %v357
        %v882 = vunpack.c.l.b16 %v358
        %v883 = vunpack.c.l.b16 %v359
        %v884 = vunpack.c.l.b16 %v360
        %v885 = vunpack.c.l.b16 %v361
        %v886 = vunpack.c.l.b16 %v362
        %v887 = vunpack.c.l.b16 %v363
        %v888 = vunpack.c.l.b16 %v364
        %v889 = vunpack.c.l.b16 %v365
        %v890 = vunpack.c.l.b16 %v366
        %v891 = vunpack.c.l.b16 %v367
        %v892 = vunpack.c.l.b16 %v368
        %v893 = vunpack.c.l.b16 %v369
        %v894 = vunpack.c.l.b16 %v370
        %v895 = vunpack.c.l.b16 %v371
        %v896 = vunpack.c.l.b16 %v372
        %v897 = vunpack.c.l.b16 %v373
        %v898 = vunpack.c.l.b16 %v374
        %v899 = vunpack.c.l.b16 %v375
        %v900 = vunpack.c.l.b16 %v376
        %v901 = vunpack.c.l.b16 %v377
        %v902 = vunpack.c.l.b16 %v378
        %v903 = vunpack.c.l.b16 %v379
        %v904 = vunpack.c.l.b16 %v380
        %v905 = vunpack.c.l.b16 %v381
        %v906 = vunpack.c.l.b16 %v382
        %v907 = vunpack.c.l.b16 %v383
        %v908 = vunpack.c.l.b16 %v384
        %v909 = vunpack.c.l.b16 %v385
        %v910 = vunpack.c.l.b16 %v386
        %v911 = vunpack.c.l.b16 %v387
        %v912 = vunpack.c.l.b16 %v388
        %v913 = vunpack.c.l.b16 %v389
        %v914 = vunpack.c.l.b16 %v390
        %v915 = vunpack.c.l.b16 %v391
        %v916 = vunpack.c.l.b16 %v392
        %v917 = vunpack.c.l.b16 %v393
        %v918 = vunpack.c.l.b16 %v394
        %v919 = vunpack.c.l.b16 %v395
        %v920 = vunpack.c.l.b16 %v396
        %v921 = vunpack.c.l.b16 %v397
        %v922 = vunpack.c.l.b16 %v398
        %v923 = vunpack.c.l.b16 %v399
        %v924 = vunpack.c.l.b16 %v400
        %v925 = vunpack.c.l.b16 %v401
        %v926 = vunpack.c.l.b16 %v402
        %v927 = vunpack.c.l.b16 %v403
        %v928 = vunpack.c.l.b16 %v404
        %v929 = vunpack.c.l.b16 %v405
        %v930 = vunpack.c.l.b16 %v406
        %v931 = vunpack.c.l.b16 %v407
        %v932 = vunpack.c.l.b16 %v408
        %v933 = vunpack.c.l.b16 %v409
        %v934 = vunpack.c.l.b16 %v410
        %v935 = vunpack.c.l.b16 %v411
        %v936 = vunpack.c.l.b16 %v412
        %v937 = vunpack.c.l.b16 %v413
        %v938 = vunpack.c.l.b16 %v414
        %v939 = vunpack.c.l.b16 %v415
        %v940 = vunpack.c.l.b16 %v416
        %v941 = vunpack.c.l.b16 %v417
        %v942 = vunpack.c.l.b16 %v418
        %v943 = vunpack.c.l.b16 %v419
        %v944 = vunpack.c.l.b16 %v420
        %v945 = vunpack.c.l.b16 %v421
        %v946 = vunpack.c.l.b16 %v422
        %v947 = vunpack.c.l.b16 %v423
        %v948 = vunpack.c.l.b16 %v424
        %v949 = vunpack.c.l.b16 %v425
        %v950 = vunpack.c.l.b16 %v426
        %v951 = vunpack.c.l.b16 %v427
        %v952 = vunpack.c.l.b16 %v428
        %v953 = vunpack.c.l.b16 %v429
        %v954 = vunpack.c.l.b16 %v430
        %v955 = vunpack.c.l.b16 %v431
        %v956 = vunpack.c.l.b16 %v432
        %v957 = vunpack.c.l.b16 %v433
        %v958 = vunpack.c.l.b16 %v434
        %v959 = vunpack.c.l.b16 %v435
        %v960 = vunpack.c.l.b16 %v436
        %v961 = vunpack.c.l.b16 %v437
        %v962 = vunpack.c.l.b16 %v438
        %v963 = vunpack.c.l.b16 %v439
        %v964 = vunpack.c.l.b16 %v440
        %v965 = vunpack.c.l.b16 %v441
        %v966 = vunpack.c.l.b16 %v442
        %v967 = vunpack.c.l.b16 %v443
        %v968 = vunpack.c.l.b16 %v444
        %v969 = vunpack.c.l.b16 %v445
        %v970 = vunpack.c.l.b16 %v446
        %v971 = vunpack.c.l.b16 %v447
        %v972 = vunpack.c.l.b16 %v448
        %v973 = vunpack.c.l.b16 %v449
        %v974 = vunpack.c.l.b16 %v450
        %v975 = vunpack.c.l.b16 %v451
        %v976 = vunpack.c.l.b16 %v452
        %v977 = vunpack.c.l.b16 %v453
        %v978 = vunpack.c.l.b16 %v454
        %v979 = vunpack.c.l.b16 %v455
        %v980 = vunpack.c.l.b16 %v456
        %v981 = vunpack.c.l.b16 %v457
        %v982 = vunpack.c.l.b16 %v458
        %v983 = vunpack.c.l.b16 %v459
        %v984 = vunpack.c.l.b16 %v460
        %v985 = vunpack.c.l.b16 %v461
        %v986 = vunpack.c.l.b16 %v462
        %v987 = vunpack.c.l.b16 %v463
        %v988 = vunpack.c.l.b16 %v464
        %v989 = vunpack.c.l.b16 %v465
        %v990 = vunpack.c.l.b16 %v466
        %v991 = vunpack.c.l.b16 %v467
        %v992 = vunpack.c.l.b16 %v468
        %v993 = vunpack.c.l.b16 %v469
        %v994 = vunpack.c.l.b16 %v470
        %v995 = vunpack.c.l.b16 %v471
        %v996 = vunpack.c.l.b16 %v472
        %v997 = vunpack.c.l.b16 %v473
        %v998 = vunpack.c.l.b16 %v474
        %v999 = vunpack.c.l.b16 %v475
        %v1000 = vunpack.c.l.b16 %v476
        %v1001 = vunpack.c.l.b16 %v477
        %v1002 = vunpack.c.l.b16 %v478
        %v1003 = vunpack.c.l.b16 %v479
        %v1004 = vunpack.c.l.b16 %v480
        %v1005 = vunpack.c.l.b16 %v481
        %v1006 = vunpack.c.l.b16 %v482
        %v1007 = vunpack.c.l.b16 %v483
        %v1008 = vunpack.c.l.b16 %v484
        %v1009 = vunpack.c.l.b16 %v485
        %v1010 = vunpack.c.l.b16 %v486
        %v1011 = vunpack.c.l.b16 %v487
        %v1012 = vunpack.c.l.b16 %v488
        %v1013 = vunpack.c.l.b16 %v489
        %v1014 = vunpack.c.l.b16 %v490
        %v1015 = vunpack.c.l.b16 %v491
        %v1016 = vunpack.c.l.b16 %v492
        %v1017 = vunpack.c.l.b16 %v493
        %v1018 = vunpack.c.l.b16 %v494
        %v1019 = vunpack.c.l.b16 %v495
        %v1020 = vunpack.c.l.b16 %v496
        %v1021 = vunpack.c.l.b16 %v497
        %v1022 = vunpack.c.l.b16 %v498
        %v1023 = vunpack.c.l.b16 %v499
        %v1024 = vunpack.c.l.b16 %v500
        %v1025 = vunpack.c.l.b16 %v501
        %v1026 = vunpack.c.l.b16 %v502
        %v1027 = vunpack.c.l.b16 %v503
        %v1028 = vunpack.c.l.b16 %v504
        %v1029 = vunpack.c.l.b16 %v505
        %v1030 = vunpack.c.l.b16 %v506
        %v1031 = vunpack.c.l.b16 %v507
        %v1032 = vunpack.c.l.b16 %v508
        %v1033 = vunpack.c.l.b16 %v509
        %v1034 = vunpack.c.l.b16 %v510
        %v1035 = vunpack.c.l.b16 %v511
        %v1036 = vunpack.c.l.b16 %v512
        %v1037 = vunpack.c.l.b16 %v513
        %v1038 = vunpack.c.l.b16 %v514
        %v1039 = vunpack.c.l.b16 %v515
        %v1040 = vunpack.c.l.b16 %v516
        %v1041 = vunpack.c.l.b16 %v517
        %v1042 = vunpack.c.l.b16 %v518
        %v1043 = vunpack.c.l.b16 %v519
        %v1044 = vunpack.c.l.b16 %v520
        %v1045 = vunpack.c.l.b16 %v521
        %v1046 = vunpack.c.l.b16 %v522
        %v1047 = vunpack.c.l.b16 %v523
        %v1048 = vunpack.c.l.b16 %v524
        %v1049 = vunpack.c.l.b16 %v525
        %v1050 = vunpack.c.l.b16 %v526
        %v1051 = vunpack.c.l.b16 %v527
        %v1052 = vunpack.c.l.b16 %v528
        %v1053 = vunpack.c.l.b16 %v529
        %v1054 = vunpack.c.l.b16 %v530
        %v1055 = vunpack.c.l.b16 %v531
        %v1056 = vunpack.c.l.b16 %v532
        %v1057 = vunpack.c.l.b16 %v533
        %v1058 = vunpack.c.l.b16 %v534
        %v1059 = vunpack.c.l.b16 %v535
        %v1060 = vunpack.c.l.b16 %v536
        %v1061 = vunpack.c.l.b16 %v537
        %v1062 = vunpack.c.l.b16 %v538
        %v1063 = vpack.c.b16 %v808, %v807
        %v1064 = vpack.c.b16 %v810, %v809
        %v1065 = vpack.c.b16 %v812, %v811
        %v1066 = vpack.c.b16 %v814, %v813
        %v1067 = vpack.c.b16 %v816, %v815
        %v1068 = vpack.c.b16 %v818, %v817
        %v1069 = vpack.c.b16 %v820, %v819
        %v1070 = vpack.c.b16 %v822, %v821
        %v1071 = vpack.c.b16 %v824, %v823
        %v1072 = vpack.c.b16 %v826, %v825
        %v1073 = vpack.c.b16 %v828, %v827
        %v1074 = vpack.c.b16 %v830, %v829
        %v1075 = vpack.c.b16 %v832, %v831
        %v1076 = vpack.c.b16 %v834, %v833
        %v1077 = vpack.c.b16 %v836, %v835
        %v1078 = vpack.c.b16 %v838, %v837
        %v1079 = vpack.c.b16 %v840, %v839
        %v1080 = vpack.c.b16 %v842, %v841
        %v1081 = vpack.c.b16 %v844, %v843
        %v1082 = vpack.c.b16 %v846, %v845
        %v1083 = vpack.c.b16 %v848, %v847
        %v1084 = vpack.c.b16 %v850, %v849
        %v1085 = vpack.c.b16 %v852, %v851
        %v1086 = vpack.c.b16 %v854, %v853
        %v1087 = vpack.c.b16 %v856, %v855
        %v1088 = vpack.c.b16 %v858, %v857
        %v1089 = vpack.c.b16 %v860, %v859
        %v1090 = vpack.c.b16 %v862, %v861
        %v1091 = vpack.c.b16 %v864, %v863
        %v1092 = vpack.c.b16 %v866, %v865
        %v1093 = vpack.c.b16 %v868, %v867
        %v1094 = vpack.c.b16 %v870, %v869
        %v1095 = vpack.c.b16 %v872, %v871
        %v1096 = vpack.c.b16 %v874, %v873
        %v1097 = vpack.c.b16 %v876, %v875
        %v1098 = vpack.c.b16 %v878, %v877
        %v1099 = vpack.c.b16 %v880, %v879
        %v1100 = vpack.c.b16 %v882, %v881
        %v1101 = vpack.c.b16 %v884, %v883
        %v1102 = vpack.c.b16 %v886, %v885
        %v1103 = vpack.c.b16 %v888, %v887
        %v1104 = vpack.c.b16 %v890, %v889
        %v1105 = vpack.c.b16 %v892, %v891
        %v1106 = vpack.c.b16 %v894, %v893
        %v1107 = vpack.c.b16 %v896, %v895
        %v1108 = vpack.c.b16 %v898, %v897
        %v1109 = vpack.c.b16 %v900, %v899
        %v1110 = vpack.c.b16 %v902, %v901
        %v1111 = vpack.c.b16 %v904, %v903
        %v1112 = vpack.c.b16 %v906, %v905
        %v1113 = vpack.c.b16 %v908, %v907
        %v1114 = vpack.c.b16 %v910, %v909
        %v1115 = vpack.c.b16 %v912, %v911
        %v1116 = vpack.c.b16 %v914, %v913
        %v1117 = vpack.c.b16 %v916, %v915
        %v1118 = vpack.c.b16 %v918, %v917
        %v1119 = vpack.c.b16 %v920, %v919
        %v1120 = vpack.c.b16 %v922, %v921
        %v1121 = vpack.c.b16 %v924, %v923
        %v1122 = vpack.c.b16 %v926, %v925
        %v1123 = vpack.c.b16 %v928, %v927
        %v1124 = vpack.c.b16 %v930, %v929
        %v1125 = vpack.c.b16 %v932, %v931
        %v1126 = vpack.c.b16 %v934, %v933
        %v1127 = vpack.c.b16 %v936, %v935
        %v1128 = vpack.c.b16 %v938, %v937
        %v1129 = vpack.c.b16 %v940, %v939
        %v1130 = vpack.c.b16 %v942, %v941
        %v1131 = vpack.c.b16 %v944, %v943
        %v1132 = vpack.c.b16 %v946, %v945
        %v1133 = vpack.c.b16 %v948, %v947
        %v1134 = vpack.c.b16 %v950, %v949
        %v1135 = vpack.c.b16 %v952, %v951
        %v1136 = vpack.c.b16 %v954, %v953
        %v1137 = vpack.c.b16 %v956, %v955
        %v1138 = vpack.c.b16 %v958, %v957
        %v1139 = vpack.c.b16 %v960, %v959
        %v1140 = vpack.c.b16 %v962, %v961
        %v1141 = vpack.c.b16 %v964, %v963
        %v1142 = vpack.c.b16 %v966, %v965
        %v1143 = vpack.c.b16 %v968, %v967
        %v1144 = vpack.c.b16 %v970, %v969
        %v1145 = vpack.c.b16 %v972, %v971
        %v1146 = vpack.c.b16 %v974, %v973
        %v1147 = vpack.c.b16 %v976, %v975
        %v1148 = vpack.c.b16 %v978, %v977
        %v1149 = vpack.c.b16 %v980, %v979
        %v1150 = vpack.c.b16 %v982, %v981
        %v1151 = vpack.c.b16 %v984, %v983
        %v1152 = vpack.c.b16 %v986, %v985
        %v1153 = vpack.c.b16 %v988, %v987
        %v1154 = vpack.c.b16 %v990, %v989
        %v1155 = vpack.c.b16 %v992, %v991
        %v1156 = vpack.c.b16 %v994, %v993
        %v1157 = vpack.c.b16 %v996, %v995
        %v1158 = vpack.c.b16 %v998, %v997
        %v1159 = vpack.c.b16 %v1000, %v999
        %v1160 = vpack.c.b16 %v1002, %v1001
        %v1161 = vpack.c.b16 %v1004, %v1003
        %v1162 = vpack.c.b16 %v1006, %v1005
        %v1163 = vpack.c.b16 %v1008, %v1007
        %v1164 = vpack.c.b16 %v1010, %v1009
        %v1165 = vpack.c.b16 %v1012, %v1011
        %v1166 = vpack.c.b16 %v1014, %v1013
        %v1167 = vpack.c.b16 %v1016, %v1015
        %v1168 = vpack.c.b16 %v1018, %v1017
        %v1169 = vpack.c.b16 %v1020, %v1019
        %v1170 = vpack.c.b16 %v1022, %v1021
        %v1171 = vpack.c.b16 %v1024, %v1023
        %v1172 = vpack.c.b16 %v1026, %v1025
        %v1173 = vpack.c.b16 %v1028, %v1027
        %v1174 = vpack.c.b16 %v1030, %v1029
        %v1175 = vpack.c.b16 %v1032, %v1031
        %v1176 = vpack.c.b16 %v1034, %v1033
        %v1177 = vpack.c.b16 %v1036, %v1035
        %v1178 = vpack.c.b16 %v1038, %v1037
        %v1179 = vpack.c.b16 %v1040, %v1039
        %v1180 = vpack.c.b16 %v1042, %v1041
        %v1181 = vpack.c.b16 %v1044, %v1043
        %v1182 = vpack.c.b16 %v1046, %v1045
        %v1183 = vpack.c.b16 %v1048, %v1047
        %v1184 = vpack.c.b16 %v1050, %v1049
        %v1185 = vpack.c.b16 %v1052, %v1051
        %v1186 = vpack.c.b16 %v1054, %v1053
        %v1187 = vpack.c.b16 %v1056, %v1055
        %v1188 = vpack.c.b16 %v1058, %v1057
        %v1189 = vpack.c.b16 %v1060, %v1059
        %v1190 = vpack.c.b16 %v1062, %v1061
        %v1196 = vunpack.c.l.b16 %v539
        %v1197 = vunpack.c.l.b16 %v540
        %v1198 = vunpack.c.l.b16 %v541
        %v1199 = vunpack.c.l.b16 %v542
        %v1200 = vunpack.c.l.b16 %v543
        %v1201 = vpack.c.b16 %v1197, %v1196
        %v1202 = vpack.c.b16 %v1199, %v1198
        %v1203 = vpack.c.b16 %v1200, %v1200
        %vm1206 = vcmask 293888
        %v1208 = vsel %vm1206, %v1063, 0
        %v1211 = vsel %vm1206, %v1064, 0
        %v1214 = vsel %vm1206, %v1065, 0
        %v1217 = vsel %vm1206, %v1066, 0
        %v1220 = vsel %vm1206, %v1067, 0
        %v1223 = vsel %vm1206, %v1068, 0
        %v1226 = vsel %vm1206, %v1069, 0
        %v1229 = vsel %vm1206, %v1070, 0
        %v1232 = vsel %vm1206, %v1071, 0
        %v1235 = vsel %vm1206, %v1072, 0
        %v1238 = vsel %vm1206, %v1073, 0
        %v1241 = vsel %vm1206, %v1074, 0
        %v1244 = vsel %vm1206, %v1075, 0
        %v1247 = vsel %vm1206, %v1076, 0
        %v1250 = vsel %vm1206, %v1077, 0
        %v1253 = vsel %vm1206, %v1078, 0
        %v1256 = vsel %vm1206, %v1079, 0
        %v1259 = vsel %vm1206, %v1080, 0
        %v1262 = vsel %vm1206, %v1081, 0
        %v1265 = vsel %vm1206, %v1082, 0
        %v1268 = vsel %vm1206, %v1083, 0
        %v1271 = vsel %vm1206, %v1084, 0
        %v1274 = vsel %vm1206, %v1085, 0
        %v1277 = vsel %vm1206, %v1086, 0
        %v1280 = vsel %vm1206, %v1087, 0
        %v1283 = vsel %vm1206, %v1088, 0
        %v1286 = vsel %vm1206, %v1089, 0
        %v1289 = vsel %vm1206, %v1090, 0
        %v1292 = vsel %vm1206, %v1091, 0
        %v1295 = vsel %vm1206, %v1092, 0
        %v1298 = vsel %vm1206, %v1093, 0
        %v1301 = vsel %vm1206, %v1094, 0
        %v1304 = vsel %vm1206, %v1095, 0
        %v1307 = vsel %vm1206, %v1096, 0
        %v1310 = vsel %vm1206, %v1097, 0
        %v1313 = vsel %vm1206, %v1098, 0
        %v1316 = vsel %vm1206, %v1099, 0
        %v1319 = vsel %vm1206, %v1100, 0
        %v1322 = vsel %vm1206, %v1101, 0
        %v1325 = vsel %vm1206, %v1102, 0
        %v1328 = vsel %vm1206, %v1103, 0
        %v1331 = vsel %vm1206, %v1104, 0
        %v1334 = vsel %vm1206, %v1105, 0
        %v1337 = vsel %vm1206, %v1106, 0
        %v1340 = vsel %vm1206, %v1107, 0
        %v1343 = vsel %vm1206, %v1108, 0
        %v1346 = vsel %vm1206, %v1109, 0
        %v1349 = vsel %vm1206, %v1110, 0
        %v1352 = vsel %vm1206, %v1111, 0
        %v1355 = vsel %vm1206, %v1112, 0
        %v1358 = vsel %vm1206, %v1113, 0
        %v1361 = vsel %vm1206, %v1114, 0
        %v1364 = vsel %vm1206, %v1115, 0
        %v1367 = vsel %vm1206, %v1116, 0
        %v1370 = vsel %vm1206, %v1117, 0
        %v1373 = vsel %vm1206, %v1118, 0
        %v1376 = vsel %vm1206, %v1119, 0
        %v1379 = vsel %vm1206, %v1120, 0
        %v1382 = vsel %vm1206, %v1121, 0
        %v1385 = vsel %vm1206, %v1122, 0
        %v1388 = vsel %vm1206, %v1123, 0
        %v1391 = vsel %vm1206, %v1124, 0
        %v1394 = vsel %vm1206, %v1125, 0
        %v1397 = vsel %vm1206, %v1126, 0
        %v1400 = vsel %vm1206, %v1127, 0
        %v1403 = vsel %vm1206, %v1128, 0
        %v1406 = vsel %vm1206, %v1129, 0
        %v1409 = vsel %vm1206, %v1130, 0
        %v1412 = vsel %vm1206, %v1131, 0
        %v1415 = vsel %vm1206, %v1132, 0
        %v1418 = vsel %vm1206, %v1133, 0
        %v1421 = vsel %vm1206, %v1134, 0
        %v1424 = vsel %vm1206, %v1135, 0
        %v1427 = vsel %vm1206, %v1136, 0
        %v1430 = vsel %vm1206, %v1137, 0
        %v1433 = vsel %vm1206, %v1138, 0
        %v1436 = vsel %vm1206, %v1139, 0
        %v1439 = vsel %vm1206, %v1140, 0
        %v1442 = vsel %vm1206, %v1141, 0
        %v1445 = vsel %vm1206, %v1142, 0
        %v1448 = vsel %vm1206, %v1143, 0
        %v1451 = vsel %vm1206, %v1144, 0
        %v1454 = vsel %vm1206, %v1145, 0
        %v1457 = vsel %vm1206, %v1146, 0
        %v1460 = vsel %vm1206, %v1147, 0
        %v1463 = vsel %vm1206, %v1148, 0
        %v1466 = vsel %vm1206, %v1149, 0
        %v1469 = vsel %vm1206, %v1150, 0
        %v1472 = vsel %vm1206, %v1151, 0
        %v1475 = vsel %vm1206, %v1152, 0
        %v1478 = vsel %vm1206, %v1153, 0
        %v1481 = vsel %vm1206, %v1154, 0
        %v1484 = vsel %vm1206, %v1155, 0
        %v1487 = vsel %vm1206, %v1156, 0
        %v1490 = vsel %vm1206, %v1157, 0
        %v1493 = vsel %vm1206, %v1158, 0
        %v1496 = vsel %vm1206, %v1159, 0
        %v1499 = vsel %vm1206, %v1160, 0
        %v1502 = vsel %vm1206, %v1161, 0
        %v1505 = vsel %vm1206, %v1162, 0
        %v1508 = vsel %vm1206, %v1163, 0
        %v1511 = vsel %vm1206, %v1164, 0
        %v1514 = vsel %vm1206, %v1165, 0
        %v1517 = vsel %vm1206, %v1166, 0
        %v1520 = vsel %vm1206, %v1167, 0
        %v1523 = vsel %vm1206, %v1168, 0
        %v1526 = vsel %vm1206, %v1169, 0
        %v1529 = vsel %vm1206, %v1170, 0
        %v1532 = vsel %vm1206, %v1171, 0
        %v1535 = vsel %vm1206, %v1172, 0
        %v1538 = vsel %vm1206, %v1173, 0
        %v1541 = vsel %vm1206, %v1174, 0
        %v1544 = vsel %vm1206, %v1175, 0
        %v1547 = vsel %vm1206, %v1176, 0
        %v1550 = vsel %vm1206, %v1177, 0
        %v1553 = vsel %vm1206, %v1178, 0
        %v1556 = vsel %vm1206, %v1179, 0
        %v1559 = vsel %vm1206, %v1180, 0
        %v1562 = vsel %vm1206, %v1181, 0
        %v1565 = vsel %vm1206, %v1182, 0
        %v1568 = vsel %vm1206, %v1183, 0
        %v1571 = vsel %vm1206, %v1184, 0
        %v1574 = vsel %vm1206, %v1185, 0
        %v1577 = vsel %vm1206, %v1186, 0
        %v1580 = vsel %vm1206, %v1187, 0
        %v1583 = vsel %vm1206, %v1188, 0
        %v1586 = vsel %vm1206, %v1189, 0
        %v1589 = vsel %vm1206, %v1190, 0
        %vm1591 = vcmask 1041408
        %v1593 = vsel %vm1591, %v1203, 0
        %1595 = vmatprep.subr.bf16.mxu0 0
        %1596 = vmatpush1.bf16.msra.mxu0 %v1201
        %1597 = vmatprep.subr.bf16.mxu0 0
        %1598 = vmatpush1.bf16.msra.mxu0 %v1202
        %1599 = vmatprep.subr.bf16.mxu0 0
        %1600 = vmatpush1.bf16.msra.mxu0 %v1593
        %1601 = vmatprep.subr.bf16.mxu0 0
        %1602 = vmatpush1.bf16.msra.mxu0 0
        %1603 = vmatprep.subr.bf16.mxu0 0
        %1604 = vmatpush1.bf16.msra.mxu0 0
        %1605 = vmatprep.subr.bf16.mxu0 0
        %1606 = vmatpush1.bf16.msra.mxu0 0
        %1607 = vmatprep.subr.bf16.mxu0 0
        %1608 = vmatpush1.bf16.msra.mxu0 0
        %1609 = vmatprep.subr.bf16.mxu0 0
        %1610 = vmatpush1.bf16.msra.mxu0 0
        %1611 = vmatprep.subr.bf16.mxu0 0
        %1612 = vmatpush1.bf16.msra.mxu0 0
        %1613 = vmatprep.subr.bf16.mxu0 0
        %1614 = vmatpush1.bf16.msra.mxu0 0
        %1615 = vmatprep.subr.bf16.mxu0 0
        %1616 = vmatpush1.bf16.msra.mxu0 0
        %1617 = vmatprep.subr.bf16.mxu0 0
        %1618 = vmatpush1.bf16.msra.mxu0 0
        %1619 = vmatprep.subr.bf16.mxu0 0
        %1620 = vmatpush1.bf16.msra.mxu0 0
        %1621 = vmatprep.subr.bf16.mxu0 0
        %1622 = vmatpush1.bf16.msra.mxu0 0
        %1623 = vmatprep.subr.bf16.mxu0 0
        %1624 = vmatpush1.bf16.msra.mxu0 0
        %1625 = vmatprep.subr.bf16.mxu0 0
        %1626 = vmatpush1.bf16.msra.mxu0 0
        %1627 = vmatprep.mubr.bf16.mxu0 0
        %1628 = vmatmul.mubr.bf16.gmra.mrb[0].mxu0 %v1208
        %v1629 = vpop.f32.mrb[0].mxu0
        %v1630 = vadd.f32 %v549, %v1629
        %v1631 = vpop.f32.mrb[0].mxu0
        %v1632 = vpop.f32.mrb[0].mxu0
        %v1633 = vadd.f32 %v549, %v1632
        %v1634 = vpop.f32.mrb[0].mxu0
        %1635 = vmatprep.mubr.bf16.mxu0 0
        %1636 = vmatmul.mubr.bf16.gmra.mrb[0].mxu0 %v1211
        %v1637 = vpop.f32.mrb[0].mxu0
        %v1638 = vadd.f32 %v549, %v1637
        %v1639 = vpop.f32.mrb[0].mxu0
        %v1640 = vpop.f32.mrb[0].mxu0
        %v1641 = vadd.f32 %v549, %v1640
        %v1642 = vpop.f32.mrb[0].mxu0
        %1643 = vmatprep.mubr.bf16.mxu0 0
        %1644 = vmatmul.mubr.bf16.gmra.mrb[0].mxu0 %v1214
        %v1645 = vpop.f32.mrb[0].mxu0
        %v1646 = vadd.f32 %v549, %v1645
        %v1647 = vpop.f32.mrb[0].mxu0
        %v1648 = vpop.f32.mrb[0].mxu0
        %v1649 = vadd.f32 %v549, %v1648
        %v1650 = vpop.f32.mrb[0].mxu0
        %1651 = vmatprep.mubr.bf16.mxu0 0
        %1652 = vmatmul.mubr.bf16.gmra.mrb[0].mxu0 %v1217
        %v1653 = vpop.f32.mrb[0].mxu0
        %v1654 = vadd.f32 %v549, %v1653
        %v1655 = vpop.f32.mrb[0].mxu0
        %v1656 = vpop.f32.mrb[0].mxu0
        %v1657 = vadd.f32 %v549, %v1656
        %v1658 = vpop.f32.mrb[0].mxu0
        %1659 = vmatprep.mubr.bf16.mxu0 0
        %1660 = vmatmul.mubr.bf16.gmra.mrb[0].mxu0 %v1220
        %v1661 = vpop.f32.mrb[0].mxu0
        %v1662 = vadd.f32 %v549, %v1661
        %v1663 = vpop.f32.mrb[0].mxu0
        %v1664 = vpop.f32.mrb[0].mxu0
        %v1665 = vadd.f32 %v549, %v1664
        %v1666 = vpop.f32.mrb[0].mxu0
        %1667 = vmatprep.mubr.bf16.mxu0 0
        %1668 = vmatmul.mubr.bf16.gmra.mrb[0].mxu0 %v1223
        %v1669 = vpop.f32.mrb[0].mxu0
        %v1670 = vadd.f32 %v549, %v1669
        %v1671 = vpop.f32.mrb[0].mxu0
        %v1672 = vpop.f32.mrb[0].mxu0
        %v1673 = vadd.f32 %v549, %v1672
        %v1674 = vpop.f32.mrb[0].mxu0
        %1675 = vmatprep.mubr.bf16.mxu0 0
        %1676 = vmatmul.mubr.bf16.gmra.mrb[0].mxu0 %v1226
        %v1677 = vpop.f32.mrb[0].mxu0
        %v1678 = vadd.f32 %v549, %v1677
        %v1679 = vpop.f32.mrb[0].mxu0
        %v1680 = vpop.f32.mrb[0].mxu0
        %v1681 = vadd.f32 %v549, %v1680
        %v1682 = vpop.f32.mrb[0].mxu0
        %1683 = vmatprep.mubr.bf16.mxu0 0
        %1684 = vmatmul.mubr.bf16.gmra.mrb[0].mxu0 %v1229
        %v1685 = vpop.f32.mrb[0].mxu0
        %v1686 = vadd.f32 %v549, %v1685
        %v1687 = vpop.f32.mrb[0].mxu0
        %v1688 = vpop.f32.mrb[0].mxu0
        %v1689 = vadd.f32 %v549, %v1688
        %v1690 = vpop.f32.mrb[0].mxu0
        %1691 = vmatprep.mubr.bf16.mxu0 0
        %1692 = vmatmul.mubr.bf16.gmra.mrb[0].mxu0 %v1232
        %v1693 = vpop.f32.mrb[0].mxu0
        %v1694 = vadd.f32 %v549, %v1693
        %v1695 = vpop.f32.mrb[0].mxu0
        %v1696 = vpop.f32.mrb[0].mxu0
        %v1697 = vadd.f32 %v549, %v1696
        %v1698 = vpop.f32.mrb[0].mxu0
        %1699 = vmatprep.mubr.bf16.mxu0 0
        %1700 = vmatmul.mubr.bf16.gmra.mrb[0].mxu0 %v1235
        %v1701 = vpop.f32.mrb[0].mxu0
        %v1702 = vadd.f32 %v549, %v1701
        %v1703 = vpop.f32.mrb[0].mxu0
        %v1704 = vpop.f32.mrb[0].mxu0
        %v1705 = vadd.f32 %v549, %v1704
        %v1706 = vpop.f32.mrb[0].mxu0
        %1707 = vmatprep.mubr.bf16.mxu0 0
        %1708 = vmatmul.mubr.bf16.gmra.mrb[0].mxu0 %v1238
        %v1709 = vpop.f32.mrb[0].mxu0
        %v1710 = vadd.f32 %v549, %v1709
        %v1711 = vpop.f32.mrb[0].mxu0
        %v1712 = vpop.f32.mrb[0].mxu0
        %v1713 = vadd.f32 %v549, %v1712
        %v1714 = vpop.f32.mrb[0].mxu0
        %1715 = vmatprep.mubr.bf16.mxu0 0
        %1716 = vmatmul.mubr.bf16.gmra.mrb[0].mxu0 %v1241
        %v1717 = vpop.f32.mrb[0].mxu0
        %v1718 = vadd.f32 %v549, %v1717
        %v1719 = vpop.f32.mrb[0].mxu0
        %v1720 = vpop.f32.mrb[0].mxu0
        %v1721 = vadd.f32 %v549, %v1720
        %v1722 = vpop.f32.mrb[0].mxu0
        %1723 = vmatprep.mubr.bf16.mxu0 0
        %1724 = vmatmul.mubr.bf16.gmra.mrb[0].mxu0 %v1244
        %v1725 = vpop.f32.mrb[0].mxu0
        %v1726 = vadd.f32 %v549, %v1725
        %v1727 = vpop.f32.mrb[0].mxu0
        %v1728 = vpop.f32.mrb[0].mxu0
        %v1729 = vadd.f32 %v549, %v1728
        %v1730 = vpop.f32.mrb[0].mxu0
        %1731 = vmatprep.mubr.bf16.mxu0 0
        %1732 = vmatmul.mubr.bf16.gmra.mrb[0].mxu0 %v1247
        %v1733 = vpop.f32.mrb[0].mxu0
        %v1734 = vadd.f32 %v549, %v1733
        %v1735 = vpop.f32.mrb[0].mxu0
        %v1736 = vpop.f32.mrb[0].mxu0
        %v1737 = vadd.f32 %v549, %v1736
        %v1738 = vpop.f32.mrb[0].mxu0
        %1739 = vmatprep.mubr.bf16.mxu0 0
        %1740 = vmatmul.mubr.bf16.gmra.mrb[0].mxu0 %v1250
        %v1741 = vpop.f32.mrb[0].mxu0
        %v1742 = vadd.f32 %v549, %v1741
        %v1743 = vpop.f32.mrb[0].mxu0
        %v1744 = vpop.f32.mrb[0].mxu0
        %v1745 = vadd.f32 %v549, %v1744
        %v1746 = vpop.f32.mrb[0].mxu0
        %1747 = vmatprep.mubr.bf16.mxu0 0
        %1748 = vmatmul.mubr.bf16.gmra.mrb[0].mxu0 %v1253
        %v1749 = vpop.f32.mrb[0].mxu0
        %v1750 = vadd.f32 %v549, %v1749
        %v1751 = vpop.f32.mrb[0].mxu0
        %v1752 = vpop.f32.mrb[0].mxu0
        %v1753 = vadd.f32 %v549, %v1752
        %v1754 = vpop.f32.mrb[0].mxu0
        %1755 = vmatprep.mubr.bf16.mxu0 0
        %1756 = vmatmul.mubr.bf16.gmra.mrb[0].mxu0 %v1256
        %v1757 = vpop.f32.mrb[0].mxu0
        %v1758 = vadd.f32 %v549, %v1757
        %v1759 = vpop.f32.mrb[0].mxu0
        %v1760 = vpop.f32.mrb[0].mxu0
        %v1761 = vadd.f32 %v549, %v1760
        %v1762 = vpop.f32.mrb[0].mxu0
        %1763 = vmatprep.mubr.bf16.mxu0 0
        %1764 = vmatmul.mubr.bf16.gmra.mrb[0].mxu0 %v1259
        %v1765 = vpop.f32.mrb[0].mxu0
        %v1766 = vadd.f32 %v549, %v1765
        %v1767 = vpop.f32.mrb[0].mxu0
        %v1768 = vpop.f32.mrb[0].mxu0
        %v1769 = vadd.f32 %v549, %v1768
        %v1770 = vpop.f32.mrb[0].mxu0
        %1771 = vmatprep.mubr.bf16.mxu0 0
        %1772 = vmatmul.mubr.bf16.gmra.mrb[0].mxu0 %v1262
        %v1773 = vpop.f32.mrb[0].mxu0
        %v1774 = vadd.f32 %v549, %v1773
        %v1775 = vpop.f32.mrb[0].mxu0
        %v1776 = vpop.f32.mrb[0].mxu0
        %v1777 = vadd.f32 %v549, %v1776
        %v1778 = vpop.f32.mrb[0].mxu0
        %1779 = vmatprep.mubr.bf16.mxu0 0
        %1780 = vmatmul.mubr.bf16.gmra.mrb[0].mxu0 %v1265
        %v1781 = vpop.f32.mrb[0].mxu0
        %v1782 = vadd.f32 %v549, %v1781
        %v1783 = vpop.f32.mrb[0].mxu0
        %v1784 = vpop.f32.mrb[0].mxu0
        %v1785 = vadd.f32 %v549, %v1784
        %v1786 = vpop.f32.mrb[0].mxu0
        %1787 = vmatprep.mubr.bf16.mxu0 0
        %1788 = vmatmul.mubr.bf16.gmra.mrb[0].mxu0 %v1268
        %v1789 = vpop.f32.mrb[0].mxu0
        %v1790 = vadd.f32 %v549, %v1789
        %v1791 = vpop.f32.mrb[0].mxu0
        %v1792 = vpop.f32.mrb[0].mxu0
        %v1793 = vadd.f32 %v549, %v1792
        %v1794 = vpop.f32.mrb[0].mxu0
        %1795 = vmatprep.mubr.bf16.mxu0 0
        %1796 = vmatmul.mubr.bf16.gmra.mrb[0].mxu0 %v1271
        %v1797 = vpop.f32.mrb[0].mxu0
        %v1798 = vadd.f32 %v549, %v1797
        %v1799 = vpop.f32.mrb[0].mxu0
        %v1800 = vpop.f32.mrb[0].mxu0
        %v1801 = vadd.f32 %v549, %v1800
        %v1802 = vpop.f32.mrb[0].mxu0
        %1803 = vmatprep.mubr.bf16.mxu0 0
        %1804 = vmatmul.mubr.bf16.gmra.mrb[0].mxu0 %v1274
        %v1805 = vpop.f32.mrb[0].mxu0
        %v1806 = vadd.f32 %v549, %v1805
        %v1807 = vpop.f32.mrb[0].mxu0
        %v1808 = vpop.f32.mrb[0].mxu0
        %v1809 = vadd.f32 %v549, %v1808
        %v1810 = vpop.f32.mrb[0].mxu0
        %1811 = vmatprep.mubr.bf16.mxu0 0
        %1812 = vmatmul.mubr.bf16.gmra.mrb[0].mxu0 %v1277
        %v1813 = vpop.f32.mrb[0].mxu0
        %v1814 = vadd.f32 %v549, %v1813
        %v1815 = vpop.f32.mrb[0].mxu0
        %v1816 = vpop.f32.mrb[0].mxu0
        %v1817 = vadd.f32 %v549, %v1816
        %v1818 = vpop.f32.mrb[0].mxu0
        %1819 = vmatprep.mubr.bf16.mxu0 0
        %1820 = vmatmul.mubr.bf16.gmra.mrb[0].mxu0 %v1280
        %v1821 = vpop.f32.mrb[0].mxu0
        %v1822 = vadd.f32 %v549, %v1821
        %v1823 = vpop.f32.mrb[0].mxu0
        %v1824 = vpop.f32.mrb[0].mxu0
        %v1825 = vadd.f32 %v549, %v1824
        %v1826 = vpop.f32.mrb[0].mxu0
        %1827 = vmatprep.mubr.bf16.mxu0 0
        %1828 = vmatmul.mubr.bf16.gmra.mrb[0].mxu0 %v1283
        %v1829 = vpop.f32.mrb[0].mxu0
        %v1830 = vadd.f32 %v549, %v1829
        %v1831 = vpop.f32.mrb[0].mxu0
        %v1832 = vpop.f32.mrb[0].mxu0
        %v1833 = vadd.f32 %v549, %v1832
        %v1834 = vpop.f32.mrb[0].mxu0
        %1835 = vmatprep.mubr.bf16.mxu0 0
        %1836 = vmatmul.mubr.bf16.gmra.mrb[0].mxu0 %v1286
        %v1837 = vpop.f32.mrb[0].mxu0
        %v1838 = vadd.f32 %v549, %v1837
        %v1839 = vpop.f32.mrb[0].mxu0
        %v1840 = vpop.f32.mrb[0].mxu0
        %v1841 = vadd.f32 %v549, %v1840
        %v1842 = vpop.f32.mrb[0].mxu0
        %1843 = vmatprep.mubr.bf16.mxu0 0
        %1844 = vmatmul.mubr.bf16.gmra.mrb[0].mxu0 %v1289
        %v1845 = vpop.f32.mrb[0].mxu0
        %v1846 = vadd.f32 %v549, %v1845
        %v1847 = vpop.f32.mrb[0].mxu0
        %v1848 = vpop.f32.mrb[0].mxu0
        %v1849 = vadd.f32 %v549, %v1848
        %v1850 = vpop.f32.mrb[0].mxu0
        %1851 = vmatprep.mubr.bf16.mxu0 0
        %1852 = vmatmul.mubr.bf16.gmra.mrb[0].mxu0 %v1292
        %v1853 = vpop.f32.mrb[0].mxu0
        %v1854 = vadd.f32 %v549, %v1853
        %v1855 = vpop.f32.mrb[0].mxu0
        %v1856 = vpop.f32.mrb[0].mxu0
        %v1857 = vadd.f32 %v549, %v1856
        %v1858 = vpop.f32.mrb[0].mxu0
        %1859 = vmatprep.mubr.bf16.mxu0 0
        %1860 = vmatmul.mubr.bf16.gmra.mrb[0].mxu0 %v1295
        %v1861 = vpop.f32.mrb[0].mxu0
        %v1862 = vadd.f32 %v549, %v1861
        %v1863 = vpop.f32.mrb[0].mxu0
        %v1864 = vpop.f32.mrb[0].mxu0
        %v1865 = vadd.f32 %v549, %v1864
        %v1866 = vpop.f32.mrb[0].mxu0
        %1867 = vmatprep.mubr.bf16.mxu0 0
        %1868 = vmatmul.mubr.bf16.gmra.mrb[0].mxu0 %v1298
        %v1869 = vpop.f32.mrb[0].mxu0
        %v1870 = vadd.f32 %v549, %v1869
        %v1871 = vpop.f32.mrb[0].mxu0
        %v1872 = vpop.f32.mrb[0].mxu0
        %v1873 = vadd.f32 %v549, %v1872
        %v1874 = vpop.f32.mrb[0].mxu0
        %1875 = vmatprep.mubr.bf16.mxu0 0
        %1876 = vmatmul.mubr.bf16.gmra.mrb[0].mxu0 %v1301
        %v1877 = vpop.f32.mrb[0].mxu0
        %v1878 = vadd.f32 %v549, %v1877
        %v1879 = vpop.f32.mrb[0].mxu0
        %v1880 = vpop.f32.mrb[0].mxu0
        %v1881 = vadd.f32 %v549, %v1880
        %v1882 = vpop.f32.mrb[0].mxu0
        %1883 = vmatprep.mubr.bf16.mxu0 0
        %1884 = vmatmul.mubr.bf16.gmra.mrb[0].mxu0 %v1304
        %v1885 = vpop.f32.mrb[0].mxu0
        %v1886 = vadd.f32 %v549, %v1885
        %v1887 = vpop.f32.mrb[0].mxu0
        %v1888 = vpop.f32.mrb[0].mxu0
        %v1889 = vadd.f32 %v549, %v1888
        %v1890 = vpop.f32.mrb[0].mxu0
        %1891 = vmatprep.mubr.bf16.mxu0 0
        %1892 = vmatmul.mubr.bf16.gmra.mrb[0].mxu0 %v1307
        %v1893 = vpop.f32.mrb[0].mxu0
        %v1894 = vadd.f32 %v549, %v1893
        %v1895 = vpop.f32.mrb[0].mxu0
        %v1896 = vpop.f32.mrb[0].mxu0
        %v1897 = vadd.f32 %v549, %v1896
        %v1898 = vpop.f32.mrb[0].mxu0
        %1899 = vmatprep.mubr.bf16.mxu0 0
        %1900 = vmatmul.mubr.bf16.gmra.mrb[0].mxu0 %v1310
        %v1901 = vpop.f32.mrb[0].mxu0
        %v1902 = vadd.f32 %v549, %v1901
        %v1903 = vpop.f32.mrb[0].mxu0
        %v1904 = vpop.f32.mrb[0].mxu0
        %v1905 = vadd.f32 %v549, %v1904
        %v1906 = vpop.f32.mrb[0].mxu0
        %1907 = vmatprep.mubr.bf16.mxu0 0
        %1908 = vmatmul.mubr.bf16.gmra.mrb[0].mxu0 %v1313
        %v1909 = vpop.f32.mrb[0].mxu0
        %v1910 = vadd.f32 %v549, %v1909
        %v1911 = vpop.f32.mrb[0].mxu0
        %v1912 = vpop.f32.mrb[0].mxu0
        %v1913 = vadd.f32 %v549, %v1912
        %v1914 = vpop.f32.mrb[0].mxu0
        %1915 = vmatprep.mubr.bf16.mxu0 0
        %1916 = vmatmul.mubr.bf16.gmra.mrb[0].mxu0 %v1316
        %v1917 = vpop.f32.mrb[0].mxu0
        %v1918 = vadd.f32 %v549, %v1917
        %v1919 = vpop.f32.mrb[0].mxu0
        %v1920 = vpop.f32.mrb[0].mxu0
        %v1921 = vadd.f32 %v549, %v1920
        %v1922 = vpop.f32.mrb[0].mxu0
        %1923 = vmatprep.mubr.bf16.mxu0 0
        %1924 = vmatmul.mubr.bf16.gmra.mrb[0].mxu0 %v1319
        %v1925 = vpop.f32.mrb[0].mxu0
        %v1926 = vadd.f32 %v549, %v1925
        %v1927 = vpop.f32.mrb[0].mxu0
        %v1928 = vpop.f32.mrb[0].mxu0
        %v1929 = vadd.f32 %v549, %v1928
        %v1930 = vpop.f32.mrb[0].mxu0
        %1931 = vmatprep.mubr.bf16.mxu0 0
        %1932 = vmatmul.mubr.bf16.gmra.mrb[0].mxu0 %v1322
        %v1933 = vpop.f32.mrb[0].mxu0
        %v1934 = vadd.f32 %v549, %v1933
        %v1935 = vpop.f32.mrb[0].mxu0
        %v1936 = vpop.f32.mrb[0].mxu0
        %v1937 = vadd.f32 %v549, %v1936
        %v1938 = vpop.f32.mrb[0].mxu0
        %1939 = vmatprep.mubr.bf16.mxu0 0
        %1940 = vmatmul.mubr.bf16.gmra.mrb[0].mxu0 %v1325
        %v1941 = vpop.f32.mrb[0].mxu0
        %v1942 = vadd.f32 %v549, %v1941
        %v1943 = vpop.f32.mrb[0].mxu0
        %v1944 = vpop.f32.mrb[0].mxu0
        %v1945 = vadd.f32 %v549, %v1944
        %v1946 = vpop.f32.mrb[0].mxu0
        %1947 = vmatprep.mubr.bf16.mxu0 0
        %1948 = vmatmul.mubr.bf16.gmra.mrb[0].mxu0 %v1328
        %v1949 = vpop.f32.mrb[0].mxu0
        %v1950 = vadd.f32 %v549, %v1949
        %v1951 = vpop.f32.mrb[0].mxu0
        %v1952 = vpop.f32.mrb[0].mxu0
        %v1953 = vadd.f32 %v549, %v1952
        %v1954 = vpop.f32.mrb[0].mxu0
        %1955 = vmatprep.mubr.bf16.mxu0 0
        %1956 = vmatmul.mubr.bf16.gmra.mrb[0].mxu0 %v1331
        %v1957 = vpop.f32.mrb[0].mxu0
        %v1958 = vadd.f32 %v549, %v1957
        %v1959 = vpop.f32.mrb[0].mxu0
        %v1960 = vpop.f32.mrb[0].mxu0
        %v1961 = vadd.f32 %v549, %v1960
        %v1962 = vpop.f32.mrb[0].mxu0
        %1963 = vmatprep.mubr.bf16.mxu0 0
        %1964 = vmatmul.mubr.bf16.gmra.mrb[0].mxu0 %v1334
        %v1965 = vpop.f32.mrb[0].mxu0
        %v1966 = vadd.f32 %v549, %v1965
        %v1967 = vpop.f32.mrb[0].mxu0
        %v1968 = vpop.f32.mrb[0].mxu0
        %v1969 = vadd.f32 %v549, %v1968
        %v1970 = vpop.f32.mrb[0].mxu0
        %1971 = vmatprep.mubr.bf16.mxu0 0
        %1972 = vmatmul.mubr.bf16.gmra.mrb[0].mxu0 %v1337
        %v1973 = vpop.f32.mrb[0].mxu0
        %v1974 = vadd.f32 %v549, %v1973
        %v1975 = vpop.f32.mrb[0].mxu0
        %v1976 = vpop.f32.mrb[0].mxu0
        %v1977 = vadd.f32 %v549, %v1976
        %v1978 = vpop.f32.mrb[0].mxu0
        %1979 = vmatprep.mubr.bf16.mxu0 0
        %1980 = vmatmul.mubr.bf16.gmra.mrb[0].mxu0 %v1340
        %v1981 = vpop.f32.mrb[0].mxu0
        %v1982 = vadd.f32 %v549, %v1981
        %v1983 = vpop.f32.mrb[0].mxu0
        %v1984 = vpop.f32.mrb[0].mxu0
        %v1985 = vadd.f32 %v549, %v1984
        %v1986 = vpop.f32.mrb[0].mxu0
        %1987 = vmatprep.mubr.bf16.mxu0 0
        %1988 = vmatmul.mubr.bf16.gmra.mrb[0].mxu0 %v1343
        %v1989 = vpop.f32.mrb[0].mxu0
        %v1990 = vadd.f32 %v549, %v1989
        %v1991 = vpop.f32.mrb[0].mxu0
        %v1992 = vpop.f32.mrb[0].mxu0
        %v1993 = vadd.f32 %v549, %v1992
        %v1994 = vpop.f32.mrb[0].mxu0
        %1995 = vmatprep.mubr.bf16.mxu0 0
        %1996 = vmatmul.mubr.bf16.gmra.mrb[0].mxu0 %v1346
        %v1997 = vpop.f32.mrb[0].mxu0
        %v1998 = vadd.f32 %v549, %v1997
        %v1999 = vpop.f32.mrb[0].mxu0
        %v2000 = vpop.f32.mrb[0].mxu0
        %v2001 = vadd.f32 %v549, %v2000
        %v2002 = vpop.f32.mrb[0].mxu0
        %2003 = vmatprep.mubr.bf16.mxu0 0
        %2004 = vmatmul.mubr.bf16.gmra.mrb[0].mxu0 %v1349
        %v2005 = vpop.f32.mrb[0].mxu0
        %v2006 = vadd.f32 %v549, %v2005
        %v2007 = vpop.f32.mrb[0].mxu0
        %v2008 = vpop.f32.mrb[0].mxu0
        %v2009 = vadd.f32 %v549, %v2008
        %v2010 = vpop.f32.mrb[0].mxu0
        %2011 = vmatprep.mubr.bf16.mxu0 0
        %2012 = vmatmul.mubr.bf16.gmra.mrb[0].mxu0 %v1352
        %v2013 = vpop.f32.mrb[0].mxu0
        %v2014 = vadd.f32 %v549, %v2013
        %v2015 = vpop.f32.mrb[0].mxu0
        %v2016 = vpop.f32.mrb[0].mxu0
        %v2017 = vadd.f32 %v549, %v2016
        %v2018 = vpop.f32.mrb[0].mxu0
        %2019 = vmatprep.mubr.bf16.mxu0 0
        %2020 = vmatmul.mubr.bf16.gmra.mrb[0].mxu0 %v1355
        %v2021 = vpop.f32.mrb[0].mxu0
        %v2022 = vadd.f32 %v549, %v2021
        %v2023 = vpop.f32.mrb[0].mxu0
        %v2024 = vpop.f32.mrb[0].mxu0
        %v2025 = vadd.f32 %v549, %v2024
        %v2026 = vpop.f32.mrb[0].mxu0
        %2027 = vmatprep.mubr.bf16.mxu0 0
        %2028 = vmatmul.mubr.bf16.gmra.mrb[0].mxu0 %v1358
        %v2029 = vpop.f32.mrb[0].mxu0
        %v2030 = vadd.f32 %v549, %v2029
        %v2031 = vpop.f32.mrb[0].mxu0
        %v2032 = vpop.f32.mrb[0].mxu0
        %v2033 = vadd.f32 %v549, %v2032
        %v2034 = vpop.f32.mrb[0].mxu0
        %2035 = vmatprep.mubr.bf16.mxu0 0
        %2036 = vmatmul.mubr.bf16.gmra.mrb[0].mxu0 %v1361
        %v2037 = vpop.f32.mrb[0].mxu0
        %v2038 = vadd.f32 %v549, %v2037
        %v2039 = vpop.f32.mrb[0].mxu0
        %v2040 = vpop.f32.mrb[0].mxu0
        %v2041 = vadd.f32 %v549, %v2040
        %v2042 = vpop.f32.mrb[0].mxu0
        %2043 = vmatprep.mubr.bf16.mxu0 0
        %2044 = vmatmul.mubr.bf16.gmra.mrb[0].mxu0 %v1364
        %v2045 = vpop.f32.mrb[0].mxu0
        %v2046 = vadd.f32 %v549, %v2045
        %v2047 = vpop.f32.mrb[0].mxu0
        %v2048 = vpop.f32.mrb[0].mxu0
        %v2049 = vadd.f32 %v549, %v2048
        %v2050 = vpop.f32.mrb[0].mxu0
        %2051 = vmatprep.mubr.bf16.mxu0 0
        %2052 = vmatmul.mubr.bf16.gmra.mrb[0].mxu0 %v1367
        %v2053 = vpop.f32.mrb[0].mxu0
        %v2054 = vadd.f32 %v549, %v2053
        %v2055 = vpop.f32.mrb[0].mxu0
        %v2056 = vpop.f32.mrb[0].mxu0
        %v2057 = vadd.f32 %v549, %v2056
        %v2058 = vpop.f32.mrb[0].mxu0
        %2059 = vmatprep.mubr.bf16.mxu0 0
        %2060 = vmatmul.mubr.bf16.gmra.mrb[0].mxu0 %v1370
        %v2061 = vpop.f32.mrb[0].mxu0
        %v2062 = vadd.f32 %v549, %v2061
        %v2063 = vpop.f32.mrb[0].mxu0
        %v2064 = vpop.f32.mrb[0].mxu0
        %v2065 = vadd.f32 %v549, %v2064
        %v2066 = vpop.f32.mrb[0].mxu0
        %2067 = vmatprep.mubr.bf16.mxu0 0
        %2068 = vmatmul.mubr.bf16.gmra.mrb[0].mxu0 %v1373
        %v2069 = vpop.f32.mrb[0].mxu0
        %v2070 = vadd.f32 %v549, %v2069
        %v2071 = vpop.f32.mrb[0].mxu0
        %v2072 = vpop.f32.mrb[0].mxu0
        %v2073 = vadd.f32 %v549, %v2072
        %v2074 = vpop.f32.mrb[0].mxu0
        %2075 = vmatprep.mubr.bf16.mxu0 0
        %2076 = vmatmul.mubr.bf16.gmra.mrb[0].mxu0 %v1376
        %v2077 = vpop.f32.mrb[0].mxu0
        %v2078 = vadd.f32 %v549, %v2077
        %v2079 = vpop.f32.mrb[0].mxu0
        %v2080 = vpop.f32.mrb[0].mxu0
        %v2081 = vadd.f32 %v549, %v2080
        %v2082 = vpop.f32.mrb[0].mxu0
        %2083 = vmatprep.mubr.bf16.mxu0 0
        %2084 = vmatmul.mubr.bf16.gmra.mrb[0].mxu0 %v1379
        %v2085 = vpop.f32.mrb[0].mxu0
        %v2086 = vadd.f32 %v549, %v2085
        %v2087 = vpop.f32.mrb[0].mxu0
        %v2088 = vpop.f32.mrb[0].mxu0
        %v2089 = vadd.f32 %v549, %v2088
        %v2090 = vpop.f32.mrb[0].mxu0
        %2091 = vmatprep.mubr.bf16.mxu0 0
        %2092 = vmatmul.mubr.bf16.gmra.mrb[0].mxu0 %v1382
        %v2093 = vpop.f32.mrb[0].mxu0
        %v2094 = vadd.f32 %v549, %v2093
        %v2095 = vpop.f32.mrb[0].mxu0
        %v2096 = vpop.f32.mrb[0].mxu0
        %v2097 = vadd.f32 %v549, %v2096
        %v2098 = vpop.f32.mrb[0].mxu0
        %2099 = vmatprep.mubr.bf16.mxu0 0
        %2100 = vmatmul.mubr.bf16.gmra.mrb[0].mxu0 %v1385
        %v2101 = vpop.f32.mrb[0].mxu0
        %v2102 = vadd.f32 %v549, %v2101
        %v2103 = vpop.f32.mrb[0].mxu0
        %v2104 = vpop.f32.mrb[0].mxu0
        %v2105 = vadd.f32 %v549, %v2104
        %v2106 = vpop.f32.mrb[0].mxu0
        %2107 = vmatprep.mubr.bf16.mxu0 0
        %2108 = vmatmul.mubr.bf16.gmra.mrb[0].mxu0 %v1388
        %v2109 = vpop.f32.mrb[0].mxu0
        %v2110 = vadd.f32 %v549, %v2109
        %v2111 = vpop.f32.mrb[0].mxu0
        %v2112 = vpop.f32.mrb[0].mxu0
        %v2113 = vadd.f32 %v549, %v2112
        %v2114 = vpop.f32.mrb[0].mxu0
        %2115 = vmatprep.mubr.bf16.mxu0 0
        %2116 = vmatmul.mubr.bf16.gmra.mrb[0].mxu0 %v1391
        %v2117 = vpop.f32.mrb[0].mxu0
        %v2118 = vadd.f32 %v549, %v2117
        %v2119 = vpop.f32.mrb[0].mxu0
        %v2120 = vpop.f32.mrb[0].mxu0
        %v2121 = vadd.f32 %v549, %v2120
        %v2122 = vpop.f32.mrb[0].mxu0
        %2123 = vmatprep.mubr.bf16.mxu0 0
        %2124 = vmatmul.mubr.bf16.gmra.mrb[0].mxu0 %v1394
        %v2125 = vpop.f32.mrb[0].mxu0
        %v2126 = vadd.f32 %v549, %v2125
        %v2127 = vpop.f32.mrb[0].mxu0
        %v2128 = vpop.f32.mrb[0].mxu0
        %v2129 = vadd.f32 %v549, %v2128
        %v2130 = vpop.f32.mrb[0].mxu0
        %2131 = vmatprep.mubr.bf16.mxu0 0
        %2132 = vmatmul.mubr.bf16.gmra.mrb[0].mxu0 %v1397
        %v2133 = vpop.f32.mrb[0].mxu0
        %v2134 = vadd.f32 %v549, %v2133
        %v2135 = vpop.f32.mrb[0].mxu0
        %v2136 = vpop.f32.mrb[0].mxu0
        %v2137 = vadd.f32 %v549, %v2136
        %v2138 = vpop.f32.mrb[0].mxu0
        %2139 = vmatprep.mubr.bf16.mxu0 0
        %2140 = vmatmul.mubr.bf16.gmra.mrb[0].mxu0 %v1400
        %v2141 = vpop.f32.mrb[0].mxu0
        %v2142 = vadd.f32 %v549, %v2141
        %v2143 = vpop.f32.mrb[0].mxu0
        %v2144 = vpop.f32.mrb[0].mxu0
        %v2145 = vadd.f32 %v549, %v2144
        %v2146 = vpop.f32.mrb[0].mxu0
        %2147 = vmatprep.mubr.bf16.mxu0 0
        %2148 = vmatmul.mubr.bf16.gmra.mrb[0].mxu0 %v1403
        %v2149 = vpop.f32.mrb[0].mxu0
        %v2150 = vadd.f32 %v549, %v2149
        %v2151 = vpop.f32.mrb[0].mxu0
        %v2152 = vpop.f32.mrb[0].mxu0
        %v2153 = vadd.f32 %v549, %v2152
        %v2154 = vpop.f32.mrb[0].mxu0
        %2155 = vmatprep.mubr.bf16.mxu0 0
        %2156 = vmatmul.mubr.bf16.gmra.mrb[0].mxu0 %v1406
        %v2157 = vpop.f32.mrb[0].mxu0
        %v2158 = vadd.f32 %v549, %v2157
        %v2159 = vpop.f32.mrb[0].mxu0
        %v2160 = vpop.f32.mrb[0].mxu0
        %v2161 = vadd.f32 %v549, %v2160
        %v2162 = vpop.f32.mrb[0].mxu0
        %2163 = vmatprep.mubr.bf16.mxu0 0
        %2164 = vmatmul.mubr.bf16.gmra.mrb[0].mxu0 %v1409
        %v2165 = vpop.f32.mrb[0].mxu0
        %v2166 = vadd.f32 %v549, %v2165
        %v2167 = vpop.f32.mrb[0].mxu0
        %v2168 = vpop.f32.mrb[0].mxu0
        %v2169 = vadd.f32 %v549, %v2168
        %v2170 = vpop.f32.mrb[0].mxu0
        %2171 = vmatprep.mubr.bf16.mxu0 0
        %2172 = vmatmul.mubr.bf16.gmra.mrb[0].mxu0 %v1412
        %v2173 = vpop.f32.mrb[0].mxu0
        %v2174 = vadd.f32 %v549, %v2173
        %v2175 = vpop.f32.mrb[0].mxu0
        %v2176 = vpop.f32.mrb[0].mxu0
        %v2177 = vadd.f32 %v549, %v2176
        %v2178 = vpop.f32.mrb[0].mxu0
        %2179 = vmatprep.mubr.bf16.mxu0 0
        %2180 = vmatmul.mubr.bf16.gmra.mrb[0].mxu0 %v1415
        %v2181 = vpop.f32.mrb[0].mxu0
        %v2182 = vadd.f32 %v549, %v2181
        %v2183 = vpop.f32.mrb[0].mxu0
        %v2184 = vpop.f32.mrb[0].mxu0
        %v2185 = vadd.f32 %v549, %v2184
        %v2186 = vpop.f32.mrb[0].mxu0
        %2187 = vmatprep.mubr.bf16.mxu0 0
        %2188 = vmatmul.mubr.bf16.gmra.mrb[0].mxu0 %v1418
        %v2189 = vpop.f32.mrb[0].mxu0
        %v2190 = vadd.f32 %v549, %v2189
        %v2191 = vpop.f32.mrb[0].mxu0
        %v2192 = vpop.f32.mrb[0].mxu0
        %v2193 = vadd.f32 %v549, %v2192
        %v2194 = vpop.f32.mrb[0].mxu0
        %2195 = vmatprep.mubr.bf16.mxu0 0
        %2196 = vmatmul.mubr.bf16.gmra.mrb[0].mxu0 %v1421
        %v2197 = vpop.f32.mrb[0].mxu0
        %v2198 = vadd.f32 %v549, %v2197
        %v2199 = vpop.f32.mrb[0].mxu0
        %v2200 = vpop.f32.mrb[0].mxu0
        %v2201 = vadd.f32 %v549, %v2200
        %v2202 = vpop.f32.mrb[0].mxu0
        %2203 = vmatprep.mubr.bf16.mxu0 0
        %2204 = vmatmul.mubr.bf16.gmra.mrb[0].mxu0 %v1424
        %v2205 = vpop.f32.mrb[0].mxu0
        %v2206 = vadd.f32 %v549, %v2205
        %v2207 = vpop.f32.mrb[0].mxu0
        %v2208 = vpop.f32.mrb[0].mxu0
        %v2209 = vadd.f32 %v549, %v2208
        %v2210 = vpop.f32.mrb[0].mxu0
        %2211 = vmatprep.mubr.bf16.mxu0 0
        %2212 = vmatmul.mubr.bf16.gmra.mrb[0].mxu0 %v1427
        %v2213 = vpop.f32.mrb[0].mxu0
        %v2214 = vadd.f32 %v549, %v2213
        %v2215 = vpop.f32.mrb[0].mxu0
        %v2216 = vpop.f32.mrb[0].mxu0
        %v2217 = vadd.f32 %v549, %v2216
        %v2218 = vpop.f32.mrb[0].mxu0
        %2219 = vmatprep.mubr.bf16.mxu0 0
        %2220 = vmatmul.mubr.bf16.gmra.mrb[0].mxu0 %v1430
        %v2221 = vpop.f32.mrb[0].mxu0
        %v2222 = vadd.f32 %v549, %v2221
        %v2223 = vpop.f32.mrb[0].mxu0
        %v2224 = vpop.f32.mrb[0].mxu0
        %v2225 = vadd.f32 %v549, %v2224
        %v2226 = vpop.f32.mrb[0].mxu0
        %2227 = vmatprep.mubr.bf16.mxu0 0
        %2228 = vmatmul.mubr.bf16.gmra.mrb[0].mxu0 %v1433
        %v2229 = vpop.f32.mrb[0].mxu0
        %v2230 = vadd.f32 %v549, %v2229
        %v2231 = vpop.f32.mrb[0].mxu0
        %v2232 = vpop.f32.mrb[0].mxu0
        %v2233 = vadd.f32 %v549, %v2232
        %v2234 = vpop.f32.mrb[0].mxu0
        %2235 = vmatprep.mubr.bf16.mxu0 0
        %2236 = vmatmul.mubr.bf16.gmra.mrb[0].mxu0 %v1436
        %v2237 = vpop.f32.mrb[0].mxu0
        %v2238 = vadd.f32 %v549, %v2237
        %v2239 = vpop.f32.mrb[0].mxu0
        %v2240 = vpop.f32.mrb[0].mxu0
        %v2241 = vadd.f32 %v549, %v2240
        %v2242 = vpop.f32.mrb[0].mxu0
        %2243 = vmatprep.mubr.bf16.mxu0 0
        %2244 = vmatmul.mubr.bf16.gmra.mrb[0].mxu0 %v1439
        %v2245 = vpop.f32.mrb[0].mxu0
        %v2246 = vadd.f32 %v549, %v2245
        %v2247 = vpop.f32.mrb[0].mxu0
        %v2248 = vpop.f32.mrb[0].mxu0
        %v2249 = vadd.f32 %v549, %v2248
        %v2250 = vpop.f32.mrb[0].mxu0
        %2251 = vmatprep.mubr.bf16.mxu0 0
        %2252 = vmatmul.mubr.bf16.gmra.mrb[0].mxu0 %v1442
        %v2253 = vpop.f32.mrb[0].mxu0
        %v2254 = vadd.f32 %v549, %v2253
        %v2255 = vpop.f32.mrb[0].mxu0
        %v2256 = vpop.f32.mrb[0].mxu0
        %v2257 = vadd.f32 %v549, %v2256
        %v2258 = vpop.f32.mrb[0].mxu0
        %2259 = vmatprep.mubr.bf16.mxu0 0
        %2260 = vmatmul.mubr.bf16.gmra.mrb[0].mxu0 %v1445
        %v2261 = vpop.f32.mrb[0].mxu0
        %v2262 = vadd.f32 %v549, %v2261
        %v2263 = vpop.f32.mrb[0].mxu0
        %v2264 = vpop.f32.mrb[0].mxu0
        %v2265 = vadd.f32 %v549, %v2264
        %v2266 = vpop.f32.mrb[0].mxu0
        %2267 = vmatprep.mubr.bf16.mxu0 0
        %2268 = vmatmul.mubr.bf16.gmra.mrb[0].mxu0 %v1448
        %v2269 = vpop.f32.mrb[0].mxu0
        %v2270 = vadd.f32 %v549, %v2269
        %v2271 = vpop.f32.mrb[0].mxu0
        %v2272 = vpop.f32.mrb[0].mxu0
        %v2273 = vadd.f32 %v549, %v2272
        %v2274 = vpop.f32.mrb[0].mxu0
        %2275 = vmatprep.mubr.bf16.mxu0 0
        %2276 = vmatmul.mubr.bf16.gmra.mrb[0].mxu0 %v1451
        %v2277 = vpop.f32.mrb[0].mxu0
        %v2278 = vadd.f32 %v549, %v2277
        %v2279 = vpop.f32.mrb[0].mxu0
        %v2280 = vpop.f32.mrb[0].mxu0
        %v2281 = vadd.f32 %v549, %v2280
        %v2282 = vpop.f32.mrb[0].mxu0
        %2283 = vmatprep.mubr.bf16.mxu0 0
        %2284 = vmatmul.mubr.bf16.gmra.mrb[0].mxu0 %v1454
        %v2285 = vpop.f32.mrb[0].mxu0
        %v2286 = vadd.f32 %v549, %v2285
        %v2287 = vpop.f32.mrb[0].mxu0
        %v2288 = vpop.f32.mrb[0].mxu0
        %v2289 = vadd.f32 %v549, %v2288
        %v2290 = vpop.f32.mrb[0].mxu0
        %2291 = vmatprep.mubr.bf16.mxu0 0
        %2292 = vmatmul.mubr.bf16.gmra.mrb[0].mxu0 %v1457
        %v2293 = vpop.f32.mrb[0].mxu0
        %v2294 = vadd.f32 %v549, %v2293
        %v2295 = vpop.f32.mrb[0].mxu0
        %v2296 = vpop.f32.mrb[0].mxu0
        %v2297 = vadd.f32 %v549, %v2296
        %v2298 = vpop.f32.mrb[0].mxu0
        %2299 = vmatprep.mubr.bf16.mxu0 0
        %2300 = vmatmul.mubr.bf16.gmra.mrb[0].mxu0 %v1460
        %v2301 = vpop.f32.mrb[0].mxu0
        %v2302 = vadd.f32 %v549, %v2301
        %v2303 = vpop.f32.mrb[0].mxu0
        %v2304 = vpop.f32.mrb[0].mxu0
        %v2305 = vadd.f32 %v549, %v2304
        %v2306 = vpop.f32.mrb[0].mxu0
        %2307 = vmatprep.mubr.bf16.mxu0 0
        %2308 = vmatmul.mubr.bf16.gmra.mrb[0].mxu0 %v1463
        %v2309 = vpop.f32.mrb[0].mxu0
        %v2310 = vadd.f32 %v549, %v2309
        %v2311 = vpop.f32.mrb[0].mxu0
        %v2312 = vpop.f32.mrb[0].mxu0
        %v2313 = vadd.f32 %v549, %v2312
        %v2314 = vpop.f32.mrb[0].mxu0
        %2315 = vmatprep.mubr.bf16.mxu0 0
        %2316 = vmatmul.mubr.bf16.gmra.mrb[0].mxu0 %v1466
        %v2317 = vpop.f32.mrb[0].mxu0
        %v2318 = vadd.f32 %v549, %v2317
        %v2319 = vpop.f32.mrb[0].mxu0
        %v2320 = vpop.f32.mrb[0].mxu0
        %v2321 = vadd.f32 %v549, %v2320
        %v2322 = vpop.f32.mrb[0].mxu0
        %2323 = vmatprep.mubr.bf16.mxu0 0
        %2324 = vmatmul.mubr.bf16.gmra.mrb[0].mxu0 %v1469
        %v2325 = vpop.f32.mrb[0].mxu0
        %v2326 = vadd.f32 %v549, %v2325
        %v2327 = vpop.f32.mrb[0].mxu0
        %v2328 = vpop.f32.mrb[0].mxu0
        %v2329 = vadd.f32 %v549, %v2328
        %v2330 = vpop.f32.mrb[0].mxu0
        %2331 = vmatprep.mubr.bf16.mxu0 0
        %2332 = vmatmul.mubr.bf16.gmra.mrb[0].mxu0 %v1472
        %v2333 = vpop.f32.mrb[0].mxu0
        %v2334 = vadd.f32 %v549, %v2333
        %v2335 = vpop.f32.mrb[0].mxu0
        %v2336 = vpop.f32.mrb[0].mxu0
        %v2337 = vadd.f32 %v549, %v2336
        %v2338 = vpop.f32.mrb[0].mxu0
        %2339 = vmatprep.mubr.bf16.mxu0 0
        %2340 = vmatmul.mubr.bf16.gmra.mrb[0].mxu0 %v1475
        %v2341 = vpop.f32.mrb[0].mxu0
        %v2342 = vadd.f32 %v549, %v2341
        %v2343 = vpop.f32.mrb[0].mxu0
        %v2344 = vpop.f32.mrb[0].mxu0
        %v2345 = vadd.f32 %v549, %v2344
        %v2346 = vpop.f32.mrb[0].mxu0
        %2347 = vmatprep.mubr.bf16.mxu0 0
        %2348 = vmatmul.mubr.bf16.gmra.mrb[0].mxu0 %v1478
        %v2349 = vpop.f32.mrb[0].mxu0
        %v2350 = vadd.f32 %v549, %v2349
        %v2351 = vpop.f32.mrb[0].mxu0
        %v2352 = vpop.f32.mrb[0].mxu0
        %v2353 = vadd.f32 %v549, %v2352
        %v2354 = vpop.f32.mrb[0].mxu0
        %2355 = vmatprep.mubr.bf16.mxu0 0
        %2356 = vmatmul.mubr.bf16.gmra.mrb[0].mxu0 %v1481
        %v2357 = vpop.f32.mrb[0].mxu0
        %v2358 = vadd.f32 %v549, %v2357
        %v2359 = vpop.f32.mrb[0].mxu0
        %v2360 = vpop.f32.mrb[0].mxu0
        %v2361 = vadd.f32 %v549, %v2360
        %v2362 = vpop.f32.mrb[0].mxu0
        %2363 = vmatprep.mubr.bf16.mxu0 0
        %2364 = vmatmul.mubr.bf16.gmra.mrb[0].mxu0 %v1484
        %v2365 = vpop.f32.mrb[0].mxu0
        %v2366 = vadd.f32 %v549, %v2365
        %v2367 = vpop.f32.mrb[0].mxu0
        %v2368 = vpop.f32.mrb[0].mxu0
        %v2369 = vadd.f32 %v549, %v2368
        %v2370 = vpop.f32.mrb[0].mxu0
        %2371 = vmatprep.mubr.bf16.mxu0 0
        %2372 = vmatmul.mubr.bf16.gmra.mrb[0].mxu0 %v1487
        %v2373 = vpop.f32.mrb[0].mxu0
        %v2374 = vadd.f32 %v549, %v2373
        %v2375 = vpop.f32.mrb[0].mxu0
        %v2376 = vpop.f32.mrb[0].mxu0
        %v2377 = vadd.f32 %v549, %v2376
        %v2378 = vpop.f32.mrb[0].mxu0
        %2379 = vmatprep.mubr.bf16.mxu0 0
        %2380 = vmatmul.mubr.bf16.gmra.mrb[0].mxu0 %v1490
        %v2381 = vpop.f32.mrb[0].mxu0
        %v2382 = vadd.f32 %v549, %v2381
        %v2383 = vpop.f32.mrb[0].mxu0
        %v2384 = vpop.f32.mrb[0].mxu0
        %v2385 = vadd.f32 %v549, %v2384
        %v2386 = vpop.f32.mrb[0].mxu0
        %2387 = vmatprep.mubr.bf16.mxu0 0
        %2388 = vmatmul.mubr.bf16.gmra.mrb[0].mxu0 %v1493
        %v2389 = vpop.f32.mrb[0].mxu0
        %v2390 = vadd.f32 %v549, %v2389
        %v2391 = vpop.f32.mrb[0].mxu0
        %v2392 = vpop.f32.mrb[0].mxu0
        %v2393 = vadd.f32 %v549, %v2392
        %v2394 = vpop.f32.mrb[0].mxu0
        %2395 = vmatprep.mubr.bf16.mxu0 0
        %2396 = vmatmul.mubr.bf16.gmra.mrb[0].mxu0 %v1496
        %v2397 = vpop.f32.mrb[0].mxu0
        %v2398 = vadd.f32 %v549, %v2397
        %v2399 = vpop.f32.mrb[0].mxu0
        %v2400 = vpop.f32.mrb[0].mxu0
        %v2401 = vadd.f32 %v549, %v2400
        %v2402 = vpop.f32.mrb[0].mxu0
        %2403 = vmatprep.mubr.bf16.mxu0 0
        %2404 = vmatmul.mubr.bf16.gmra.mrb[0].mxu0 %v1499
        %v2405 = vpop.f32.mrb[0].mxu0
        %v2406 = vadd.f32 %v549, %v2405
        %v2407 = vpop.f32.mrb[0].mxu0
        %v2408 = vpop.f32.mrb[0].mxu0
        %v2409 = vadd.f32 %v549, %v2408
        %v2410 = vpop.f32.mrb[0].mxu0
        %2411 = vmatprep.mubr.bf16.mxu0 0
        %2412 = vmatmul.mubr.bf16.gmra.mrb[0].mxu0 %v1502
        %v2413 = vpop.f32.mrb[0].mxu0
        %v2414 = vadd.f32 %v549, %v2413
        %v2415 = vpop.f32.mrb[0].mxu0
        %v2416 = vpop.f32.mrb[0].mxu0
        %v2417 = vadd.f32 %v549, %v2416
        %v2418 = vpop.f32.mrb[0].mxu0
        %2419 = vmatprep.mubr.bf16.mxu0 0
        %2420 = vmatmul.mubr.bf16.gmra.mrb[0].mxu0 %v1505
        %v2421 = vpop.f32.mrb[0].mxu0
        %v2422 = vadd.f32 %v549, %v2421
        %v2423 = vpop.f32.mrb[0].mxu0
        %v2424 = vpop.f32.mrb[0].mxu0
        %v2425 = vadd.f32 %v549, %v2424
        %v2426 = vpop.f32.mrb[0].mxu0
        %2427 = vmatprep.mubr.bf16.mxu0 0
        %2428 = vmatmul.mubr.bf16.gmra.mrb[0].mxu0 %v1508
        %v2429 = vpop.f32.mrb[0].mxu0
        %v2430 = vadd.f32 %v549, %v2429
        %v2431 = vpop.f32.mrb[0].mxu0
        %v2432 = vpop.f32.mrb[0].mxu0
        %v2433 = vadd.f32 %v549, %v2432
        %v2434 = vpop.f32.mrb[0].mxu0
        %2435 = vmatprep.mubr.bf16.mxu0 0
        %2436 = vmatmul.mubr.bf16.gmra.mrb[0].mxu0 %v1511
        %v2437 = vpop.f32.mrb[0].mxu0
        %v2438 = vadd.f32 %v549, %v2437
        %v2439 = vpop.f32.mrb[0].mxu0
        %v2440 = vpop.f32.mrb[0].mxu0
        %v2441 = vadd.f32 %v549, %v2440
        %v2442 = vpop.f32.mrb[0].mxu0
        %2443 = vmatprep.mubr.bf16.mxu0 0
        %2444 = vmatmul.mubr.bf16.gmra.mrb[0].mxu0 %v1514
        %v2445 = vpop.f32.mrb[0].mxu0
        %v2446 = vadd.f32 %v549, %v2445
        %v2447 = vpop.f32.mrb[0].mxu0
        %v2448 = vpop.f32.mrb[0].mxu0
        %v2449 = vadd.f32 %v549, %v2448
        %v2450 = vpop.f32.mrb[0].mxu0
        %2451 = vmatprep.mubr.bf16.mxu0 0
        %2452 = vmatmul.mubr.bf16.gmra.mrb[0].mxu0 %v1517
        %v2453 = vpop.f32.mrb[0].mxu0
        %v2454 = vadd.f32 %v549, %v2453
        %v2455 = vpop.f32.mrb[0].mxu0
        %v2456 = vpop.f32.mrb[0].mxu0
        %v2457 = vadd.f32 %v549, %v2456
        %v2458 = vpop.f32.mrb[0].mxu0
        %2459 = vmatprep.mubr.bf16.mxu0 0
        %2460 = vmatmul.mubr.bf16.gmra.mrb[0].mxu0 %v1520
        %v2461 = vpop.f32.mrb[0].mxu0
        %v2462 = vadd.f32 %v549, %v2461
        %v2463 = vpop.f32.mrb[0].mxu0
        %v2464 = vpop.f32.mrb[0].mxu0
        %v2465 = vadd.f32 %v549, %v2464
        %v2466 = vpop.f32.mrb[0].mxu0
        %2467 = vmatprep.mubr.bf16.mxu0 0
        %2468 = vmatmul.mubr.bf16.gmra.mrb[0].mxu0 %v1523
        %v2469 = vpop.f32.mrb[0].mxu0
        %v2470 = vadd.f32 %v549, %v2469
        %v2471 = vpop.f32.mrb[0].mxu0
        %v2472 = vpop.f32.mrb[0].mxu0
        %v2473 = vadd.f32 %v549, %v2472
        %v2474 = vpop.f32.mrb[0].mxu0
        %2475 = vmatprep.mubr.bf16.mxu0 0
        %2476 = vmatmul.mubr.bf16.gmra.mrb[0].mxu0 %v1526
        %v2477 = vpop.f32.mrb[0].mxu0
        %v2478 = vadd.f32 %v549, %v2477
        %v2479 = vpop.f32.mrb[0].mxu0
        %v2480 = vpop.f32.mrb[0].mxu0
        %v2481 = vadd.f32 %v549, %v2480
        %v2482 = vpop.f32.mrb[0].mxu0
        %2483 = vmatprep.mubr.bf16.mxu0 0
        %2484 = vmatmul.mubr.bf16.gmra.mrb[0].mxu0 %v1529
        %v2485 = vpop.f32.mrb[0].mxu0
        %v2486 = vadd.f32 %v549, %v2485
        %v2487 = vpop.f32.mrb[0].mxu0
        %v2488 = vpop.f32.mrb[0].mxu0
        %v2489 = vadd.f32 %v549, %v2488
        %v2490 = vpop.f32.mrb[0].mxu0
        %2491 = vmatprep.mubr.bf16.mxu0 0
        %2492 = vmatmul.mubr.bf16.gmra.mrb[0].mxu0 %v1532
        %v2493 = vpop.f32.mrb[0].mxu0
        %v2494 = vadd.f32 %v549, %v2493
        %v2495 = vpop.f32.mrb[0].mxu0
        %v2496 = vpop.f32.mrb[0].mxu0
        %v2497 = vadd.f32 %v549, %v2496
        %v2498 = vpop.f32.mrb[0].mxu0
        %2499 = vmatprep.mubr.bf16.mxu0 0
        %2500 = vmatmul.mubr.bf16.gmra.mrb[0].mxu0 %v1535
        %v2501 = vpop.f32.mrb[0].mxu0
        %v2502 = vadd.f32 %v549, %v2501
        %v2503 = vpop.f32.mrb[0].mxu0
        %v2504 = vpop.f32.mrb[0].mxu0
        %v2505 = vadd.f32 %v549, %v2504
        %v2506 = vpop.f32.mrb[0].mxu0
        %2507 = vmatprep.mubr.bf16.mxu0 0
        %2508 = vmatmul.mubr.bf16.gmra.mrb[0].mxu0 %v1538
        %v2509 = vpop.f32.mrb[0].mxu0
        %v2510 = vadd.f32 %v549, %v2509
        %v2511 = vpop.f32.mrb[0].mxu0
        %v2512 = vpop.f32.mrb[0].mxu0
        %v2513 = vadd.f32 %v549, %v2512
        %v2514 = vpop.f32.mrb[0].mxu0
        %2515 = vmatprep.mubr.bf16.mxu0 0
        %2516 = vmatmul.mubr.bf16.gmra.mrb[0].mxu0 %v1541
        %v2517 = vpop.f32.mrb[0].mxu0
        %v2518 = vadd.f32 %v549, %v2517
        %v2519 = vpop.f32.mrb[0].mxu0
        %v2520 = vpop.f32.mrb[0].mxu0
        %v2521 = vadd.f32 %v549, %v2520
        %v2522 = vpop.f32.mrb[0].mxu0
        %2523 = vmatprep.mubr.bf16.mxu0 0
        %2524 = vmatmul.mubr.bf16.gmra.mrb[0].mxu0 %v1544
        %v2525 = vpop.f32.mrb[0].mxu0
        %v2526 = vadd.f32 %v549, %v2525
        %v2527 = vpop.f32.mrb[0].mxu0
        %v2528 = vpop.f32.mrb[0].mxu0
        %v2529 = vadd.f32 %v549, %v2528
        %v2530 = vpop.f32.mrb[0].mxu0
        %2531 = vmatprep.mubr.bf16.mxu0 0
        %2532 = vmatmul.mubr.bf16.gmra.mrb[0].mxu0 %v1547
        %v2533 = vpop.f32.mrb[0].mxu0
        %v2534 = vadd.f32 %v549, %v2533
        %v2535 = vpop.f32.mrb[0].mxu0
        %v2536 = vpop.f32.mrb[0].mxu0
        %v2537 = vadd.f32 %v549, %v2536
        %v2538 = vpop.f32.mrb[0].mxu0
        %2539 = vmatprep.mubr.bf16.mxu0 0
        %2540 = vmatmul.mubr.bf16.gmra.mrb[0].mxu0 %v1550
        %v2541 = vpop.f32.mrb[0].mxu0
        %v2542 = vadd.f32 %v549, %v2541
        %v2543 = vpop.f32.mrb[0].mxu0
        %v2544 = vpop.f32.mrb[0].mxu0
        %v2545 = vadd.f32 %v549, %v2544
        %v2546 = vpop.f32.mrb[0].mxu0
        %2547 = vmatprep.mubr.bf16.mxu0 0
        %2548 = vmatmul.mubr.bf16.gmra.mrb[0].mxu0 %v1553
        %v2549 = vpop.f32.mrb[0].mxu0
        %v2550 = vadd.f32 %v549, %v2549
        %v2551 = vpop.f32.mrb[0].mxu0
        %v2552 = vpop.f32.mrb[0].mxu0
        %v2553 = vadd.f32 %v549, %v2552
        %v2554 = vpop.f32.mrb[0].mxu0
        %2555 = vmatprep.mubr.bf16.mxu0 0
        %2556 = vmatmul.mubr.bf16.gmra.mrb[0].mxu0 %v1556
        %v2557 = vpop.f32.mrb[0].mxu0
        %v2558 = vadd.f32 %v549, %v2557
        %v2559 = vpop.f32.mrb[0].mxu0
        %v2560 = vpop.f32.mrb[0].mxu0
        %v2561 = vadd.f32 %v549, %v2560
        %v2562 = vpop.f32.mrb[0].mxu0
        %2563 = vmatprep.mubr.bf16.mxu0 0
        %2564 = vmatmul.mubr.bf16.gmra.mrb[0].mxu0 %v1559
        %v2565 = vpop.f32.mrb[0].mxu0
        %v2566 = vadd.f32 %v549, %v2565
        %v2567 = vpop.f32.mrb[0].mxu0
        %v2568 = vpop.f32.mrb[0].mxu0
        %v2569 = vadd.f32 %v549, %v2568
        %v2570 = vpop.f32.mrb[0].mxu0
        %2571 = vmatprep.mubr.bf16.mxu0 0
        %2572 = vmatmul.mubr.bf16.gmra.mrb[0].mxu0 %v1562
        %v2573 = vpop.f32.mrb[0].mxu0
        %v2574 = vadd.f32 %v549, %v2573
        %v2575 = vpop.f32.mrb[0].mxu0
        %v2576 = vpop.f32.mrb[0].mxu0
        %v2577 = vadd.f32 %v549, %v2576
        %v2578 = vpop.f32.mrb[0].mxu0
        %2579 = vmatprep.mubr.bf16.mxu0 0
        %2580 = vmatmul.mubr.bf16.gmra.mrb[0].mxu0 %v1565
        %v2581 = vpop.f32.mrb[0].mxu0
        %v2582 = vadd.f32 %v549, %v2581
        %v2583 = vpop.f32.mrb[0].mxu0
        %v2584 = vpop.f32.mrb[0].mxu0
        %v2585 = vadd.f32 %v549, %v2584
        %v2586 = vpop.f32.mrb[0].mxu0
        %2587 = vmatprep.mubr.bf16.mxu0 0
        %2588 = vmatmul.mubr.bf16.gmra.mrb[0].mxu0 %v1568
        %v2589 = vpop.f32.mrb[0].mxu0
        %v2590 = vadd.f32 %v549, %v2589
        %v2591 = vpop.f32.mrb[0].mxu0
        %v2592 = vpop.f32.mrb[0].mxu0
        %v2593 = vadd.f32 %v549, %v2592
        %v2594 = vpop.f32.mrb[0].mxu0
        %2595 = vmatprep.mubr.bf16.mxu0 0
        %2596 = vmatmul.mubr.bf16.gmra.mrb[0].mxu0 %v1571
        %v2597 = vpop.f32.mrb[0].mxu0
        %v2598 = vadd.f32 %v549, %v2597
        %v2599 = vpop.f32.mrb[0].mxu0
        %v2600 = vpop.f32.mrb[0].mxu0
        %v2601 = vadd.f32 %v549, %v2600
        %v2602 = vpop.f32.mrb[0].mxu0
        %2603 = vmatprep.mubr.bf16.mxu0 0
        %2604 = vmatmul.mubr.bf16.gmra.mrb[0].mxu0 %v1574
        %v2605 = vpop.f32.mrb[0].mxu0
        %v2606 = vadd.f32 %v549, %v2605
        %v2607 = vpop.f32.mrb[0].mxu0
        %v2608 = vpop.f32.mrb[0].mxu0
        %v2609 = vadd.f32 %v549, %v2608
        %v2610 = vpop.f32.mrb[0].mxu0
        %2611 = vmatprep.mubr.bf16.mxu0 0
        %2612 = vmatmul.mubr.bf16.gmra.mrb[0].mxu0 %v1577
        %v2613 = vpop.f32.mrb[0].mxu0
        %v2614 = vadd.f32 %v549, %v2613
        %v2615 = vpop.f32.mrb[0].mxu0
        %v2616 = vpop.f32.mrb[0].mxu0
        %v2617 = vadd.f32 %v549, %v2616
        %v2618 = vpop.f32.mrb[0].mxu0
        %2619 = vmatprep.mubr.bf16.mxu0 0
        %2620 = vmatmul.mubr.bf16.gmra.mrb[0].mxu0 %v1580
        %v2621 = vpop.f32.mrb[0].mxu0
        %v2622 = vadd.f32 %v549, %v2621
        %v2623 = vpop.f32.mrb[0].mxu0
        %v2624 = vpop.f32.mrb[0].mxu0
        %v2625 = vadd.f32 %v549, %v2624
        %v2626 = vpop.f32.mrb[0].mxu0
        %2627 = vmatprep.mubr.bf16.mxu0 0
        %2628 = vmatmul.mubr.bf16.gmra.mrb[0].mxu0 %v1583
        %v2629 = vpop.f32.mrb[0].mxu0
        %v2630 = vadd.f32 %v549, %v2629
        %v2631 = vpop.f32.mrb[0].mxu0
        %v2632 = vpop.f32.mrb[0].mxu0
        %v2633 = vadd.f32 %v549, %v2632
        %v2634 = vpop.f32.mrb[0].mxu0
        %2635 = vmatprep.mubr.bf16.mxu0 0
        %2636 = vmatmul.mubr.bf16.gmra.mrb[0].mxu0 %v1586
        %v2637 = vpop.f32.mrb[0].mxu0
        %v2638 = vadd.f32 %v549, %v2637
        %v2639 = vpop.f32.mrb[0].mxu0
        %v2640 = vpop.f32.mrb[0].mxu0
        %v2641 = vadd.f32 %v549, %v2640
        %v2642 = vpop.f32.mrb[0].mxu0
        %2643 = vmatprep.mubr.bf16.mxu0 0
        %2644 = vmatmul.mubr.bf16.gmra.mrb[0].mxu0 %v1589
        %v2645 = vpop.f32.mrb[0].mxu0
        %v2646 = vadd.f32 %v549, %v2645
        %v2647 = vpop.f32.mrb[0].mxu0
        %v2648 = vpop.f32.mrb[0].mxu0
        %v2649 = vadd.f32 %v549, %v2648
        %v2650 = vpop.f32.mrb[0].mxu0
        %2651 = vdwg.mxu0
        %v2652 = vmax.f32 %v1630, 0.0
        %v2653 = vmax.f32 %v1633, 0.0
        %v2654 = vmax.f32 %v1638, 0.0
        %v2655 = vmax.f32 %v1641, 0.0
        %v2656 = vmax.f32 %v1646, 0.0
        %v2657 = vmax.f32 %v1649, 0.0
        %v2658 = vmax.f32 %v1654, 0.0
        %v2659 = vmax.f32 %v1657, 0.0
        %v2660 = vmax.f32 %v1662, 0.0
        %v2661 = vmax.f32 %v1665, 0.0
        %v2662 = vmax.f32 %v1670, 0.0
        %v2663 = vmax.f32 %v1673, 0.0
        %v2664 = vmax.f32 %v1678, 0.0
        %v2665 = vmax.f32 %v1681, 0.0
        %v2666 = vmax.f32 %v1686, 0.0
        %v2667 = vmax.f32 %v1689, 0.0
        %v2668 = vmax.f32 %v1694, 0.0
        %v2669 = vmax.f32 %v1697, 0.0
        %v2670 = vmax.f32 %v1702, 0.0
        %v2671 = vmax.f32 %v1705, 0.0
        %v2672 = vmax.f32 %v1710, 0.0
        %v2673 = vmax.f32 %v1713, 0.0
        %v2674 = vmax.f32 %v1718, 0.0
        %v2675 = vmax.f32 %v1721, 0.0
        %v2676 = vmax.f32 %v1726, 0.0
        %v2677 = vmax.f32 %v1729, 0.0
        %v2678 = vmax.f32 %v1734, 0.0
        %v2679 = vmax.f32 %v1737, 0.0
        %v2680 = vmax.f32 %v1742, 0.0
        %v2681 = vmax.f32 %v1745, 0.0
        %v2682 = vmax.f32 %v1750, 0.0
        %v2683 = vmax.f32 %v1753, 0.0
        %v2684 = vmax.f32 %v1758, 0.0
        %v2685 = vmax.f32 %v1761, 0.0
        %v2686 = vmax.f32 %v1766, 0.0
        %v2687 = vmax.f32 %v1769, 0.0
        %v2688 = vmax.f32 %v1774, 0.0
        %v2689 = vmax.f32 %v1777, 0.0
        %v2690 = vmax.f32 %v1782, 0.0
        %v2691 = vmax.f32 %v1785, 0.0
        %v2692 = vmax.f32 %v1790, 0.0
        %v2693 = vmax.f32 %v1793, 0.0
        %v2694 = vmax.f32 %v1798, 0.0
        %v2695 = vmax.f32 %v1801, 0.0
        %v2696 = vmax.f32 %v1806, 0.0
        %v2697 = vmax.f32 %v1809, 0.0
        %v2698 = vmax.f32 %v1814, 0.0
        %v2699 = vmax.f32 %v1817, 0.0
        %v2700 = vmax.f32 %v1822, 0.0
        %v2701 = vmax.f32 %v1825, 0.0
        %v2702 = vmax.f32 %v1830, 0.0
        %v2703 = vmax.f32 %v1833, 0.0
        %v2704 = vmax.f32 %v1838, 0.0
        %v2705 = vmax.f32 %v1841, 0.0
        %v2706 = vmax.f32 %v1846, 0.0
        %v2707 = vmax.f32 %v1849, 0.0
        %v2708 = vmax.f32 %v1854, 0.0
        %v2709 = vmax.f32 %v1857, 0.0
        %v2710 = vmax.f32 %v1862, 0.0
        %v2711 = vmax.f32 %v1865, 0.0
        %v2712 = vmax.f32 %v1870, 0.0
        %v2713 = vmax.f32 %v1873, 0.0
        %v2714 = vmax.f32 %v1878, 0.0
        %v2715 = vmax.f32 %v1881, 0.0
        %v2716 = vmax.f32 %v1886, 0.0
        %v2717 = vmax.f32 %v1889, 0.0
        %v2718 = vmax.f32 %v1894, 0.0
        %v2719 = vmax.f32 %v1897, 0.0
        %v2720 = vmax.f32 %v1902, 0.0
        %v2721 = vmax.f32 %v1905, 0.0
        %v2722 = vmax.f32 %v1910, 0.0
        %v2723 = vmax.f32 %v1913, 0.0
        %v2724 = vmax.f32 %v1918, 0.0
        %v2725 = vmax.f32 %v1921, 0.0
        %v2726 = vmax.f32 %v1926, 0.0
        %v2727 = vmax.f32 %v1929, 0.0
        %v2728 = vmax.f32 %v1934, 0.0
        %v2729 = vmax.f32 %v1937, 0.0
        %v2730 = vmax.f32 %v1942, 0.0
        %v2731 = vmax.f32 %v1945, 0.0
        %v2732 = vmax.f32 %v1950, 0.0
        %v2733 = vmax.f32 %v1953, 0.0
        %v2734 = vmax.f32 %v1958, 0.0
        %v2735 = vmax.f32 %v1961, 0.0
        %v2736 = vmax.f32 %v1966, 0.0
        %v2737 = vmax.f32 %v1969, 0.0
        %v2738 = vmax.f32 %v1974, 0.0
        %v2739 = vmax.f32 %v1977, 0.0
        %v2740 = vmax.f32 %v1982, 0.0
        %v2741 = vmax.f32 %v1985, 0.0
        %v2742 = vmax.f32 %v1990, 0.0
        %v2743 = vmax.f32 %v1993, 0.0
        %v2744 = vmax.f32 %v1998, 0.0
        %v2745 = vmax.f32 %v2001, 0.0
        %v2746 = vmax.f32 %v2006, 0.0
        %v2747 = vmax.f32 %v2009, 0.0
        %v2748 = vmax.f32 %v2014, 0.0
        %v2749 = vmax.f32 %v2017, 0.0
        %v2750 = vmax.f32 %v2022, 0.0
        %v2751 = vmax.f32 %v2025, 0.0
        %v2752 = vmax.f32 %v2030, 0.0
        %v2753 = vmax.f32 %v2033, 0.0
        %v2754 = vmax.f32 %v2038, 0.0
        %v2755 = vmax.f32 %v2041, 0.0
        %v2756 = vmax.f32 %v2046, 0.0
        %v2757 = vmax.f32 %v2049, 0.0
        %v2758 = vmax.f32 %v2054, 0.0
        %v2759 = vmax.f32 %v2057, 0.0
        %v2760 = vmax.f32 %v2062, 0.0
        %v2761 = vmax.f32 %v2065, 0.0
        %v2762 = vmax.f32 %v2070, 0.0
        %v2763 = vmax.f32 %v2073, 0.0
        %v2764 = vmax.f32 %v2078, 0.0
        %v2765 = vmax.f32 %v2081, 0.0
        %v2766 = vmax.f32 %v2086, 0.0
        %v2767 = vmax.f32 %v2089, 0.0
        %v2768 = vmax.f32 %v2094, 0.0
        %v2769 = vmax.f32 %v2097, 0.0
        %v2770 = vmax.f32 %v2102, 0.0
        %v2771 = vmax.f32 %v2105, 0.0
        %v2772 = vmax.f32 %v2110, 0.0
        %v2773 = vmax.f32 %v2113, 0.0
        %v2774 = vmax.f32 %v2118, 0.0
        %v2775 = vmax.f32 %v2121, 0.0
        %v2776 = vmax.f32 %v2126, 0.0
        %v2777 = vmax.f32 %v2129, 0.0
        %v2778 = vmax.f32 %v2134, 0.0
        %v2779 = vmax.f32 %v2137, 0.0
        %v2780 = vmax.f32 %v2142, 0.0
        %v2781 = vmax.f32 %v2145, 0.0
        %v2782 = vmax.f32 %v2150, 0.0
        %v2783 = vmax.f32 %v2153, 0.0
        %v2784 = vmax.f32 %v2158, 0.0
        %v2785 = vmax.f32 %v2161, 0.0
        %v2786 = vmax.f32 %v2166, 0.0
        %v2787 = vmax.f32 %v2169, 0.0
        %v2788 = vmax.f32 %v2174, 0.0
        %v2789 = vmax.f32 %v2177, 0.0
        %v2790 = vmax.f32 %v2182, 0.0
        %v2791 = vmax.f32 %v2185, 0.0
        %v2792 = vmax.f32 %v2190, 0.0
        %v2793 = vmax.f32 %v2193, 0.0
        %v2794 = vmax.f32 %v2198, 0.0
        %v2795 = vmax.f32 %v2201, 0.0
        %v2796 = vmax.f32 %v2206, 0.0
        %v2797 = vmax.f32 %v2209, 0.0
        %v2798 = vmax.f32 %v2214, 0.0
        %v2799 = vmax.f32 %v2217, 0.0
        %v2800 = vmax.f32 %v2222, 0.0
        %v2801 = vmax.f32 %v2225, 0.0
        %v2802 = vmax.f32 %v2230, 0.0
        %v2803 = vmax.f32 %v2233, 0.0
        %v2804 = vmax.f32 %v2238, 0.0
        %v2805 = vmax.f32 %v2241, 0.0
        %v2806 = vmax.f32 %v2246, 0.0
        %v2807 = vmax.f32 %v2249, 0.0
        %v2808 = vmax.f32 %v2254, 0.0
        %v2809 = vmax.f32 %v2257, 0.0
        %v2810 = vmax.f32 %v2262, 0.0
        %v2811 = vmax.f32 %v2265, 0.0
        %v2812 = vmax.f32 %v2270, 0.0
        %v2813 = vmax.f32 %v2273, 0.0
        %v2814 = vmax.f32 %v2278, 0.0
        %v2815 = vmax.f32 %v2281, 0.0
        %v2816 = vmax.f32 %v2286, 0.0
        %v2817 = vmax.f32 %v2289, 0.0
        %v2818 = vmax.f32 %v2294, 0.0
        %v2819 = vmax.f32 %v2297, 0.0
        %v2820 = vmax.f32 %v2302, 0.0
        %v2821 = vmax.f32 %v2305, 0.0
        %v2822 = vmax.f32 %v2310, 0.0
        %v2823 = vmax.f32 %v2313, 0.0
        %v2824 = vmax.f32 %v2318, 0.0
        %v2825 = vmax.f32 %v2321, 0.0
        %v2826 = vmax.f32 %v2326, 0.0
        %v2827 = vmax.f32 %v2329, 0.0
        %v2828 = vmax.f32 %v2334, 0.0
        %v2829 = vmax.f32 %v2337, 0.0
        %v2830 = vmax.f32 %v2342, 0.0
        %v2831 = vmax.f32 %v2345, 0.0
        %v2832 = vmax.f32 %v2350, 0.0
        %v2833 = vmax.f32 %v2353, 0.0
        %v2834 = vmax.f32 %v2358, 0.0
        %v2835 = vmax.f32 %v2361, 0.0
        %v2836 = vmax.f32 %v2366, 0.0
        %v2837 = vmax.f32 %v2369, 0.0
        %v2838 = vmax.f32 %v2374, 0.0
        %v2839 = vmax.f32 %v2377, 0.0
        %v2840 = vmax.f32 %v2382, 0.0
        %v2841 = vmax.f32 %v2385, 0.0
        %v2842 = vmax.f32 %v2390, 0.0
        %v2843 = vmax.f32 %v2393, 0.0
        %v2844 = vmax.f32 %v2398, 0.0
        %v2845 = vmax.f32 %v2401, 0.0
        %v2846 = vmax.f32 %v2406, 0.0
        %v2847 = vmax.f32 %v2409, 0.0
        %v2848 = vmax.f32 %v2414, 0.0
        %v2849 = vmax.f32 %v2417, 0.0
        %v2850 = vmax.f32 %v2422, 0.0
        %v2851 = vmax.f32 %v2425, 0.0
        %v2852 = vmax.f32 %v2430, 0.0
        %v2853 = vmax.f32 %v2433, 0.0
        %v2854 = vmax.f32 %v2438, 0.0
        %v2855 = vmax.f32 %v2441, 0.0
        %v2856 = vmax.f32 %v2446, 0.0
        %v2857 = vmax.f32 %v2449, 0.0
        %v2858 = vmax.f32 %v2454, 0.0
        %v2859 = vmax.f32 %v2457, 0.0
        %v2860 = vmax.f32 %v2462, 0.0
        %v2861 = vmax.f32 %v2465, 0.0
        %v2862 = vmax.f32 %v2470, 0.0
        %v2863 = vmax.f32 %v2473, 0.0
        %v2864 = vmax.f32 %v2478, 0.0
        %v2865 = vmax.f32 %v2481, 0.0
        %v2866 = vmax.f32 %v2486, 0.0
        %v2867 = vmax.f32 %v2489, 0.0
        %v2868 = vmax.f32 %v2494, 0.0
        %v2869 = vmax.f32 %v2497, 0.0
        %v2870 = vmax.f32 %v2502, 0.0
        %v2871 = vmax.f32 %v2505, 0.0
        %v2872 = vmax.f32 %v2510, 0.0
        %v2873 = vmax.f32 %v2513, 0.0
        %v2874 = vmax.f32 %v2518, 0.0
        %v2875 = vmax.f32 %v2521, 0.0
        %v2876 = vmax.f32 %v2526, 0.0
        %v2877 = vmax.f32 %v2529, 0.0
        %v2878 = vmax.f32 %v2534, 0.0
        %v2879 = vmax.f32 %v2537, 0.0
        %v2880 = vmax.f32 %v2542, 0.0
        %v2881 = vmax.f32 %v2545, 0.0
        %v2882 = vmax.f32 %v2550, 0.0
        %v2883 = vmax.f32 %v2553, 0.0
        %v2884 = vmax.f32 %v2558, 0.0
        %v2885 = vmax.f32 %v2561, 0.0
        %v2886 = vmax.f32 %v2566, 0.0
        %v2887 = vmax.f32 %v2569, 0.0
        %v2888 = vmax.f32 %v2574, 0.0
        %v2889 = vmax.f32 %v2577, 0.0
        %v2890 = vmax.f32 %v2582, 0.0
        %v2891 = vmax.f32 %v2585, 0.0
        %v2892 = vmax.f32 %v2590, 0.0
        %v2893 = vmax.f32 %v2593, 0.0
        %v2894 = vmax.f32 %v2598, 0.0
        %v2895 = vmax.f32 %v2601, 0.0
        %v2896 = vmax.f32 %v2606, 0.0
        %v2897 = vmax.f32 %v2609, 0.0
        %v2898 = vmax.f32 %v2614, 0.0
        %v2899 = vmax.f32 %v2617, 0.0
        %v2900 = vmax.f32 %v2622, 0.0
        %v2901 = vmax.f32 %v2625, 0.0
        %v2902 = vmax.f32 %v2630, 0.0
        %v2903 = vmax.f32 %v2633, 0.0
        %v2904 = vmax.f32 %v2638, 0.0
        %v2905 = vmax.f32 %v2641, 0.0
        %v2906 = vmax.f32 %v2646, 0.0
        %v2907 = vmax.f32 %v2649, 0.0
        %v2908 = vadd.f32 %v2652, %v2653
        %v2909 = vadd.f32 %v2908, %v2654
        %v2910 = vadd.f32 %v2909, %v2655
        %v2911 = vadd.f32 %v2910, %v2656
        %v2912 = vadd.f32 %v2911, %v2657
        %v2913 = vadd.f32 %v2912, %v2658
        %v2914 = vadd.f32 %v2913, %v2659
        %v2915 = vadd.f32 %v2914, %v2660
        %v2916 = vadd.f32 %v2915, %v2661
        %v2917 = vadd.f32 %v2916, %v2662
        %v2918 = vadd.f32 %v2917, %v2663
        %v2919 = vadd.f32 %v2918, %v2664
        %v2920 = vadd.f32 %v2919, %v2665
        %v2921 = vadd.f32 %v2920, %v2666
        %v2922 = vadd.f32 %v2921, %v2667
        %v2923 = vadd.f32 %v2922, %v2668
        %v2924 = vadd.f32 %v2923, %v2669
        %v2925 = vadd.f32 %v2924, %v2670
        %v2926 = vadd.f32 %v2925, %v2671
        %v2927 = vadd.f32 %v2926, %v2672
        %v2928 = vadd.f32 %v2927, %v2673
        %v2929 = vadd.f32 %v2928, %v2674
        %v2930 = vadd.f32 %v2929, %v2675
        %v2931 = vadd.f32 %v2930, %v2676
        %v2932 = vadd.f32 %v2931, %v2677
        %v2933 = vadd.f32 %v2932, %v2678
        %v2934 = vadd.f32 %v2933, %v2679
        %v2935 = vadd.f32 %v2934, %v2680
        %v2936 = vadd.f32 %v2935, %v2681
        %v2937 = vadd.f32 %v2936, %v2682
        %v2938 = vadd.f32 %v2937, %v2683
        %v2939 = vrot.slane %v2938, 4
        %v2940 = vadd.f32 %v2938, %v2939
        %v2941 = vrot.slane %v2940, 2
        %v2942 = vadd.f32 %v2940, %v2941
        %v2943 = vrot.slane %v2942, 1
        %v2944 = vadd.f32 %v2942, %v2943
        %v2945 = vadd.f32 %v2684, %v2685
        %v2946 = vadd.f32 %v2945, %v2686
        %v2947 = vadd.f32 %v2946, %v2687
        %v2948 = vadd.f32 %v2947, %v2688
        %v2949 = vadd.f32 %v2948, %v2689
        %v2950 = vadd.f32 %v2949, %v2690
        %v2951 = vadd.f32 %v2950, %v2691
        %v2952 = vadd.f32 %v2951, %v2692
        %v2953 = vadd.f32 %v2952, %v2693
        %v2954 = vadd.f32 %v2953, %v2694
        %v2955 = vadd.f32 %v2954, %v2695
        %v2956 = vadd.f32 %v2955, %v2696
        %v2957 = vadd.f32 %v2956, %v2697
        %v2958 = vadd.f32 %v2957, %v2698
        %v2959 = vadd.f32 %v2958, %v2699
        %v2960 = vadd.f32 %v2959, %v2700
        %v2961 = vadd.f32 %v2960, %v2701
        %v2962 = vadd.f32 %v2961, %v2702
        %v2963 = vadd.f32 %v2962, %v2703
        %v2964 = vadd.f32 %v2963, %v2704
        %v2965 = vadd.f32 %v2964, %v2705
        %v2966 = vadd.f32 %v2965, %v2706
        %v2967 = vadd.f32 %v2966, %v2707
        %v2968 = vadd.f32 %v2967, %v2708
        %v2969 = vadd.f32 %v2968, %v2709
        %v2970 = vadd.f32 %v2969, %v2710
        %v2971 = vadd.f32 %v2970, %v2711
        %v2972 = vadd.f32 %v2971, %v2712
        %v2973 = vadd.f32 %v2972, %v2713
        %v2974 = vadd.f32 %v2973, %v2714
        %v2975 = vadd.f32 %v2974, %v2715
        %v2976 = vrot.slane %v2975, 4
        %v2977 = vadd.f32 %v2975, %v2976
        %v2978 = vrot.slane %v2977, 2
        %v2979 = vadd.f32 %v2977, %v2978
        %v2980 = vrot.slane %v2979, 1
        %v2981 = vadd.f32 %v2979, %v2980
        %v2982 = vadd.f32 %v2716, %v2717
        %v2983 = vadd.f32 %v2982, %v2718
        %v2984 = vadd.f32 %v2983, %v2719
        %v2985 = vadd.f32 %v2984, %v2720
        %v2986 = vadd.f32 %v2985, %v2721
        %v2987 = vadd.f32 %v2986, %v2722
        %v2988 = vadd.f32 %v2987, %v2723
        %v2989 = vadd.f32 %v2988, %v2724
        %v2990 = vadd.f32 %v2989, %v2725
        %v2991 = vadd.f32 %v2990, %v2726
        %v2992 = vadd.f32 %v2991, %v2727
        %v2993 = vadd.f32 %v2992, %v2728
        %v2994 = vadd.f32 %v2993, %v2729
        %v2995 = vadd.f32 %v2994, %v2730
        %v2996 = vadd.f32 %v2995, %v2731
        %v2997 = vadd.f32 %v2996, %v2732
        %v2998 = vadd.f32 %v2997, %v2733
        %v2999 = vadd.f32 %v2998, %v2734
        %v3000 = vadd.f32 %v2999, %v2735
        %v3001 = vadd.f32 %v3000, %v2736
        %v3002 = vadd.f32 %v3001, %v2737
        %v3003 = vadd.f32 %v3002, %v2738
        %v3004 = vadd.f32 %v3003, %v2739
        %v3005 = vadd.f32 %v3004, %v2740
        %v3006 = vadd.f32 %v3005, %v2741
        %v3007 = vadd.f32 %v3006, %v2742
        %v3008 = vadd.f32 %v3007, %v2743
        %v3009 = vadd.f32 %v3008, %v2744
        %v3010 = vadd.f32 %v3009, %v2745
        %v3011 = vadd.f32 %v3010, %v2746
        %v3012 = vadd.f32 %v3011, %v2747
        %v3013 = vrot.slane %v3012, 4
        %v3014 = vadd.f32 %v3012, %v3013
        %v3015 = vrot.slane %v3014, 2
        %v3016 = vadd.f32 %v3014, %v3015
        %v3017 = vrot.slane %v3016, 1
        %v3018 = vadd.f32 %v3016, %v3017
        %v3019 = vadd.f32 %v2748, %v2749
        %v3020 = vadd.f32 %v3019, %v2750
        %v3021 = vadd.f32 %v3020, %v2751
        %v3022 = vadd.f32 %v3021, %v2752
        %v3023 = vadd.f32 %v3022, %v2753
        %v3024 = vadd.f32 %v3023, %v2754
        %v3025 = vadd.f32 %v3024, %v2755
        %v3026 = vadd.f32 %v3025, %v2756
        %v3027 = vadd.f32 %v3026, %v2757
        %v3028 = vadd.f32 %v3027, %v2758
        %v3029 = vadd.f32 %v3028, %v2759
        %v3030 = vadd.f32 %v3029, %v2760
        %v3031 = vadd.f32 %v3030, %v2761
        %v3032 = vadd.f32 %v3031, %v2762
        %v3033 = vadd.f32 %v3032, %v2763
        %v3034 = vadd.f32 %v3033, %v2764
        %v3035 = vadd.f32 %v3034, %v2765
        %v3036 = vadd.f32 %v3035, %v2766
        %v3037 = vadd.f32 %v3036, %v2767
        %v3038 = vadd.f32 %v3037, %v2768
        %v3039 = vadd.f32 %v3038, %v2769
        %v3040 = vadd.f32 %v3039, %v2770
        %v3041 = vadd.f32 %v3040, %v2771
        %v3042 = vadd.f32 %v3041, %v2772
        %v3043 = vadd.f32 %v3042, %v2773
        %v3044 = vadd.f32 %v3043, %v2774
        %v3045 = vadd.f32 %v3044, %v2775
        %v3046 = vadd.f32 %v3045, %v2776
        %v3047 = vadd.f32 %v3046, %v2777
        %v3048 = vadd.f32 %v3047, %v2778
        %v3049 = vadd.f32 %v3048, %v2779
        %v3050 = vrot.slane %v3049, 4
        %v3051 = vadd.f32 %v3049, %v3050
        %v3052 = vrot.slane %v3051, 2
        %v3053 = vadd.f32 %v3051, %v3052
        %v3054 = vrot.slane %v3053, 1
        %v3055 = vadd.f32 %v3053, %v3054
        %v3056 = vadd.f32 %v2780, %v2781
        %v3057 = vadd.f32 %v3056, %v2782
        %v3058 = vadd.f32 %v3057, %v2783
        %v3059 = vadd.f32 %v3058, %v2784
        %v3060 = vadd.f32 %v3059, %v2785
        %v3061 = vadd.f32 %v3060, %v2786
        %v3062 = vadd.f32 %v3061, %v2787
        %v3063 = vadd.f32 %v3062, %v2788
        %v3064 = vadd.f32 %v3063, %v2789
        %v3065 = vadd.f32 %v3064, %v2790
        %v3066 = vadd.f32 %v3065, %v2791
        %v3067 = vadd.f32 %v3066, %v2792
        %v3068 = vadd.f32 %v3067, %v2793
        %v3069 = vadd.f32 %v3068, %v2794
        %v3070 = vadd.f32 %v3069, %v2795
        %v3071 = vadd.f32 %v3070, %v2796
        %v3072 = vadd.f32 %v3071, %v2797
        %v3073 = vadd.f32 %v3072, %v2798
        %v3074 = vadd.f32 %v3073, %v2799
        %v3075 = vadd.f32 %v3074, %v2800
        %v3076 = vadd.f32 %v3075, %v2801
        %v3077 = vadd.f32 %v3076, %v2802
        %v3078 = vadd.f32 %v3077, %v2803
        %v3079 = vadd.f32 %v3078, %v2804
        %v3080 = vadd.f32 %v3079, %v2805
        %v3081 = vadd.f32 %v3080, %v2806
        %v3082 = vadd.f32 %v3081, %v2807
        %v3083 = vadd.f32 %v3082, %v2808
        %v3084 = vadd.f32 %v3083, %v2809
        %v3085 = vadd.f32 %v3084, %v2810
        %v3086 = vadd.f32 %v3085, %v2811
        %v3087 = vrot.slane %v3086, 4
        %v3088 = vadd.f32 %v3086, %v3087
        %v3089 = vrot.slane %v3088, 2
        %v3090 = vadd.f32 %v3088, %v3089
        %v3091 = vrot.slane %v3090, 1
        %v3092 = vadd.f32 %v3090, %v3091
        %v3093 = vadd.f32 %v2812, %v2813
        %v3094 = vadd.f32 %v3093, %v2814
        %v3095 = vadd.f32 %v3094, %v2815
        %v3096 = vadd.f32 %v3095, %v2816
        %v3097 = vadd.f32 %v3096, %v2817
        %v3098 = vadd.f32 %v3097, %v2818
        %v3099 = vadd.f32 %v3098, %v2819
        %v3100 = vadd.f32 %v3099, %v2820
        %v3101 = vadd.f32 %v3100, %v2821
        %v3102 = vadd.f32 %v3101, %v2822
        %v3103 = vadd.f32 %v3102, %v2823
        %v3104 = vadd.f32 %v3103, %v2824
        %v3105 = vadd.f32 %v3104, %v2825
        %v3106 = vadd.f32 %v3105, %v2826
        %v3107 = vadd.f32 %v3106, %v2827
        %v3108 = vadd.f32 %v3107, %v2828
        %v3109 = vadd.f32 %v3108, %v2829
        %v3110 = vadd.f32 %v3109, %v2830
        %v3111 = vadd.f32 %v3110, %v2831
        %v3112 = vadd.f32 %v3111, %v2832
        %v3113 = vadd.f32 %v3112, %v2833
        %v3114 = vadd.f32 %v3113, %v2834
        %v3115 = vadd.f32 %v3114, %v2835
        %v3116 = vadd.f32 %v3115, %v2836
        %v3117 = vadd.f32 %v3116, %v2837
        %v3118 = vadd.f32 %v3117, %v2838
        %v3119 = vadd.f32 %v3118, %v2839
        %v3120 = vadd.f32 %v3119, %v2840
        %v3121 = vadd.f32 %v3120, %v2841
        %v3122 = vadd.f32 %v3121, %v2842
        %v3123 = vadd.f32 %v3122, %v2843
        %v3124 = vrot.slane %v3123, 4
        %v3125 = vadd.f32 %v3123, %v3124
        %v3126 = vrot.slane %v3125, 2
        %v3127 = vadd.f32 %v3125, %v3126
        %v3128 = vrot.slane %v3127, 1
        %v3129 = vadd.f32 %v3127, %v3128
        %v3130 = vadd.f32 %v2844, %v2845
        %v3131 = vadd.f32 %v3130, %v2846
        %v3132 = vadd.f32 %v3131, %v2847
        %v3133 = vadd.f32 %v3132, %v2848
        %v3134 = vadd.f32 %v3133, %v2849
        %v3135 = vadd.f32 %v3134, %v2850
        %v3136 = vadd.f32 %v3135, %v2851
        %v3137 = vadd.f32 %v3136, %v2852
        %v3138 = vadd.f32 %v3137, %v2853
        %v3139 = vadd.f32 %v3138, %v2854
        %v3140 = vadd.f32 %v3139, %v2855
        %v3141 = vadd.f32 %v3140, %v2856
        %v3142 = vadd.f32 %v3141, %v2857
        %v3143 = vadd.f32 %v3142, %v2858
        %v3144 = vadd.f32 %v3143, %v2859
        %v3145 = vadd.f32 %v3144, %v2860
        %v3146 = vadd.f32 %v3145, %v2861
        %v3147 = vadd.f32 %v3146, %v2862
        %v3148 = vadd.f32 %v3147, %v2863
        %v3149 = vadd.f32 %v3148, %v2864
        %v3150 = vadd.f32 %v3149, %v2865
        %v3151 = vadd.f32 %v3150, %v2866
        %v3152 = vadd.f32 %v3151, %v2867
        %v3153 = vadd.f32 %v3152, %v2868
        %v3154 = vadd.f32 %v3153, %v2869
        %v3155 = vadd.f32 %v3154, %v2870
        %v3156 = vadd.f32 %v3155, %v2871
        %v3157 = vadd.f32 %v3156, %v2872
        %v3158 = vadd.f32 %v3157, %v2873
        %v3159 = vadd.f32 %v3158, %v2874
        %v3160 = vadd.f32 %v3159, %v2875
        %v3161 = vrot.slane %v3160, 4
        %v3162 = vadd.f32 %v3160, %v3161
        %v3163 = vrot.slane %v3162, 2
        %v3164 = vadd.f32 %v3162, %v3163
        %v3165 = vrot.slane %v3164, 1
        %v3166 = vadd.f32 %v3164, %v3165
        %v3167 = vadd.f32 %v2876, %v2877
        %v3168 = vadd.f32 %v3167, %v2878
        %v3169 = vadd.f32 %v3168, %v2879
        %v3170 = vadd.f32 %v3169, %v2880
        %v3171 = vadd.f32 %v3170, %v2881
        %v3172 = vadd.f32 %v3171, %v2882
        %v3173 = vadd.f32 %v3172, %v2883
        %v3174 = vadd.f32 %v3173, %v2884
        %v3175 = vadd.f32 %v3174, %v2885
        %v3176 = vadd.f32 %v3175, %v2886
        %v3177 = vadd.f32 %v3176, %v2887
        %v3178 = vadd.f32 %v3177, %v2888
        %v3179 = vadd.f32 %v3178, %v2889
        %v3180 = vadd.f32 %v3179, %v2890
        %v3181 = vadd.f32 %v3180, %v2891
        %v3182 = vadd.f32 %v3181, %v2892
        %v3183 = vadd.f32 %v3182, %v2893
        %v3184 = vadd.f32 %v3183, %v2894
        %v3185 = vadd.f32 %v3184, %v2895
        %v3186 = vadd.f32 %v3185, %v2896
        %v3187 = vadd.f32 %v3186, %v2897
        %v3188 = vadd.f32 %v3187, %v2898
        %v3189 = vadd.f32 %v3188, %v2899
        %v3190 = vadd.f32 %v3189, %v2900
        %v3191 = vadd.f32 %v3190, %v2901
        %v3192 = vadd.f32 %v3191, %v2902
        %v3193 = vadd.f32 %v3192, %v2903
        %v3194 = vadd.f32 %v3193, %v2904
        %v3195 = vadd.f32 %v3194, %v2905
        %v3196 = vadd.f32 %v3195, %v2906
        %v3197 = vadd.f32 %v3196, %v2907
        %v3198 = vrot.slane %v3197, 4
        %v3199 = vadd.f32 %v3197, %v3198
        %v3200 = vrot.slane %v3199, 2
        %v3201 = vadd.f32 %v3199, %v3200
        %v3202 = vrot.slane %v3201, 1
        %v3203 = vadd.f32 %v3201, %v3202
        %v3204 = vmul.f32 %v2944, 0.00390625
        %v3205 = vmul.f32 %v2981, 0.00390625
        %v3206 = vmul.f32 %v3018, 0.00390625
        %v3207 = vmul.f32 %v3055, 0.00390625
        %v3208 = vmul.f32 %v3092, 0.00390625
        %v3209 = vmul.f32 %v3129, 0.00390625
        %v3210 = vmul.f32 %v3166, 0.00390625
        %v3211 = vmul.f32 %v3203, 0.00390625
        %v3212 = vpack.c.bf16 %v3204, %v3204
        %v3213 = vpack.c.bf16 %v3205, %v3205
        %v3214 = vpack.c.bf16 %v3206, %v3206
        %v3215 = vpack.c.bf16 %v3207, %v3207
        %v3216 = vpack.c.bf16 %v3208, %v3208
        %v3217 = vpack.c.bf16 %v3209, %v3209
        %v3218 = vpack.c.bf16 %v3210, %v3210
        %v3219 = vpack.c.bf16 %v3211, %v3211
        %v3220 = vld [vmem:[%s3] sm:$0xf]
        %v3221 = vld [vmem:[%s3 + $0x4] sm:$0xf]
        %v3222 = vld [vmem:[%s3 + $0x8] sm:$0xf]
        %v3223 = vld [vmem:[%s3 + $0xc] sm:$0xf]
        %v3224 = vld [vmem:[%s3 + $0x10] sm:$0xf]
        %v3225 = vld [vmem:[%s3 + $0x14] sm:$0xf]
        %v3226 = vld [vmem:[%s3 + $0x18] sm:$0xf]
        %v3227 = vld [vmem:[%s3 + $0x1c] sm:$0xf]
        %v3228 = vld [vmem:[%s3 + $0x20] sm:$0xf]
        %v3229 = vld [vmem:[%s3 + $0x24] sm:$0xf]
        %v3230 = vld [vmem:[%s3 + $0x28] sm:$0xf]
        %v3231 = vld [vmem:[%s3 + $0x2c] sm:$0xf]
        %v3232 = vld [vmem:[%s3 + $0x30] sm:$0xf]
        %v3233 = vld [vmem:[%s3 + $0x34] sm:$0xf]
        %v3234 = vld [vmem:[%s3 + $0x38] sm:$0xf]
        %v3235 = vld [vmem:[%s3 + $0x3c] sm:$0xf]
        %v3236 = vld [vmem:[%s4] sm:$0x1]
        %v3238 = vlaneseq
        %v3239 = vshrl.u32 %v3238, 7
        %v3240 = vsub.s32 0, %v3239
        %v3241 = vrot.slane %v3236, %v3240
        %v3251 = vunpack.c.l.b16 %v3212
        %v3252 = vunpack.c.l.b16 %v3213
        %v3253 = vunpack.c.l.b16 %v3214
        %v3254 = vunpack.c.l.b16 %v3215
        %v3255 = vunpack.c.l.b16 %v3216
        %v3256 = vunpack.c.l.b16 %v3217
        %v3257 = vunpack.c.l.b16 %v3218
        %v3258 = vunpack.c.l.b16 %v3219
        %vm3259 = vcmask 1041409
        %v3260 = vsel %vm3259, %v3252, %v3251
        %vm3261 = vcmask 1042434
        %v3262 = vsel %vm3261, %v3253, %v3260
        %vm3263 = vcmask 1043459
        %v3264 = vsel %vm3263, %v3254, %v3262
        %vm3265 = vcmask 1044484
        %v3266 = vsel %vm3265, %v3255, %v3264
        %vm3267 = vcmask 1045509
        %v3268 = vsel %vm3267, %v3256, %v3266
        %vm3269 = vcmask 1046534
        %v3270 = vsel %vm3269, %v3257, %v3268
        %vm3271 = vcmask 1047559
        %v3272 = vsel %vm3271, %v3258, %v3270
        %v3273 = vpack.c.b16 %v3272, %v3272
        %v3291 = vunpack.c.l.b16 %v3220
        %v3292 = vunpack.c.l.b16 %v3221
        %v3293 = vunpack.c.l.b16 %v3222
        %v3294 = vunpack.c.l.b16 %v3223
        %v3295 = vunpack.c.l.b16 %v3224
        %v3296 = vunpack.c.l.b16 %v3225
        %v3297 = vunpack.c.l.b16 %v3226
        %v3298 = vunpack.c.l.b16 %v3227
        %v3299 = vunpack.c.l.b16 %v3228
        %v3300 = vunpack.c.l.b16 %v3229
        %v3301 = vunpack.c.l.b16 %v3230
        %v3302 = vunpack.c.l.b16 %v3231
        %v3303 = vunpack.c.l.b16 %v3232
        %v3304 = vunpack.c.l.b16 %v3233
        %v3305 = vunpack.c.l.b16 %v3234
        %v3306 = vunpack.c.l.b16 %v3235
        %v3307 = vpack.c.b16 %v3292, %v3291
        %v3308 = vpack.c.b16 %v3294, %v3293
        %v3309 = vpack.c.b16 %v3296, %v3295
        %v3310 = vpack.c.b16 %v3298, %v3297
        %v3311 = vpack.c.b16 %v3300, %v3299
        %v3312 = vpack.c.b16 %v3302, %v3301
        %v3313 = vpack.c.b16 %v3304, %v3303
        %v3314 = vpack.c.b16 %v3306, %v3305
        %3323 = vmatprep.subr.bf16.mxu0 0
        %3324 = vmatpush1.bf16.msra.mxu0 %v3307
        %3325 = vmatprep.subr.bf16.mxu0 0
        %3326 = vmatpush1.bf16.msra.mxu0 %v3308
        %3327 = vmatprep.subr.bf16.mxu0 0
        %3328 = vmatpush1.bf16.msra.mxu0 %v3309
        %3329 = vmatprep.subr.bf16.mxu0 0
        %3330 = vmatpush1.bf16.msra.mxu0 %v3310
        %3331 = vmatprep.subr.bf16.mxu0 0
        %3332 = vmatpush1.bf16.msra.mxu0 %v3311
        %3333 = vmatprep.subr.bf16.mxu0 0
        %3334 = vmatpush1.bf16.msra.mxu0 %v3312
        %3335 = vmatprep.subr.bf16.mxu0 0
        %3336 = vmatpush1.bf16.msra.mxu0 %v3313
        %3337 = vmatprep.subr.bf16.mxu0 0
        %3338 = vmatpush1.bf16.msra.mxu0 %v3314
        %3339 = vmatprep.subr.bf16.mxu0 0
        %3340 = vmatpush1.bf16.msra.mxu0 0
        %3341 = vmatprep.subr.bf16.mxu0 0
        %3342 = vmatpush1.bf16.msra.mxu0 0
        %3343 = vmatprep.subr.bf16.mxu0 0
        %3344 = vmatpush1.bf16.msra.mxu0 0
        %3345 = vmatprep.subr.bf16.mxu0 0
        %3346 = vmatpush1.bf16.msra.mxu0 0
        %3347 = vmatprep.subr.bf16.mxu0 0
        %3348 = vmatpush1.bf16.msra.mxu0 0
        %3349 = vmatprep.subr.bf16.mxu0 0
        %3350 = vmatpush1.bf16.msra.mxu0 0
        %3351 = vmatprep.subr.bf16.mxu0 0
        %3352 = vmatpush1.bf16.msra.mxu0 0
        %3353 = vmatprep.subr.bf16.mxu0 0
        %3354 = vmatpush1.bf16.msra.mxu0 0
        %3355 = vmatprep.mubr.bf16.mxu0 0
        %3356 = vmatmul.mubr.bf16.gmra.mrb[0].mxu0 %v3273
        %v3357 = vpop.f32.mrb[0].mxu0
        %v3358 = vadd.f32 %v3241, %v3357
        %v3359 = vpop.f32.mrb[0].mxu0
        %v3360 = vpop.f32.mrb[0].mxu0
        %v3361 = vpop.f32.mrb[0].mxu0
        %3362 = vdwg.mxu0
        %v3363 = vmax.f32 %v3358, 0.0
        %v3364 = vpack.c.bf16 %v3363, %v3363
        %v3365 = vld [vmem:[%s5] sm:$0xf]
        %v3366 = vld [vmem:[%s5 + $0x4] sm:$0xf]
        %v3367 = vld [vmem:[%s5 + $0x8] sm:$0xf]
        %v3368 = vld [vmem:[%s5 + $0xc] sm:$0xf]
        %v3369 = vld [vmem:[%s5 + $0x10] sm:$0xf]
        %v3370 = vld [vmem:[%s5 + $0x14] sm:$0xf]
        %v3371 = vld [vmem:[%s5 + $0x18] sm:$0xf]
        %v3372 = vld [vmem:[%s5 + $0x1c] sm:$0xf]
        %v3373 = vld [vmem:[%s5 + $0x20] sm:$0xf]
        %v3374 = vld [vmem:[%s5 + $0x24] sm:$0xf]
        %v3375 = vld [vmem:[%s5 + $0x28] sm:$0xf]
        %v3376 = vld [vmem:[%s5 + $0x2c] sm:$0xf]
        %v3377 = vld [vmem:[%s5 + $0x30] sm:$0xf]
        %v3378 = vld [vmem:[%s5 + $0x34] sm:$0xf]
        %v3379 = vld [vmem:[%s5 + $0x38] sm:$0xf]
        %v3380 = vld [vmem:[%s5 + $0x3c] sm:$0xf]
        %v3381 = vld [vmem:[%s6] sm:$0x1]
        %v3383 = vlaneseq
        %v3384 = vshrl.u32 %v3383, 7
        %v3385 = vsub.s32 0, %v3384
        %v3386 = vrot.slane %v3381, %v3385
        %v3404 = vunpack.c.l.b16 %v3365
        %v3405 = vunpack.c.l.b16 %v3366
        %v3406 = vunpack.c.l.b16 %v3367
        %v3407 = vunpack.c.l.b16 %v3368
        %v3408 = vunpack.c.l.b16 %v3369
        %v3409 = vunpack.c.l.b16 %v3370
        %v3410 = vunpack.c.l.b16 %v3371
        %v3411 = vunpack.c.l.b16 %v3372
        %v3412 = vunpack.c.l.b16 %v3373
        %v3413 = vunpack.c.l.b16 %v3374
        %v3414 = vunpack.c.l.b16 %v3375
        %v3415 = vunpack.c.l.b16 %v3376
        %v3416 = vunpack.c.l.b16 %v3377
        %v3417 = vunpack.c.l.b16 %v3378
        %v3418 = vunpack.c.l.b16 %v3379
        %v3419 = vunpack.c.l.b16 %v3380
        %v3420 = vpack.c.b16 %v3405, %v3404
        %v3421 = vpack.c.b16 %v3407, %v3406
        %v3422 = vpack.c.b16 %v3409, %v3408
        %v3423 = vpack.c.b16 %v3411, %v3410
        %v3424 = vpack.c.b16 %v3413, %v3412
        %v3425 = vpack.c.b16 %v3415, %v3414
        %v3426 = vpack.c.b16 %v3417, %v3416
        %v3427 = vpack.c.b16 %v3419, %v3418
        %3436 = vmatprep.subr.bf16.mxu0 0
        %3437 = vmatpush1.bf16.msra.mxu0 %v3420
        %3438 = vmatprep.subr.bf16.mxu0 0
        %3439 = vmatpush1.bf16.msra.mxu0 %v3421
        %3440 = vmatprep.subr.bf16.mxu0 0
        %3441 = vmatpush1.bf16.msra.mxu0 %v3422
        %3442 = vmatprep.subr.bf16.mxu0 0
        %3443 = vmatpush1.bf16.msra.mxu0 %v3423
        %3444 = vmatprep.subr.bf16.mxu0 0
        %3445 = vmatpush1.bf16.msra.mxu0 %v3424
        %3446 = vmatprep.subr.bf16.mxu0 0
        %3447 = vmatpush1.bf16.msra.mxu0 %v3425
        %3448 = vmatprep.subr.bf16.mxu0 0
        %3449 = vmatpush1.bf16.msra.mxu0 %v3426
        %3450 = vmatprep.subr.bf16.mxu0 0
        %3451 = vmatpush1.bf16.msra.mxu0 %v3427
        %3452 = vmatprep.subr.bf16.mxu0 0
        %3453 = vmatpush1.bf16.msra.mxu0 0
        %3454 = vmatprep.subr.bf16.mxu0 0
        %3455 = vmatpush1.bf16.msra.mxu0 0
        %3456 = vmatprep.subr.bf16.mxu0 0
        %3457 = vmatpush1.bf16.msra.mxu0 0
        %3458 = vmatprep.subr.bf16.mxu0 0
        %3459 = vmatpush1.bf16.msra.mxu0 0
        %3460 = vmatprep.subr.bf16.mxu0 0
        %3461 = vmatpush1.bf16.msra.mxu0 0
        %3462 = vmatprep.subr.bf16.mxu0 0
        %3463 = vmatpush1.bf16.msra.mxu0 0
        %3464 = vmatprep.subr.bf16.mxu0 0
        %3465 = vmatpush1.bf16.msra.mxu0 0
        %3466 = vmatprep.subr.bf16.mxu0 0
        %3467 = vmatpush1.bf16.msra.mxu0 0
        %3468 = vmatprep.mubr.bf16.mxu0 0
        %3469 = vmatmul.mubr.bf16.gmra.mrb[0].mxu0 %v3364
        %v3470 = vpop.f32.mrb[0].mxu0
        %v3471 = vadd.f32 %v3386, %v3470
        %v3472 = vpop.f32.mrb[0].mxu0
        %v3473 = vpop.f32.mrb[0].mxu0
        %v3474 = vpop.f32.mrb[0].mxu0
        %3475 = vdwg.mxu0
        %3476 = vst [vmem:[%s274] sm:$0xff] %v3471
        %s3477 = sand.u32 %s181, 1
        %s3478 = scalar_lea.sflag [#allocation3], %s3477
        %s3479 = sand.u32 %s181, 1
        %s3480 = smul.addr %s3479, 8
        %s3481 = scalar_lea.vmem [#allocation2], %s3480
        // Predicated region
        $region49: #{tpu_custom_call.1} parent=47 // pred_check
          %p3482 = pneg %p191
        $region50: #{tpu_custom_call.1} parent=47 // pred_check_branch
          %3484 = sbr.rel (%p3482) target = $region52
        $region51: #{tpu_custom_call.1} parent=47 // pred_region
          %s3486 = ssub.s32 128, 128
          %3487 = vsyncadd %s3478, %s3486
          %s3488 = smul.addr %s21, 128
          %s3489 = scalar_lea.hbm %s7, %s3488
          %s3491 = sshll.u32 %s3481, 4
          %s3492 = int_to_ptr.vmem [resolvable:$true] %s3491
          %3494 = dma.vmem_to_hbm [thread:$0]  %s3492, 128, %s3489, %s3478
        $region52: #{tpu_custom_call.1} parent=47 // pred_fallthru
          _
      $region48: #{tpu_custom_call.1} parent=5 // pred_fallthru
        _
      %p3495 = scmp.le.s32.totalorder 2, %s16
      // Predicated region
      $region53: #{tpu_custom_call.1} parent=5 // pred_check
        %p3496 = pneg %p3495
      $region54: #{tpu_custom_call.1} parent=5 // pred_check_branch
        %3498 = sbr.rel (%p3496) target = $region56
      $region55: #{tpu_custom_call.1} parent=5 // pred_region
        %s3499 = ssub.s32 %s16, 2
        // Predicated region
        $region57: #{tpu_custom_call.1} parent=55 // pred_check
          %p3500 = pneg %p197
        $region58: #{tpu_custom_call.1} parent=55 // pred_check_branch
          %3502 = sbr.rel (%p3500) target = $region60
        $region59: #{tpu_custom_call.1} parent=55 // pred_region
          %s3503 = sand.u32 %s182, 1
          %s3504 = scalar_lea.sflag [#allocation3], %s3503
          %s3505 = sand.u32 %s182, 1
          %s3506 = smul.addr %s3505, 8
          %s3507 = scalar_lea.vmem [#allocation2], %s3506
          %3508 = dma.done %s3504, 128
        $region60: #{tpu_custom_call.1} parent=55 // pred_fallthru
          _
      $region56: #{tpu_custom_call.1} parent=5 // pred_fallthru
        _
    $region6: #{tpu_custom_call.1} parent=1 // loop_footer
      %s20 = sadd.s32 1, %s16
    $region7: #{tpu_custom_call.1} parent=1 // loop_footer_branch
      %15 = sbr.rel target = $region3
    $region8: #{tpu_custom_call.1} parent=1 // loop_exit
      _
    %3509 = vsyncpa [#allocation3], 1
    %s3510 = scalar_lea.sflag [#allocation3], 1
    %3511 = vsyncpa %s3510, 1

</llo_original>
